<compile_context>
chip_gen: v5e
topology: v5e:2x2
jax: 0.10.0
libtpu: 0.0.40
codegen_flags: <defaults>
</compile_context>

<pallas_src>
import functools

import jax
import jax.numpy as jnp
from jax.experimental import pallas as pl
from jax.experimental.pallas import tpu as pltpu


def _round_up(x, m):
    return (x + m - 1) // m * m


def _leaky_relu(x, slope=0.01):
    return jnp.where(x >= 0, x, slope * x)


# ----------------------------------------------------------------------------
# Kernel: all (gnn_layers - 1) GNN updates fused; h stays resident in VMEM.
# ----------------------------------------------------------------------------
def fused_gnn_kernel(femb_ref, ncold_ref, nwarm_ref,            # activations + noise
                     a_cold_ref, e_exp_ref, rw_ref, perms_ref, diag_ref,
                     w1_ref, b1_ref, w2_ref, erep_ref,          # constant weights
                     *out_refs,                                 # 1 or num_updates outputs
                     num_updates, n, inv_cold_tau, inv_warm_tau, emit_all):
    f32 = jnp.float32

    femb = femb_ref[...]                       # (TB, D)  original features (residual)
    a_cold = a_cold_ref[...]                   # (D, n*n)       cold pair scorer
    e_exp = e_exp_ref[...]                     # (n*n, n*n*d)   lane expansion of cold
    rw = rw_ref[...]                           # (n*n*d, D)     fused reduce + GraphSage
    perms = perms_ref[...]                     # (steps, n*n, n*n) in-group rotations
    diag = diag_ref[...]                       # (1, n*n)       1.0 where i == j
    w1 = w1_ref[...]                           # (D, n*warm_dim)
    b1 = b1_ref[...]                           # (1, n*warm_dim)
    w2 = w2_ref[...]                           # (n*warm_dim, n)
    erep = erep_ref[...]                       # (n, D)         field -> lane expansion

    h = femb
    for l in range(num_updates):               # static unroll over GNN layers
        # ---------------- cold (structure) logits: one MXU matmul -------------
        alpha = jnp.dot(h, a_cold, preferred_element_type=f32)          # (TB, n*n)
        g = (_leaky_relu(alpha) + ncold_ref[:, l, :]) * inv_cold_tau

        # Group max over j (lane layout i*n + j) via log2(n) permute-matmul
        # doubling steps — MXU slot, no reshapes / rolls / masked reductions.
        gmax = g
        for k in range(perms.shape[0]):
            gmax = jnp.maximum(
                gmax, jnp.dot(gmax, perms[k], preferred_element_type=f32))

        # Softmax + binarize: the /sum is dropped (invariant for the > 0 test),
        # then the diagonal is forced to 1 (reference eye_mask masked_fill).
        cold = jnp.where(jnp.exp(g - gmax) > 0.0, 1.0, 0.0)
        cold = jnp.maximum(cold, diag)                                   # (TB, n*n)

        # -------- neighbourhood aggregation + GraphSage: expand/mul/reduce ----
        cold_exp = jnp.dot(cold, e_exp, preferred_element_type=f32)     # (TB, n*n*d)
        h_rep = jnp.concatenate([h] * n, axis=-1)                        # (TB, n*n*d)
        new = jnp.dot(cold_exp * h_rep, rw, preferred_element_type=f32)  # (TB, D)

        # -------------- warm (importance) MLP + soft gumbel softmax -----------
        t = jnp.maximum(jnp.dot(new, w1, preferred_element_type=f32) + b1, 0.0)
        wl = (jnp.dot(t, w2, preferred_element_type=f32)
              + nwarm_ref[:, l, :]) * inv_warm_tau                       # (TB, n)
        wl = wl - jnp.max(wl, axis=-1, keepdims=True)
        ew = jnp.exp(wl)
        warm = ew / jnp.sum(ew, axis=-1, keepdims=True)                  # (TB, n)
        warm_exp = jnp.dot(warm, erep, preferred_element_type=f32)       # (TB, D)

        h = _leaky_relu(new * warm_exp) + femb                           # residual
        if emit_all:
            out_refs[l][...] = h.astype(out_refs[l].dtype)

    if not emit_all:
        out_refs[0][...] = h.astype(out_refs[0].dtype)


# ----------------------------------------------------------------------------
# Wrapper-side constant construction
# ----------------------------------------------------------------------------
def build_big_weights(params, n, d):
    """Build the block-structured constant matrices consumed by the kernel."""
    f32 = jnp.float32
    D = n * d
    nn_ = n * n
    wd = params["w1t"].shape[1]
    eye_n = jnp.eye(n, dtype=f32)

    # Cold pair scorer: alpha[b, i*n + j] = wc1 . h_i + wc2 . h_j
    w_cold = params["w_cold"].astype(f32)                     # (2d, 1)
    wc1, wc2 = w_cold[:d, 0], w_cold[d:, 0]
    term1 = wc1[None, :, None, None] * eye_n[:, None, :, None]   # (n,d,n,1)  f==i
    term2 = wc2[None, :, None, None] * eye_n[:, None, None, :]   # (n,d,1,n)  f==j
    a_cold = (term1 + term2).reshape(D, nn_)

    # Lane expansion of the cold matrix: E[p, p*d + c] = 1
    e_exp = jnp.repeat(jnp.eye(nn_, dtype=f32), d, axis=1)       # (n*n, n*n*d)

    # Fused reduce + GraphSage: RW[(i*n+j)*d + cin, g*d + cout] = (g==i) W[i,cout,cin]
    w_sage = params["w_sage"].astype(f32)                        # (n, d_out, d_in)
    a = jnp.einsum('ig,ioc->icgo', eye_n, w_sage)                # (n, d_in, n, d_out)
    rw = jnp.broadcast_to(a[:, None], (n, n, d, n, d)).reshape(nn_ * d, D)

    # In-group rotation permutations for max-doubling (covers group size n).
    steps = max(1, (n - 1).bit_length())
    idx = jnp.arange(nn_)
    grp, pos = idx // n, idx % n
    perm_list, s = [], 1
    for _ in range(steps):
        src = grp * n + (pos + s) % n
        perm_list.append(jnp.zeros((nn_, nn_), f32).at[src, idx].set(1.0))
        s *= 2
    perms = jnp.stack(perm_list)                                 # (steps, n*n, n*n)

    # Diagonal (i == j) mask as a lane row.
    diag = (grp == pos).astype(f32).reshape(1, nn_)

    # Block-diagonal warm MLP weights.
    w1t = params["w1t"].astype(f32)                              # (d, wd)
    w1_big = jnp.einsum('fg,ck->fcgk', eye_n, w1t).reshape(D, n * wd)
    b1_big = jnp.tile(params["b1"].astype(f32).reshape(1, wd), (1, n))
    w2_big = jnp.einsum('fg,k->fkg', eye_n,
                        params["w2"].astype(f32)[:, 0]).reshape(n * wd, n)

    # Warm importance expansion: e_rep[f, f*d + c] = 1
    e_rep = jnp.repeat(eye_n, d, axis=1)                         # (n, D)

    return (a_cold, e_exp, rw, perms, diag, w1_big, b1_big, w2_big, e_rep)


def fused_gnn(femb, cold_noise, warm_noise, consts, *, n, num_updates,
              cold_tau, warm_tau, emit_all, block_b=512):
    (a_cold, e_exp, rw, perms, diag, w1_big, b1_big, w2_big, e_rep) = consts
    B, D = femb.shape
    nn_ = n * n

    # Batch tile: large to amortize per-step overhead / fill MXU M, but keep the
    # grid >= 2 steps when B allows (megacore / v7x 2-TC "parallel" sharding).
    tb = min(block_b, max(8, _round_up((B + 1) // 2, 8)))
    Bp = _round_up(B, tb)
    if Bp != B:
        pad = Bp - B
        femb = jnp.pad(femb, ((0, pad), (0, 0)))
        cold_noise = jnp.pad(cold_noise, ((0, pad), (0, 0), (0, 0)))
        warm_noise = jnp.pad(warm_noise, ((0, pad), (0, 0), (0, 0)))

    num_out = num_updates if emit_all else 1
    kernel = functools.partial(
        fused_gnn_kernel, num_updates=num_updates, n=n,
        inv_cold_tau=1.0 / cold_tau, inv_warm_tau=1.0 / warm_tau,
        emit_all=emit_all)

    def full2d(arr):
        return pl.BlockSpec(arr.shape, lambda b: (0, 0))

    outs = pl.pallas_call(
        kernel,
        out_shape=tuple(jax.ShapeDtypeStruct((Bp, D), jnp.float32)
                        for _ in range(num_out)),
        grid_spec=pltpu.PrefetchScalarGridSpec(
            num_scalar_prefetch=0,
            grid=(Bp // tb,),
            in_specs=[
                pl.BlockSpec((tb, D), lambda b: (b, 0)),                    # femb
                pl.BlockSpec((tb, num_updates, nn_), lambda b: (b, 0, 0)),  # cold noise
                pl.BlockSpec((tb, num_updates, n), lambda b: (b, 0, 0)),    # warm noise
                full2d(a_cold), full2d(e_exp), full2d(rw),
                pl.BlockSpec(perms.shape, lambda b: (0, 0, 0)),             # perms
                full2d(diag), full2d(w1_big), full2d(b1_big),
                full2d(w2_big), full2d(e_rep),
            ],
            out_specs=tuple(pl.BlockSpec((tb, D), lambda b: (b, 0))
                            for _ in range(num_out)),
        ),
        compiler_params=pltpu.CompilerParams(
            dimension_semantics=("parallel",),
            vmem_limit_bytes=64 * 1024 * 1024),
    )(femb, cold_noise, warm_noise, a_cold, e_exp, rw, perms, diag,
      w1_big, b1_big, w2_big, e_rep)

    if not isinstance(outs, (tuple, list)):
        outs = (outs,)
    return [o[:B] for o in outs]


def autograph_forward(feature_emb, params, key, *, gnn_layers=3,
                      only_use_last_layer=1, warm_tau=1.0, cold_tau=0.01,
                      block_b=512):
    bsz, n_item, n, d = feature_emb.shape
    B = bsz * n_item
    femb = feature_emb.reshape(B, n * d).astype(jnp.float32)   # lane-dense slab

    num_updates = gnn_layers - 1           # last iteration's update is discarded
    if num_updates <= 0:
        return [femb.reshape(B, n, d)]

    consts = build_big_weights(params, n, d)
    kc, kw = jax.random.split(key)
    cold_noise = jax.random.gumbel(kc, (B, num_updates, n * n), jnp.float32)
    warm_noise = jax.random.gumbel(kw, (B, num_updates, n), jnp.float32)

    outs = fused_gnn(femb, cold_noise, warm_noise, consts, n=n,
                     num_updates=num_updates, cold_tau=cold_tau,
                     warm_tau=warm_tau, emit_all=(not only_use_last_layer),
                     block_b=block_b)
    if only_use_last_layer:
        return [outs[-1].reshape(B, n, d)]
    return [femb.reshape(B, n, d)] + [o.reshape(B, n, d) for o in outs]


def init_params(key, num_fields, emb_dim, warm_dim):
    k = jax.random.split(key, 5)
    # xavier_normal_ on (num_fields, emb_dim, emb_dim)
    xavier_std = (2.0 / (emb_dim * emb_dim + num_fields * emb_dim * emb_dim)) ** 0.5
    w_sage = xavier_std * jax.random.normal(k[0], (num_fields, emb_dim, emb_dim),
                                            jnp.float32)
    lim_c = 1.0 / (2 * emb_dim) ** 0.5
    w_cold = jax.random.uniform(k[1], (2 * emb_dim, 1), jnp.float32, -lim_c, lim_c)
    lim1 = 1.0 / emb_dim ** 0.5
    w1 = jax.random.uniform(k[2], (warm_dim, emb_dim), jnp.float32, -lim1, lim1)
    b1 = jax.random.uniform(k[3], (1, warm_dim), jnp.float32, -lim1, lim1)
    lim2 = 1.0 / warm_dim ** 0.5
    w2 = jax.random.uniform(k[4], (warm_dim, 1), jnp.float32, -lim2, lim2)
    return {"w_sage": w_sage, "w_cold": w_cold, "w1t": w1.T, "b1": b1, "w2": w2}


if __name__ == "__main__":
    # Small, module-consistent shapes.
    num_fields, emb_dim, warm_dim = 8, 32, 16
    bsz, n_item = 2, 4
    gnn_layers, only_use_last_layer = 3, 1
    warm_tau, cold_tau = 1.0, 0.01

    key = jax.random.PRNGKey(0)
    k_params, k_x, k_noise = jax.random.split(key, 3)
    params = init_params(k_params, num_fields, emb_dim, warm_dim)
    x = jax.random.normal(k_x, (bsz, n_item, num_fields, emb_dim), jnp.float32)

    h_list = autograph_forward(x, params, k_noise, gnn_layers=gnn_layers,
                               only_use_last_layer=only_use_last_layer,
                               warm_tau=warm_tau, cold_tau=cold_tau)
    out = jax.block_until_ready(h_list[-1])
    assert out.shape == (bsz * n_item, num_fields, emb_dim)
    assert bool(jnp.all(jnp.isfinite(out)))
    print("KERNEL_OK")
</pallas_src>

<mosaic_0001>
module attributes {stable_mosaic.version = 11 : i64} {
  func.func @fused_gnn_kernel(%arg0: i32, %arg1: memref<8x256xf32, #tpu.memory_space<vmem>>, %arg2: memref<8x2x64xf32, #tpu.memory_space<vmem>>, %arg3: memref<8x2x8xf32, #tpu.memory_space<vmem>>, %arg4: memref<256x64xf32, #tpu.memory_space<vmem>>, %arg5: memref<64x2048xf32, #tpu.memory_space<vmem>>, %arg6: memref<2048x256xf32, #tpu.memory_space<vmem>>, %arg7: memref<3x64x64xf32, #tpu.memory_space<vmem>>, %arg8: memref<1x64xf32, #tpu.memory_space<vmem>>, %arg9: memref<256x128xf32, #tpu.memory_space<vmem>>, %arg10: memref<1x128xf32, #tpu.memory_space<vmem>>, %arg11: memref<128x8xf32, #tpu.memory_space<vmem>>, %arg12: memref<8x256xf32, #tpu.memory_space<vmem>>, %arg13: memref<8x256xf32, #tpu.memory_space<vmem>>) attributes {dimension_semantics = [#tpu.dimension_semantics<parallel>], iteration_bounds = array<i64: 1>, scalar_prefetch = 0 : i64, scratch_operands = 0 : i64, tpu.core_type = #tpu.core_type<tc>, window_params = [{transform_indices = @transform_0, window_bounds = array<i64: 8, 256>}, {transform_indices = @transform_1, window_bounds = array<i64: 8, 2, 64>}, {transform_indices = @transform_2, window_bounds = array<i64: 8, 2, 8>}, {pipeline_mode = #tpu.pipeline_mode<synchronous>, transform_indices = @transform_3, window_bounds = array<i64: 256, 64>}, {pipeline_mode = #tpu.pipeline_mode<synchronous>, transform_indices = @transform_4, window_bounds = array<i64: 64, 2048>}, {pipeline_mode = #tpu.pipeline_mode<synchronous>, transform_indices = @transform_5, window_bounds = array<i64: 2048, 256>}, {pipeline_mode = #tpu.pipeline_mode<synchronous>, transform_indices = @transform_6, window_bounds = array<i64: 3, 64, 64>}, {pipeline_mode = #tpu.pipeline_mode<synchronous>, transform_indices = @transform_7, window_bounds = array<i64: 1, 64>}, {pipeline_mode = #tpu.pipeline_mode<synchronous>, transform_indices = @transform_8, window_bounds = array<i64: 256, 128>}, {pipeline_mode = #tpu.pipeline_mode<synchronous>, transform_indices = @transform_9, window_bounds = array<i64: 1, 128>}, {pipeline_mode = #tpu.pipeline_mode<synchronous>, transform_indices = @transform_10, window_bounds = array<i64: 128, 8>}, {pipeline_mode = #tpu.pipeline_mode<synchronous>, transform_indices = @transform_11, window_bounds = array<i64: 8, 256>}, {transform_indices = @transform_12, window_bounds = array<i64: 8, 256>}]} {
    %c0 = arith.constant 0 : index
    %c0_0 = arith.constant 0 : index
    %0 = vector.load %arg1[%c0, %c0_0] : memref<8x256xf32, #tpu.memory_space<vmem>>, vector<8x256xf32>
    %c0_1 = arith.constant 0 : index
    %c0_2 = arith.constant 0 : index
    %1 = vector.load %arg4[%c0_1, %c0_2] : memref<256x64xf32, #tpu.memory_space<vmem>>, vector<256x64xf32>
    %c0_3 = arith.constant 0 : index
    %c0_4 = arith.constant 0 : index
    %2 = vector.load %arg5[%c0_3, %c0_4] : memref<64x2048xf32, #tpu.memory_space<vmem>>, vector<64x2048xf32>
    %c0_5 = arith.constant 0 : index
    %c0_6 = arith.constant 0 : index
    %3 = vector.load %arg6[%c0_5, %c0_6] : memref<2048x256xf32, #tpu.memory_space<vmem>>, vector<2048x256xf32>
    %c0_7 = arith.constant 0 : index
    %c0_8 = arith.constant 0 : index
    %c0_9 = arith.constant 0 : index
    %4 = vector.load %arg7[%c0_7, %c0_8, %c0_9] : memref<3x64x64xf32, #tpu.memory_space<vmem>>, vector<3x64x64xf32>
    %c0_10 = arith.constant 0 : index
    %c0_11 = arith.constant 0 : index
    %5 = vector.load %arg8[%c0_10, %c0_11] : memref<1x64xf32, #tpu.memory_space<vmem>>, vector<1x64xf32>
    %c0_12 = arith.constant 0 : index
    %c0_13 = arith.constant 0 : index
    %6 = vector.load %arg9[%c0_12, %c0_13] : memref<256x128xf32, #tpu.memory_space<vmem>>, vector<256x128xf32>
    %c0_14 = arith.constant 0 : index
    %c0_15 = arith.constant 0 : index
    %7 = vector.load %arg10[%c0_14, %c0_15] : memref<1x128xf32, #tpu.memory_space<vmem>>, vector<1x128xf32>
    %c0_16 = arith.constant 0 : index
    %c0_17 = arith.constant 0 : index
    %8 = vector.load %arg11[%c0_16, %c0_17] : memref<128x8xf32, #tpu.memory_space<vmem>>, vector<128x8xf32>
    %c0_18 = arith.constant 0 : index
    %c0_19 = arith.constant 0 : index
    %9 = vector.load %arg12[%c0_18, %c0_19] : memref<8x256xf32, #tpu.memory_space<vmem>>, vector<8x256xf32>
    %cst = arith.constant dense<0.000000e+00> : vector<8x64xf32>
    %10 = tpu.matmul %0, %1, %cst {dimension_numbers = #tpu.dot_dimension_numbers<[1], [0], [0], [1], [0, 0, 1, 1], [], []>} : vector<8x256xf32>, vector<256x64xf32>, vector<8x64xf32> -> vector<8x64xf32>
    %cst_20 = arith.constant 0.000000e+00 : f32
    %11 = vector.broadcast %cst_20 : f32 to vector<8x64xf32>
    %12 = arith.cmpf oge, %10, %11 : vector<8x64xf32>
    %cst_21 = arith.constant 0.00999999977 : f32
    %13 = vector.broadcast %cst_21 : f32 to vector<8x64xf32>
    %14 = arith.mulf %13, %10 : vector<8x64xf32>
    %15 = arith.select %12, %10, %14 : vector<8x64xi1>, vector<8x64xf32>
    %c0_22 = arith.constant 0 : index
    %c0_23 = arith.constant 0 : index
    %c0_24 = arith.constant 0 : index
    %16 = vector.load %arg2[%c0_22, %c0_23, %c0_24] : memref<8x2x64xf32, #tpu.memory_space<vmem>>, vector<8x1x64xf32>
    %17 = vector.shape_cast %16 : vector<8x1x64xf32> to vector<8x64xf32>
    %18 = arith.addf %15, %17 : vector<8x64xf32>
    %cst_25 = arith.constant 1.000000e+02 : f32
    %19 = vector.broadcast %cst_25 : f32 to vector<8x64xf32>
    %20 = arith.mulf %18, %19 : vector<8x64xf32>
    %21 = vector.extract_strided_slice %4 {offsets = [0, 0, 0], sizes = [1, 64, 64], strides = [1, 1, 1]} : vector<3x64x64xf32> to vector<1x64x64xf32>
    %22 = vector.shape_cast %21 : vector<1x64x64xf32> to vector<64x64xf32>
    %cst_26 = arith.constant dense<0.000000e+00> : vector<8x64xf32>
    %23 = tpu.matmul %20, %22, %cst_26 {dimension_numbers = #tpu.dot_dimension_numbers<[1], [0], [0], [1], [0, 0, 1, 1], [], []>} : vector<8x64xf32>, vector<64x64xf32>, vector<8x64xf32> -> vector<8x64xf32>
    %24 = arith.maximumf %20, %23 : vector<8x64xf32>
    %25 = vector.extract_strided_slice %4 {offsets = [1, 0, 0], sizes = [1, 64, 64], strides = [1, 1, 1]} : vector<3x64x64xf32> to vector<1x64x64xf32>
    %26 = vector.shape_cast %25 : vector<1x64x64xf32> to vector<64x64xf32>
    %cst_27 = arith.constant dense<0.000000e+00> : vector<8x64xf32>
    %27 = tpu.matmul %24, %26, %cst_27 {dimension_numbers = #tpu.dot_dimension_numbers<[1], [0], [0], [1], [0, 0, 1, 1], [], []>} : vector<8x64xf32>, vector<64x64xf32>, vector<8x64xf32> -> vector<8x64xf32>
    %28 = arith.maximumf %24, %27 : vector<8x64xf32>
    %29 = vector.extract_strided_slice %4 {offsets = [2, 0, 0], sizes = [1, 64, 64], strides = [1, 1, 1]} : vector<3x64x64xf32> to vector<1x64x64xf32>
    %30 = vector.shape_cast %29 : vector<1x64x64xf32> to vector<64x64xf32>
    %cst_28 = arith.constant dense<0.000000e+00> : vector<8x64xf32>
    %31 = tpu.matmul %28, %30, %cst_28 {dimension_numbers = #tpu.dot_dimension_numbers<[1], [0], [0], [1], [0, 0, 1, 1], [], []>} : vector<8x64xf32>, vector<64x64xf32>, vector<8x64xf32> -> vector<8x64xf32>
    %32 = arith.maximumf %28, %31 : vector<8x64xf32>
    %33 = arith.subf %20, %32 : vector<8x64xf32>
    %34 = math.exp %33 : vector<8x64xf32>
    %cst_29 = arith.constant 0.000000e+00 : f32
    %35 = vector.broadcast %cst_29 : f32 to vector<8x64xf32>
    %36 = arith.cmpf ogt, %34, %35 : vector<8x64xf32>
    %cst_30 = arith.constant 1.000000e+00 : f32
    %cst_31 = arith.constant 0.000000e+00 : f32
    %37 = vector.broadcast %cst_30 : f32 to vector<8x64xf32>
    %38 = vector.broadcast %cst_31 : f32 to vector<8x64xf32>
    %39 = arith.select %36, %37, %38 : vector<8x64xi1>, vector<8x64xf32>
    %40 = vector.broadcast %5 : vector<1x64xf32> to vector<8x64xf32>
    %41 = arith.maximumf %39, %40 : vector<8x64xf32>
    %cst_32 = arith.constant dense<0.000000e+00> : vector<8x2048xf32>
    %42 = tpu.matmul %41, %2, %cst_32 {dimension_numbers = #tpu.dot_dimension_numbers<[1], [0], [0], [1], [0, 0, 1, 1], [], []>} : vector<8x64xf32>, vector<64x2048xf32>, vector<8x2048xf32> -> vector<8x2048xf32>
    %43 = tpu.concatenate %0, %0, %0, %0, %0, %0, %0, %0 in 1 : vector<8x256xf32>, vector<8x256xf32>, vector<8x256xf32>, vector<8x256xf32>, vector<8x256xf32>, vector<8x256xf32>, vector<8x256xf32>, vector<8x256xf32> -> vector<8x2048xf32>
    %44 = arith.mulf %42, %43 : vector<8x2048xf32>
    %cst_33 = arith.constant dense<0.000000e+00> : vector<8x256xf32>
    %45 = tpu.matmul %44, %3, %cst_33 {dimension_numbers = #tpu.dot_dimension_numbers<[1], [0], [0], [1], [0, 0, 1, 1], [], []>} : vector<8x2048xf32>, vector<2048x256xf32>, vector<8x256xf32> -> vector<8x256xf32>
    %cst_34 = arith.constant dense<0.000000e+00> : vector<8x128xf32>
    %46 = tpu.matmul %45, %6, %cst_34 {dimension_numbers = #tpu.dot_dimension_numbers<[1], [0], [0], [1], [0, 0, 1, 1], [], []>} : vector<8x256xf32>, vector<256x128xf32>, vector<8x128xf32> -> vector<8x128xf32>
    %47 = vector.broadcast %7 : vector<1x128xf32> to vector<8x128xf32>
    %48 = arith.addf %46, %47 : vector<8x128xf32>
    %cst_35 = arith.constant 0.000000e+00 : f32
    %49 = vector.broadcast %cst_35 : f32 to vector<8x128xf32>
    %50 = arith.maximumf %48, %49 : vector<8x128xf32>
    %cst_36 = arith.constant dense<0.000000e+00> : vector<8x8xf32>
    %51 = tpu.matmul %50, %8, %cst_36 {dimension_numbers = #tpu.dot_dimension_numbers<[1], [0], [0], [1], [0, 0, 1, 1], [], []>} : vector<8x128xf32>, vector<128x8xf32>, vector<8x8xf32> -> vector<8x8xf32>
    %c0_37 = arith.constant 0 : index
    %c0_38 = arith.constant 0 : index
    %c0_39 = arith.constant 0 : index
    %52 = vector.load %arg3[%c0_37, %c0_38, %c0_39] : memref<8x2x8xf32, #tpu.memory_space<vmem>>, vector<8x1x8xf32>
    %53 = vector.shape_cast %52 : vector<8x1x8xf32> to vector<8x8xf32>
    %54 = arith.addf %51, %53 : vector<8x8xf32>
    %cst_40 = arith.constant 1.000000e+00 : f32
    %55 = vector.broadcast %cst_40 : f32 to vector<8x8xf32>
    %56 = arith.mulf %54, %55 : vector<8x8xf32>
    %cst_41 = arith.constant dense<0xFF800000> : vector<8xf32>
    %57 = vector.multi_reduction <maximumf>, %56, %cst_41 [1] : vector<8x8xf32> to vector<8xf32>
    %58 = vector.shape_cast %57 : vector<8xf32> to vector<8x1xf32>
    %59 = vector.broadcast %58 : vector<8x1xf32> to vector<8x8xf32>
    %60 = arith.subf %56, %59 : vector<8x8xf32>
    %61 = math.exp %60 : vector<8x8xf32>
    %cst_42 = arith.constant dense<0.000000e+00> : vector<8xf32>
    %62 = vector.multi_reduction <add>, %61, %cst_42 [1] : vector<8x8xf32> to vector<8xf32>
    %63 = vector.shape_cast %62 : vector<8xf32> to vector<8x1xf32>
    %64 = vector.broadcast %63 : vector<8x1xf32> to vector<8x8xf32>
    %65 = arith.divf %61, %64 : vector<8x8xf32>
    %cst_43 = arith.constant dense<0.000000e+00> : vector<8x256xf32>
    %66 = tpu.matmul %65, %9, %cst_43 {dimension_numbers = #tpu.dot_dimension_numbers<[1], [0], [0], [1], [0, 0, 1, 1], [], []>} : vector<8x8xf32>, vector<8x256xf32>, vector<8x256xf32> -> vector<8x256xf32>
    %67 = arith.mulf %45, %66 : vector<8x256xf32>
    %cst_44 = arith.constant 0.000000e+00 : f32
    %68 = vector.broadcast %cst_44 : f32 to vector<8x256xf32>
    %69 = arith.cmpf oge, %67, %68 : vector<8x256xf32>
    %cst_45 = arith.constant 0.00999999977 : f32
    %70 = vector.broadcast %cst_45 : f32 to vector<8x256xf32>
    %71 = arith.mulf %70, %67 : vector<8x256xf32>
    %72 = arith.select %69, %67, %71 : vector<8x256xi1>, vector<8x256xf32>
    %73 = arith.addf %72, %0 : vector<8x256xf32>
    %cst_46 = arith.constant dense<0.000000e+00> : vector<8x64xf32>
    %74 = tpu.matmul %73, %1, %cst_46 {dimension_numbers = #tpu.dot_dimension_numbers<[1], [0], [0], [1], [0, 0, 1, 1], [], []>} : vector<8x256xf32>, vector<256x64xf32>, vector<8x64xf32> -> vector<8x64xf32>
    %cst_47 = arith.constant 0.000000e+00 : f32
    %75 = vector.broadcast %cst_47 : f32 to vector<8x64xf32>
    %76 = arith.cmpf oge, %74, %75 : vector<8x64xf32>
    %cst_48 = arith.constant 0.00999999977 : f32
    %77 = vector.broadcast %cst_48 : f32 to vector<8x64xf32>
    %78 = arith.mulf %77, %74 : vector<8x64xf32>
    %79 = arith.select %76, %74, %78 : vector<8x64xi1>, vector<8x64xf32>
    %c0_49 = arith.constant 0 : index
    %c1 = arith.constant 1 : index
    %c0_50 = arith.constant 0 : index
    %80 = vector.load %arg2[%c0_49, %c1, %c0_50] : memref<8x2x64xf32, #tpu.memory_space<vmem>>, vector<8x1x64xf32>
    %81 = vector.shape_cast %80 : vector<8x1x64xf32> to vector<8x64xf32>
    %82 = arith.addf %79, %81 : vector<8x64xf32>
    %cst_51 = arith.constant 1.000000e+02 : f32
    %83 = vector.broadcast %cst_51 : f32 to vector<8x64xf32>
    %84 = arith.mulf %82, %83 : vector<8x64xf32>
    %85 = vector.extract_strided_slice %4 {offsets = [0, 0, 0], sizes = [1, 64, 64], strides = [1, 1, 1]} : vector<3x64x64xf32> to vector<1x64x64xf32>
    %86 = vector.shape_cast %85 : vector<1x64x64xf32> to vector<64x64xf32>
    %cst_52 = arith.constant dense<0.000000e+00> : vector<8x64xf32>
    %87 = tpu.matmul %84, %86, %cst_52 {dimension_numbers = #tpu.dot_dimension_numbers<[1], [0], [0], [1], [0, 0, 1, 1], [], []>} : vector<8x64xf32>, vector<64x64xf32>, vector<8x64xf32> -> vector<8x64xf32>
    %88 = arith.maximumf %84, %87 : vector<8x64xf32>
    %89 = vector.extract_strided_slice %4 {offsets = [1, 0, 0], sizes = [1, 64, 64], strides = [1, 1, 1]} : vector<3x64x64xf32> to vector<1x64x64xf32>
    %90 = vector.shape_cast %89 : vector<1x64x64xf32> to vector<64x64xf32>
    %cst_53 = arith.constant dense<0.000000e+00> : vector<8x64xf32>
    %91 = tpu.matmul %88, %90, %cst_53 {dimension_numbers = #tpu.dot_dimension_numbers<[1], [0], [0], [1], [0, 0, 1, 1], [], []>} : vector<8x64xf32>, vector<64x64xf32>, vector<8x64xf32> -> vector<8x64xf32>
    %92 = arith.maximumf %88, %91 : vector<8x64xf32>
    %93 = vector.extract_strided_slice %4 {offsets = [2, 0, 0], sizes = [1, 64, 64], strides = [1, 1, 1]} : vector<3x64x64xf32> to vector<1x64x64xf32>
    %94 = vector.shape_cast %93 : vector<1x64x64xf32> to vector<64x64xf32>
    %cst_54 = arith.constant dense<0.000000e+00> : vector<8x64xf32>
    %95 = tpu.matmul %92, %94, %cst_54 {dimension_numbers = #tpu.dot_dimension_numbers<[1], [0], [0], [1], [0, 0, 1, 1], [], []>} : vector<8x64xf32>, vector<64x64xf32>, vector<8x64xf32> -> vector<8x64xf32>
    %96 = arith.maximumf %92, %95 : vector<8x64xf32>
    %97 = arith.subf %84, %96 : vector<8x64xf32>
    %98 = math.exp %97 : vector<8x64xf32>
    %cst_55 = arith.constant 0.000000e+00 : f32
    %99 = vector.broadcast %cst_55 : f32 to vector<8x64xf32>
    %100 = arith.cmpf ogt, %98, %99 : vector<8x64xf32>
    %cst_56 = arith.constant 1.000000e+00 : f32
    %cst_57 = arith.constant 0.000000e+00 : f32
    %101 = vector.broadcast %cst_56 : f32 to vector<8x64xf32>
    %102 = vector.broadcast %cst_57 : f32 to vector<8x64xf32>
    %103 = arith.select %100, %101, %102 : vector<8x64xi1>, vector<8x64xf32>
    %104 = vector.broadcast %5 : vector<1x64xf32> to vector<8x64xf32>
    %105 = arith.maximumf %103, %104 : vector<8x64xf32>
    %cst_58 = arith.constant dense<0.000000e+00> : vector<8x2048xf32>
    %106 = tpu.matmul %105, %2, %cst_58 {dimension_numbers = #tpu.dot_dimension_numbers<[1], [0], [0], [1], [0, 0, 1, 1], [], []>} : vector<8x64xf32>, vector<64x2048xf32>, vector<8x2048xf32> -> vector<8x2048xf32>
    %107 = tpu.concatenate %73, %73, %73, %73, %73, %73, %73, %73 in 1 : vector<8x256xf32>, vector<8x256xf32>, vector<8x256xf32>, vector<8x256xf32>, vector<8x256xf32>, vector<8x256xf32>, vector<8x256xf32>, vector<8x256xf32> -> vector<8x2048xf32>
    %108 = arith.mulf %106, %107 : vector<8x2048xf32>
    %cst_59 = arith.constant dense<0.000000e+00> : vector<8x256xf32>
    %109 = tpu.matmul %108, %3, %cst_59 {dimension_numbers = #tpu.dot_dimension_numbers<[1], [0], [0], [1], [0, 0, 1, 1], [], []>} : vector<8x2048xf32>, vector<2048x256xf32>, vector<8x256xf32> -> vector<8x256xf32>
    %cst_60 = arith.constant dense<0.000000e+00> : vector<8x128xf32>
    %110 = tpu.matmul %109, %6, %cst_60 {dimension_numbers = #tpu.dot_dimension_numbers<[1], [0], [0], [1], [0, 0, 1, 1], [], []>} : vector<8x256xf32>, vector<256x128xf32>, vector<8x128xf32> -> vector<8x128xf32>
    %111 = vector.broadcast %7 : vector<1x128xf32> to vector<8x128xf32>
    %112 = arith.addf %110, %111 : vector<8x128xf32>
    %cst_61 = arith.constant 0.000000e+00 : f32
    %113 = vector.broadcast %cst_61 : f32 to vector<8x128xf32>
    %114 = arith.maximumf %112, %113 : vector<8x128xf32>
    %cst_62 = arith.constant dense<0.000000e+00> : vector<8x8xf32>
    %115 = tpu.matmul %114, %8, %cst_62 {dimension_numbers = #tpu.dot_dimension_numbers<[1], [0], [0], [1], [0, 0, 1, 1], [], []>} : vector<8x128xf32>, vector<128x8xf32>, vector<8x8xf32> -> vector<8x8xf32>
    %c0_63 = arith.constant 0 : index
    %c1_64 = arith.constant 1 : index
    %c0_65 = arith.constant 0 : index
    %116 = vector.load %arg3[%c0_63, %c1_64, %c0_65] : memref<8x2x8xf32, #tpu.memory_space<vmem>>, vector<8x1x8xf32>
    %117 = vector.shape_cast %116 : vector<8x1x8xf32> to vector<8x8xf32>
    %118 = arith.addf %115, %117 : vector<8x8xf32>
    %cst_66 = arith.constant 1.000000e+00 : f32
    %119 = vector.broadcast %cst_66 : f32 to vector<8x8xf32>
    %120 = arith.mulf %118, %119 : vector<8x8xf32>
    %cst_67 = arith.constant dense<0xFF800000> : vector<8xf32>
    %121 = vector.multi_reduction <maximumf>, %120, %cst_67 [1] : vector<8x8xf32> to vector<8xf32>
    %122 = vector.shape_cast %121 : vector<8xf32> to vector<8x1xf32>
    %123 = vector.broadcast %122 : vector<8x1xf32> to vector<8x8xf32>
    %124 = arith.subf %120, %123 : vector<8x8xf32>
    %125 = math.exp %124 : vector<8x8xf32>
    %cst_68 = arith.constant dense<0.000000e+00> : vector<8xf32>
    %126 = vector.multi_reduction <add>, %125, %cst_68 [1] : vector<8x8xf32> to vector<8xf32>
    %127 = vector.shape_cast %126 : vector<8xf32> to vector<8x1xf32>
    %128 = vector.broadcast %127 : vector<8x1xf32> to vector<8x8xf32>
    %129 = arith.divf %125, %128 : vector<8x8xf32>
    %cst_69 = arith.constant dense<0.000000e+00> : vector<8x256xf32>
    %130 = tpu.matmul %129, %9, %cst_69 {dimension_numbers = #tpu.dot_dimension_numbers<[1], [0], [0], [1], [0, 0, 1, 1], [], []>} : vector<8x8xf32>, vector<8x256xf32>, vector<8x256xf32> -> vector<8x256xf32>
    %131 = arith.mulf %109, %130 : vector<8x256xf32>
    %cst_70 = arith.constant 0.000000e+00 : f32
    %132 = vector.broadcast %cst_70 : f32 to vector<8x256xf32>
    %133 = arith.cmpf oge, %131, %132 : vector<8x256xf32>
    %cst_71 = arith.constant 0.00999999977 : f32
    %134 = vector.broadcast %cst_71 : f32 to vector<8x256xf32>
    %135 = arith.mulf %134, %131 : vector<8x256xf32>
    %136 = arith.select %133, %131, %135 : vector<8x256xi1>, vector<8x256xf32>
    %137 = arith.addf %136, %0 : vector<8x256xf32>
    %c0_72 = arith.constant 0 : index
    %c0_73 = arith.constant 0 : index
    %138 = vector.load %arg13[%c0_72, %c0_73] : memref<8x256xf32, #tpu.memory_space<vmem>>, vector<8x256xf32>
    tpu.vector_store %arg13[%c0_72, %c0_73], %137 {strides = array<i32>} : memref<8x256xf32, #tpu.memory_space<vmem>>, vector<8x256xf32>,
    return
  }
  func.func @transform_0(%arg0: i32) -> (i32, i32) {
    %c0_i32 = arith.constant 0 : i32
    %c0_i32_0 = arith.constant 0 : i32
    return %arg0, %c0_i32 : i32, i32
  }
  func.func @transform_1(%arg0: i32) -> (i32, i32, i32) {
    %c0_i32 = arith.constant 0 : i32
    %c0_i32_0 = arith.constant 0 : i32
    %c0_i32_1 = arith.constant 0 : i32
    return %arg0, %c0_i32, %c0_i32_0 : i32, i32, i32
  }
  func.func @transform_2(%arg0: i32) -> (i32, i32, i32) {
    %c0_i32 = arith.constant 0 : i32
    %c0_i32_0 = arith.constant 0 : i32
    %c0_i32_1 = arith.constant 0 : i32
    return %arg0, %c0_i32, %c0_i32_0 : i32, i32, i32
  }
  func.func @transform_3(%arg0: i32) -> (i32, i32) {
    %c0_i32 = arith.constant 0 : i32
    %c0_i32_0 = arith.constant 0 : i32
    %c0_i32_1 = arith.constant 0 : i32
    return %c0_i32, %c0_i32_0 : i32, i32
  }
  func.func @transform_4(%arg0: i32) -> (i32, i32) {
    %c0_i32 = arith.constant 0 : i32
    %c0_i32_0 = arith.constant 0 : i32
    %c0_i32_1 = arith.constant 0 : i32
    return %c0_i32, %c0_i32_0 : i32, i32
  }
  func.func @transform_5(%arg0: i32) -> (i32, i32) {
    %c0_i32 = arith.constant 0 : i32
    %c0_i32_0 = arith.constant 0 : i32
    %c0_i32_1 = arith.constant 0 : i32
    return %c0_i32, %c0_i32_0 : i32, i32
  }
  func.func @transform_6(%arg0: i32) -> (i32, i32, i32) {
    %c0_i32 = arith.constant 0 : i32
    %c0_i32_0 = arith.constant 0 : i32
    %c0_i32_1 = arith.constant 0 : i32
    %c0_i32_2 = arith.constant 0 : i32
    return %c0_i32, %c0_i32_0, %c0_i32_1 : i32, i32, i32
  }
  func.func @transform_7(%arg0: i32) -> (i32, i32) {
    %c0_i32 = arith.constant 0 : i32
    %c0_i32_0 = arith.constant 0 : i32
    %c0_i32_1 = arith.constant 0 : i32
    return %c0_i32, %c0_i32_0 : i32, i32
  }
  func.func @transform_8(%arg0: i32) -> (i32, i32) {
    %c0_i32 = arith.constant 0 : i32
    %c0_i32_0 = arith.constant 0 : i32
    %c0_i32_1 = arith.constant 0 : i32
    return %c0_i32, %c0_i32_0 : i32, i32
  }
  func.func @transform_9(%arg0: i32) -> (i32, i32) {
    %c0_i32 = arith.constant 0 : i32
    %c0_i32_0 = arith.constant 0 : i32
    %c0_i32_1 = arith.constant 0 : i32
    return %c0_i32, %c0_i32_0 : i32, i32
  }
  func.func @transform_10(%arg0: i32) -> (i32, i32) {
    %c0_i32 = arith.constant 0 : i32
    %c0_i32_0 = arith.constant 0 : i32
    %c0_i32_1 = arith.constant 0 : i32
    return %c0_i32, %c0_i32_0 : i32, i32
  }
  func.func @transform_11(%arg0: i32) -> (i32, i32) {
    %c0_i32 = arith.constant 0 : i32
    %c0_i32_0 = arith.constant 0 : i32
    %c0_i32_1 = arith.constant 0 : i32
    return %c0_i32, %c0_i32_0 : i32, i32
  }
  func.func @transform_12(%arg0: i32) -> (i32, i32) {
    %c0_i32 = arith.constant 0 : i32
    %c0_i32_0 = arith.constant 0 : i32
    return %arg0, %c0_i32 : i32, i32
  }
}

</mosaic_0001>

<llo_original>
// kernel: tpu_custom_call.1
$region0: #{tpu_custom_call.1}
  #allocation0 [shape = 'u32[]', space=smem, size = 0x4, offset = 0x4, fixed_abs, tag = 'smem constant byte address 0x4 - core index']
  #allocation1 [shape = 'u32[72,128]{1,0:T(1,128)}', space=vmem, size = 0x9000, scoped, tag = 'internal scratch']
  %s0 = inlined_call_operand.hbm [shape: f32[8,256], index: 0, kind: input, shape index: {}]
  %s1 = inlined_call_operand.hbm [shape: f32[8,2,64], index: 1, kind: input, shape index: {}]
  %s2 = inlined_call_operand.hbm [shape: f32[8,2,8], index: 2, kind: input, shape index: {}]
  %s3 = inlined_call_operand.vmem [shape: f32[256,64], index: 3, kind: input, shape index: {}]
  %s4 = inlined_call_operand.hbm [shape: f32[64,2048], index: 4, kind: input, shape index: {}]
  %s5 = inlined_call_operand.hbm [shape: f32[2048,256], index: 5, kind: input, shape index: {}]
  %s6 = inlined_call_operand.hbm [shape: f32[3,64,64], index: 6, kind: input, shape index: {}]
  %s7 = inlined_call_operand.hbm [shape: f32[1,64], index: 7, kind: input, shape index: {}]
  %s8 = inlined_call_operand.hbm [shape: f32[256,128], index: 8, kind: input, shape index: {}]
  %s9 = inlined_call_operand.hbm [shape: f32[1,128], index: 9, kind: input, shape index: {}]
  %s10 = inlined_call_operand.vmem [shape: f32[128,8], index: 10, kind: input, shape index: {}]
  %s11 = inlined_call_operand.hbm [shape: f32[8,256], index: 11, kind: input, shape index: {}]
  %s12 = inlined_call_operand.hbm [shape: f32[8,256], index: 12, kind: output, shape index: {}]
  %s13 = sld [smem:[#allocation0]]
  $region98: #{tpu_custom_call.1} parent=0
    _
  %s15 = ssub.s32 1, %s13
  %s16 = scalar_select 0, %s15, %s13
  $region1: #{tpu_custom_call.1} parent=0
    #allocation2 [shape = 'u8[8192]{0}', space=vmem, size = 0x2000, scoped, tag = 'input window, operand 0, single buffered']
    #allocation3 [shape = 's32[1]{0}', space=sflag, size = 0x4, scoped, tag = 'scoped memory for tpu_custom_call.1']
    #allocation4 [shape = 's32[1]{0}', space=sflag, size = 0x4, scoped, tag = 'scoped memory for tpu_custom_call.1']
    #allocation5 [shape = 'u8[8192]{0}', space=vmem, size = 0x2000, scoped, tag = 'input window, operand 1, single buffered']
    #allocation6 [shape = 's32[1]{0}', space=sflag, size = 0x4, scoped, tag = 'scoped memory for tpu_custom_call.1']
    #allocation7 [shape = 'u8[8192]{0}', space=vmem, size = 0x2000, scoped, tag = 'input window, operand 2, single buffered']
    #allocation8 [shape = 'u8[524288]{0}', space=vmem, size = 0x80000, scoped, tag = 'input window, operand 4, single buffered']
    #allocation9 [shape = 's32[1]{0}', space=sflag, size = 0x4, scoped, tag = 'scoped memory for tpu_custom_call.1']
    #allocation10 [shape = 'u8[2097152]{0}', space=vmem, size = 0x200000, scoped, tag = 'input window, operand 5, single buffered']
    #allocation11 [shape = 'u8[98304]{0}', space=vmem, size = 0x18000, scoped, tag = 'input window, operand 6, single buffered']
    #allocation12 [shape = 's32[1]{0}', space=sflag, size = 0x4, scoped, tag = 'scoped memory for tpu_custom_call.1']
    #allocation13 [shape = 'u8[512]{0}', space=vmem, size = 0x400, scoped, tag = 'input window, operand 7, single buffered']
    #allocation14 [shape = 'u8[131072]{0}', space=vmem, size = 0x20000, scoped, tag = 'input window, operand 8, single buffered']
    #allocation15 [shape = 's32[1]{0}', space=sflag, size = 0x4, scoped, tag = 'scoped memory for tpu_custom_call.1']
    #allocation16 [shape = 'u8[512]{0}', space=vmem, size = 0x400, scoped, tag = 'input window, operand 9, single buffered']
    #allocation17 [shape = 'u8[8192]{0}', space=vmem, size = 0x2000, scoped, tag = 'input window, operand 11, single buffered']
    #allocation18 [shape = 's32[1]{0}', space=sflag, size = 0x4, scoped, tag = 'scoped memory for tpu_custom_call.1']
    #allocation19 [shape = 'u8[8192]{0}', space=vmem, size = 0x2000, scoped, tag = 'output window, operand 0, single buffered']
    %17 = vsyncpa [#allocation3], 0
    %18 = vsyncpa [#allocation6], 0
    %19 = vsyncpa [#allocation9], 0
    %20 = vsyncpa [#allocation12], 0
    %21 = vsyncpa [#allocation15], 0
    %22 = vsyncpa [#allocation18], 0
    %23 = vsyncpa [#allocation4], 0
    // Predicated region
    $region2: #{tpu_custom_call.1} parent=1 // pred_check
      _
    $region3: #{tpu_custom_call.1} parent=1 // pred_check_branch
      %25 = sbr.rel (0) target = $region5
    $region4: #{tpu_custom_call.1} parent=1 // pred_region
      %27 = vsyncadd [#allocation3], 0
      %s29 = sshll.u32 %s0, 4
      %s30 = int_to_ptr.hbm [resolvable:$true] %s29
      %s31 = sshll.u32 [#allocation2], 4
      %s32 = int_to_ptr.vmem [resolvable:$true] %s31
      %34 = dma.hbm_to_vmem [thread:$0]  %s30, 256, %s32, [#allocation3]
    $region5: #{tpu_custom_call.1} parent=1 // pred_fallthru
      _
    // Predicated region
    $region6: #{tpu_custom_call.1} parent=1 // pred_check
      _
    $region7: #{tpu_custom_call.1} parent=1 // pred_check_branch
      %36 = sbr.rel (0) target = $region9
    $region8: #{tpu_custom_call.1} parent=1 // pred_region
      %38 = vsyncadd [#allocation6], 0
      %s39 = sshll.u32 %s1, 4
      %s40 = int_to_ptr.hbm [resolvable:$true] %s39
      %s41 = sshll.u32 [#allocation5], 4
      %s42 = int_to_ptr.vmem [resolvable:$true] %s41
      %47 = dma.hbm_to_vmem [thread:$0]  %s40, 256, %s42, [#allocation6], 32, 32, 2
    $region9: #{tpu_custom_call.1} parent=1 // pred_fallthru
      _
    // Predicated region
    $region10: #{tpu_custom_call.1} parent=1 // pred_check
      _
    $region11: #{tpu_custom_call.1} parent=1 // pred_check_branch
      %49 = sbr.rel (0) target = $region13
    $region12: #{tpu_custom_call.1} parent=1 // pred_region
      %51 = vsyncadd [#allocation6], 0
      %s52 = sshll.u32 %s2, 4
      %s53 = int_to_ptr.hbm [resolvable:$true] %s52
      %s54 = sshll.u32 [#allocation7], 4
      %s55 = int_to_ptr.vmem [resolvable:$true] %s54
      %60 = dma.hbm_to_vmem [thread:$0]  %s53, 256, %s55, [#allocation6], 32, 32, 2
    $region13: #{tpu_custom_call.1} parent=1 // pred_fallthru
      _
    // Predicated region
    $region14: #{tpu_custom_call.1} parent=1 // pred_check
      _
    $region15: #{tpu_custom_call.1} parent=1 // pred_check_branch
      %62 = sbr.rel (0) target = $region17
    $region16: #{tpu_custom_call.1} parent=1 // pred_region
      _
    $region17: #{tpu_custom_call.1} parent=1 // pred_fallthru
      _
    // Predicated region
    $region18: #{tpu_custom_call.1} parent=1 // pred_check
      _
    $region19: #{tpu_custom_call.1} parent=1 // pred_check_branch
      %64 = sbr.rel (0) target = $region21
    $region20: #{tpu_custom_call.1} parent=1 // pred_region
      %66 = vsyncadd [#allocation9], 0
      %s67 = sshll.u32 %s4, 4
      %s68 = int_to_ptr.hbm [resolvable:$true] %s67
      %s69 = sshll.u32 [#allocation8], 4
      %s70 = int_to_ptr.vmem [resolvable:$true] %s69
      %75 = dma.hbm_to_vmem [thread:$0]  %s68, 16384, %s70, [#allocation9], 2048, 2048, 128
    $region21: #{tpu_custom_call.1} parent=1 // pred_fallthru
      _
    // Predicated region
    $region22: #{tpu_custom_call.1} parent=1 // pred_check
      _
    $region23: #{tpu_custom_call.1} parent=1 // pred_check_branch
      %77 = sbr.rel (0) target = $region25
    $region24: #{tpu_custom_call.1} parent=1 // pred_region
      %79 = vsyncadd [#allocation9], 0
      %s80 = sshll.u32 %s5, 4
      %s81 = int_to_ptr.hbm [resolvable:$true] %s80
      %s82 = sshll.u32 [#allocation10], 4
      %s83 = int_to_ptr.vmem [resolvable:$true] %s82
      %88 = dma.hbm_to_vmem [thread:$0]  %s81, 65536, %s83, [#allocation9], 256, 256, 16
    $region25: #{tpu_custom_call.1} parent=1 // pred_fallthru
      _
    // Predicated region
    $region26: #{tpu_custom_call.1} parent=1 // pred_check
      _
    $region27: #{tpu_custom_call.1} parent=1 // pred_check_branch
      %90 = sbr.rel (0) target = $region29
    $region28: #{tpu_custom_call.1} parent=1 // pred_region
      %92 = vsyncadd [#allocation12], 0
      %s93 = sshll.u32 %s6, 4
      %s94 = int_to_ptr.hbm [resolvable:$true] %s93
      %s95 = sshll.u32 [#allocation11], 4
      %s96 = int_to_ptr.vmem [resolvable:$true] %s95
      %101 = dma.hbm_to_vmem [thread:$0]  %s94, 3072, %s96, [#allocation12], 128, 128, 8
    $region29: #{tpu_custom_call.1} parent=1 // pred_fallthru
      _
    // Predicated region
    $region30: #{tpu_custom_call.1} parent=1 // pred_check
      _
    $region31: #{tpu_custom_call.1} parent=1 // pred_check_branch
      %103 = sbr.rel (0) target = $region33
    $region32: #{tpu_custom_call.1} parent=1 // pred_region
      %105 = vsyncadd [#allocation12], 0
      %s107 = sshll.u32 %s7, 4
      %s108 = int_to_ptr.hbm [resolvable:$true] %s107
      %s109 = sshll.u32 [#allocation13], 4
      %s110 = int_to_ptr.vmem [resolvable:$true] %s109
      %112 = dma.hbm_to_vmem [thread:$0]  %s108, 16, %s110, [#allocation12]
    $region33: #{tpu_custom_call.1} parent=1 // pred_fallthru
      _
    // Predicated region
    $region34: #{tpu_custom_call.1} parent=1 // pred_check
      _
    $region35: #{tpu_custom_call.1} parent=1 // pred_check_branch
      %114 = sbr.rel (0) target = $region37
    $region36: #{tpu_custom_call.1} parent=1 // pred_region
      %116 = vsyncadd [#allocation15], 0
      %s117 = sshll.u32 %s8, 4
      %s118 = int_to_ptr.hbm [resolvable:$true] %s117
      %s119 = sshll.u32 [#allocation14], 4
      %s120 = int_to_ptr.vmem [resolvable:$true] %s119
      %125 = dma.hbm_to_vmem [thread:$0]  %s118, 4096, %s120, [#allocation15], 128, 128, 8
    $region37: #{tpu_custom_call.1} parent=1 // pred_fallthru
      _
    // Predicated region
    $region38: #{tpu_custom_call.1} parent=1 // pred_check
      _
    $region39: #{tpu_custom_call.1} parent=1 // pred_check_branch
      %127 = sbr.rel (0) target = $region41
    $region40: #{tpu_custom_call.1} parent=1 // pred_region
      %129 = vsyncadd [#allocation15], 0
      %s131 = sshll.u32 %s9, 4
      %s132 = int_to_ptr.hbm [resolvable:$true] %s131
      %s133 = sshll.u32 [#allocation16], 4
      %s134 = int_to_ptr.vmem [resolvable:$true] %s133
      %136 = dma.hbm_to_vmem [thread:$0]  %s132, 16, %s134, [#allocation15]
    $region41: #{tpu_custom_call.1} parent=1 // pred_fallthru
      _
    // Predicated region
    $region42: #{tpu_custom_call.1} parent=1 // pred_check
      _
    $region43: #{tpu_custom_call.1} parent=1 // pred_check_branch
      %138 = sbr.rel (0) target = $region45
    $region44: #{tpu_custom_call.1} parent=1 // pred_region
      _
    $region45: #{tpu_custom_call.1} parent=1 // pred_fallthru
      _
    // Predicated region
    $region46: #{tpu_custom_call.1} parent=1 // pred_check
      _
    $region47: #{tpu_custom_call.1} parent=1 // pred_check_branch
      %140 = sbr.rel (0) target = $region49
    $region48: #{tpu_custom_call.1} parent=1 // pred_region
      %142 = vsyncadd [#allocation18], 0
      %s144 = sshll.u32 %s11, 4
      %s145 = int_to_ptr.hbm [resolvable:$true] %s144
      %s146 = sshll.u32 [#allocation17], 4
      %s147 = int_to_ptr.vmem [resolvable:$true] %s146
      %149 = dma.hbm_to_vmem [thread:$0]  %s145, 256, %s147, [#allocation18]
    $region49: #{tpu_custom_call.1} parent=1 // pred_fallthru
      _
    // Predicated region
    $region50: #{tpu_custom_call.1} parent=1 // pred_check
      _
    $region51: #{tpu_custom_call.1} parent=1 // pred_check_branch
      %151 = sbr.rel (0) target = $region53
    $region52: #{tpu_custom_call.1} parent=1 // pred_region
      %153 = dma.done [#allocation3], 256
    $region53: #{tpu_custom_call.1} parent=1 // pred_fallthru
      _
    // Predicated region
    $region54: #{tpu_custom_call.1} parent=1 // pred_check
      _
    $region55: #{tpu_custom_call.1} parent=1 // pred_check_branch
      %155 = sbr.rel (0) target = $region57
    $region56: #{tpu_custom_call.1} parent=1 // pred_region
      %157 = dma.done [#allocation6], 256
    $region57: #{tpu_custom_call.1} parent=1 // pred_fallthru
      _
    // Predicated region
    $region58: #{tpu_custom_call.1} parent=1 // pred_check
      _
    $region59: #{tpu_custom_call.1} parent=1 // pred_check_branch
      %159 = sbr.rel (0) target = $region61
    $region60: #{tpu_custom_call.1} parent=1 // pred_region
      %161 = dma.done [#allocation6], 256
    $region61: #{tpu_custom_call.1} parent=1 // pred_fallthru
      _
    // Predicated region
    $region62: #{tpu_custom_call.1} parent=1 // pred_check
      _
    $region63: #{tpu_custom_call.1} parent=1 // pred_check_branch
      %163 = sbr.rel (0) target = $region65
    $region64: #{tpu_custom_call.1} parent=1 // pred_region
      %165 = dma.done [#allocation9], 16384
    $region65: #{tpu_custom_call.1} parent=1 // pred_fallthru
      _
    // Predicated region
    $region66: #{tpu_custom_call.1} parent=1 // pred_check
      _
    $region67: #{tpu_custom_call.1} parent=1 // pred_check_branch
      %167 = sbr.rel (0) target = $region69
    $region68: #{tpu_custom_call.1} parent=1 // pred_region
      %169 = dma.done [#allocation9], 65536
    $region69: #{tpu_custom_call.1} parent=1 // pred_fallthru
      _
    // Predicated region
    $region70: #{tpu_custom_call.1} parent=1 // pred_check
      _
    $region71: #{tpu_custom_call.1} parent=1 // pred_check_branch
      %171 = sbr.rel (0) target = $region73
    $region72: #{tpu_custom_call.1} parent=1 // pred_region
      %173 = dma.done [#allocation12], 3072
    $region73: #{tpu_custom_call.1} parent=1 // pred_fallthru
      _
    // Predicated region
    $region74: #{tpu_custom_call.1} parent=1 // pred_check
      _
    $region75: #{tpu_custom_call.1} parent=1 // pred_check_branch
      %175 = sbr.rel (0) target = $region77
    $region76: #{tpu_custom_call.1} parent=1 // pred_region
      %177 = dma.done [#allocation12], 16
    $region77: #{tpu_custom_call.1} parent=1 // pred_fallthru
      _
    // Predicated region
    $region78: #{tpu_custom_call.1} parent=1 // pred_check
      _
    $region79: #{tpu_custom_call.1} parent=1 // pred_check_branch
      %179 = sbr.rel (0) target = $region81
    $region80: #{tpu_custom_call.1} parent=1 // pred_region
      %181 = dma.done [#allocation15], 4096
    $region81: #{tpu_custom_call.1} parent=1 // pred_fallthru
      _
    // Predicated region
    $region82: #{tpu_custom_call.1} parent=1 // pred_check
      _
    $region83: #{tpu_custom_call.1} parent=1 // pred_check_branch
      %183 = sbr.rel (0) target = $region85
    $region84: #{tpu_custom_call.1} parent=1 // pred_region
      %185 = dma.done [#allocation15], 16
    $region85: #{tpu_custom_call.1} parent=1 // pred_fallthru
      _
    // Predicated region
    $region86: #{tpu_custom_call.1} parent=1 // pred_check
      _
    $region87: #{tpu_custom_call.1} parent=1 // pred_check_branch
      %187 = sbr.rel (0) target = $region89
    $region88: #{tpu_custom_call.1} parent=1 // pred_region
      %189 = dma.done [#allocation18], 256
    $region89: #{tpu_custom_call.1} parent=1 // pred_fallthru
      _
    %v190 = vld [vmem:[#allocation2] sm:$0xff]
    %v191 = vld [vmem:[#allocation2 + $0x8] sm:$0xff]
    %v192 = vld [vmem:[%s3] sm:$0xff]
    %v193 = vld [vmem:[%s3 + $0x8] sm:$0xff]
    %v194 = vld [vmem:[%s3 + $0x10] sm:$0xff]
    %v195 = vld [vmem:[%s3 + $0x18] sm:$0xff]
    %v196 = vld [vmem:[%s3 + $0x20] sm:$0xff]
    %v197 = vld [vmem:[%s3 + $0x28] sm:$0xff]
    %v198 = vld [vmem:[%s3 + $0x30] sm:$0xff]
    %v199 = vld [vmem:[%s3 + $0x38] sm:$0xff]
    %v200 = vld [vmem:[%s3 + $0x40] sm:$0xff]
    %v201 = vld [vmem:[%s3 + $0x48] sm:$0xff]
    %v202 = vld [vmem:[%s3 + $0x50] sm:$0xff]
    %v203 = vld [vmem:[%s3 + $0x58] sm:$0xff]
    %v204 = vld [vmem:[%s3 + $0x60] sm:$0xff]
    %v205 = vld [vmem:[%s3 + $0x68] sm:$0xff]
    %v206 = vld [vmem:[%s3 + $0x70] sm:$0xff]
    %v207 = vld [vmem:[%s3 + $0x78] sm:$0xff]
    %v208 = vld [vmem:[%s3 + $0x80] sm:$0xff]
    %v209 = vld [vmem:[%s3 + $0x88] sm:$0xff]
    %v210 = vld [vmem:[%s3 + $0x90] sm:$0xff]
    %v211 = vld [vmem:[%s3 + $0x98] sm:$0xff]
    %v212 = vld [vmem:[%s3 + $0xa0] sm:$0xff]
    %v213 = vld [vmem:[%s3 + $0xa8] sm:$0xff]
    %v214 = vld [vmem:[%s3 + $0xb0] sm:$0xff]
    %v215 = vld [vmem:[%s3 + $0xb8] sm:$0xff]
    %v216 = vld [vmem:[%s3 + $0xc0] sm:$0xff]
    %v217 = vld [vmem:[%s3 + $0xc8] sm:$0xff]
    %v218 = vld [vmem:[%s3 + $0xd0] sm:$0xff]
    %v219 = vld [vmem:[%s3 + $0xd8] sm:$0xff]
    %v220 = vld [vmem:[%s3 + $0xe0] sm:$0xff]
    %v221 = vld [vmem:[%s3 + $0xe8] sm:$0xff]
    %v222 = vld [vmem:[%s3 + $0xf0] sm:$0xff]
    %v223 = vld [vmem:[%s3 + $0xf8] sm:$0xff]
    %v224 = vld [vmem:[#allocation8] sm:$0xff]
    %v225 = vld [vmem:[#allocation8 + $0x8] sm:$0xff]
    %v226 = vld [vmem:[#allocation8 + $0x10] sm:$0xff]
    %v227 = vld [vmem:[#allocation8 + $0x18] sm:$0xff]
    %v228 = vld [vmem:[#allocation8 + $0x20] sm:$0xff]
    %v229 = vld [vmem:[#allocation8 + $0x28] sm:$0xff]
    %v230 = vld [vmem:[#allocation8 + $0x30] sm:$0xff]
    %v231 = vld [vmem:[#allocation8 + $0x38] sm:$0xff]
    %v232 = vld [vmem:[#allocation8 + $0x40] sm:$0xff]
    %v233 = vld [vmem:[#allocation8 + $0x48] sm:$0xff]
    %v234 = vld [vmem:[#allocation8 + $0x50] sm:$0xff]
    %v235 = vld [vmem:[#allocation8 + $0x58] sm:$0xff]
    %v236 = vld [vmem:[#allocation8 + $0x60] sm:$0xff]
    %v237 = vld [vmem:[#allocation8 + $0x68] sm:$0xff]
    %v238 = vld [vmem:[#allocation8 + $0x70] sm:$0xff]
    %v239 = vld [vmem:[#allocation8 + $0x78] sm:$0xff]
    %v240 = vld [vmem:[#allocation8 + $0x80] sm:$0xff]
    %v241 = vld [vmem:[#allocation8 + $0x88] sm:$0xff]
    %v242 = vld [vmem:[#allocation8 + $0x90] sm:$0xff]
    %v243 = vld [vmem:[#allocation8 + $0x98] sm:$0xff]
    %v244 = vld [vmem:[#allocation8 + $0xa0] sm:$0xff]
    %v245 = vld [vmem:[#allocation8 + $0xa8] sm:$0xff]
    %v246 = vld [vmem:[#allocation8 + $0xb0] sm:$0xff]
    %v247 = vld [vmem:[#allocation8 + $0xb8] sm:$0xff]
    %v248 = vld [vmem:[#allocation8 + $0xc0] sm:$0xff]
    %v249 = vld [vmem:[#allocation8 + $0xc8] sm:$0xff]
    %v250 = vld [vmem:[#allocation8 + $0xd0] sm:$0xff]
    %v251 = vld [vmem:[#allocation8 + $0xd8] sm:$0xff]
    %v252 = vld [vmem:[#allocation8 + $0xe0] sm:$0xff]
    %v253 = vld [vmem:[#allocation8 + $0xe8] sm:$0xff]
    %v254 = vld [vmem:[#allocation8 + $0xf0] sm:$0xff]
    %v255 = vld [vmem:[#allocation8 + $0xf8] sm:$0xff]
    %v256 = vld [vmem:[#allocation8 + $0x100] sm:$0xff]
    %v257 = vld [vmem:[#allocation8 + $0x108] sm:$0xff]
    %v258 = vld [vmem:[#allocation8 + $0x110] sm:$0xff]
    %v259 = vld [vmem:[#allocation8 + $0x118] sm:$0xff]
    %v260 = vld [vmem:[#allocation8 + $0x120] sm:$0xff]
    %v261 = vld [vmem:[#allocation8 + $0x128] sm:$0xff]
    %v262 = vld [vmem:[#allocation8 + $0x130] sm:$0xff]
    %v263 = vld [vmem:[#allocation8 + $0x138] sm:$0xff]
    %v264 = vld [vmem:[#allocation8 + $0x140] sm:$0xff]
    %v265 = vld [vmem:[#allocation8 + $0x148] sm:$0xff]
    %v266 = vld [vmem:[#allocation8 + $0x150] sm:$0xff]
    %v267 = vld [vmem:[#allocation8 + $0x158] sm:$0xff]
    %v268 = vld [vmem:[#allocation8 + $0x160] sm:$0xff]
    %v269 = vld [vmem:[#allocation8 + $0x168] sm:$0xff]
    %v270 = vld [vmem:[#allocation8 + $0x170] sm:$0xff]
    %v271 = vld [vmem:[#allocation8 + $0x178] sm:$0xff]
    %v272 = vld [vmem:[#allocation8 + $0x180] sm:$0xff]
    %v273 = vld [vmem:[#allocation8 + $0x188] sm:$0xff]
    %v274 = vld [vmem:[#allocation8 + $0x190] sm:$0xff]
    %v275 = vld [vmem:[#allocation8 + $0x198] sm:$0xff]
    %v276 = vld [vmem:[#allocation8 + $0x1a0] sm:$0xff]
    %v277 = vld [vmem:[#allocation8 + $0x1a8] sm:$0xff]
    %v278 = vld [vmem:[#allocation8 + $0x1b0] sm:$0xff]
    %v279 = vld [vmem:[#allocation8 + $0x1b8] sm:$0xff]
    %v280 = vld [vmem:[#allocation8 + $0x1c0] sm:$0xff]
    %v281 = vld [vmem:[#allocation8 + $0x1c8] sm:$0xff]
    %v282 = vld [vmem:[#allocation8 + $0x1d0] sm:$0xff]
    %v283 = vld [vmem:[#allocation8 + $0x1d8] sm:$0xff]
    %v284 = vld [vmem:[#allocation8 + $0x1e0] sm:$0xff]
    %v285 = vld [vmem:[#allocation8 + $0x1e8] sm:$0xff]
    %v286 = vld [vmem:[#allocation8 + $0x1f0] sm:$0xff]
    %v287 = vld [vmem:[#allocation8 + $0x1f8] sm:$0xff]
    %v288 = vld [vmem:[#allocation8 + $0x200] sm:$0xff]
    %v289 = vld [vmem:[#allocation8 + $0x208] sm:$0xff]
    %v290 = vld [vmem:[#allocation8 + $0x210] sm:$0xff]
    %v291 = vld [vmem:[#allocation8 + $0x218] sm:$0xff]
    %v292 = vld [vmem:[#allocation8 + $0x220] sm:$0xff]
    %v293 = vld [vmem:[#allocation8 + $0x228] sm:$0xff]
    %v294 = vld [vmem:[#allocation8 + $0x230] sm:$0xff]
    %v295 = vld [vmem:[#allocation8 + $0x238] sm:$0xff]
    %v296 = vld [vmem:[#allocation8 + $0x240] sm:$0xff]
    %v297 = vld [vmem:[#allocation8 + $0x248] sm:$0xff]
    %v298 = vld [vmem:[#allocation8 + $0x250] sm:$0xff]
    %v299 = vld [vmem:[#allocation8 + $0x258] sm:$0xff]
    %v300 = vld [vmem:[#allocation8 + $0x260] sm:$0xff]
    %v301 = vld [vmem:[#allocation8 + $0x268] sm:$0xff]
    %v302 = vld [vmem:[#allocation8 + $0x270] sm:$0xff]
    %v303 = vld [vmem:[#allocation8 + $0x278] sm:$0xff]
    %v304 = vld [vmem:[#allocation8 + $0x280] sm:$0xff]
    %v305 = vld [vmem:[#allocation8 + $0x288] sm:$0xff]
    %v306 = vld [vmem:[#allocation8 + $0x290] sm:$0xff]
    %v307 = vld [vmem:[#allocation8 + $0x298] sm:$0xff]
    %v308 = vld [vmem:[#allocation8 + $0x2a0] sm:$0xff]
    %v309 = vld [vmem:[#allocation8 + $0x2a8] sm:$0xff]
    %v310 = vld [vmem:[#allocation8 + $0x2b0] sm:$0xff]
    %v311 = vld [vmem:[#allocation8 + $0x2b8] sm:$0xff]
    %v312 = vld [vmem:[#allocation8 + $0x2c0] sm:$0xff]
    %v313 = vld [vmem:[#allocation8 + $0x2c8] sm:$0xff]
    %v314 = vld [vmem:[#allocation8 + $0x2d0] sm:$0xff]
    %v315 = vld [vmem:[#allocation8 + $0x2d8] sm:$0xff]
    %v316 = vld [vmem:[#allocation8 + $0x2e0] sm:$0xff]
    %v317 = vld [vmem:[#allocation8 + $0x2e8] sm:$0xff]
    %v318 = vld [vmem:[#allocation8 + $0x2f0] sm:$0xff]
    %v319 = vld [vmem:[#allocation8 + $0x2f8] sm:$0xff]
    %v320 = vld [vmem:[#allocation8 + $0x300] sm:$0xff]
    %v321 = vld [vmem:[#allocation8 + $0x308] sm:$0xff]
    %v322 = vld [vmem:[#allocation8 + $0x310] sm:$0xff]
    %v323 = vld [vmem:[#allocation8 + $0x318] sm:$0xff]
    %v324 = vld [vmem:[#allocation8 + $0x320] sm:$0xff]
    %v325 = vld [vmem:[#allocation8 + $0x328] sm:$0xff]
    %v326 = vld [vmem:[#allocation8 + $0x330] sm:$0xff]
    %v327 = vld [vmem:[#allocation8 + $0x338] sm:$0xff]
    %v328 = vld [vmem:[#allocation8 + $0x340] sm:$0xff]
    %v329 = vld [vmem:[#allocation8 + $0x348] sm:$0xff]
    %v330 = vld [vmem:[#allocation8 + $0x350] sm:$0xff]
    %v331 = vld [vmem:[#allocation8 + $0x358] sm:$0xff]
    %v332 = vld [vmem:[#allocation8 + $0x360] sm:$0xff]
    %v333 = vld [vmem:[#allocation8 + $0x368] sm:$0xff]
    %v334 = vld [vmem:[#allocation8 + $0x370] sm:$0xff]
    %v335 = vld [vmem:[#allocation8 + $0x378] sm:$0xff]
    %v336 = vld [vmem:[#allocation8 + $0x380] sm:$0xff]
    %v337 = vld [vmem:[#allocation8 + $0x388] sm:$0xff]
    %v338 = vld [vmem:[#allocation8 + $0x390] sm:$0xff]
    %v339 = vld [vmem:[#allocation8 + $0x398] sm:$0xff]
    %v340 = vld [vmem:[#allocation8 + $0x3a0] sm:$0xff]
    %v341 = vld [vmem:[#allocation8 + $0x3a8] sm:$0xff]
    %v342 = vld [vmem:[#allocation8 + $0x3b0] sm:$0xff]
    %v343 = vld [vmem:[#allocation8 + $0x3b8] sm:$0xff]
    %v344 = vld [vmem:[#allocation8 + $0x3c0] sm:$0xff]
    %v345 = vld [vmem:[#allocation8 + $0x3c8] sm:$0xff]
    %v346 = vld [vmem:[#allocation8 + $0x3d0] sm:$0xff]
    %v347 = vld [vmem:[#allocation8 + $0x3d8] sm:$0xff]
    %v348 = vld [vmem:[#allocation8 + $0x3e0] sm:$0xff]
    %v349 = vld [vmem:[#allocation8 + $0x3e8] sm:$0xff]
    %v350 = vld [vmem:[#allocation8 + $0x3f0] sm:$0xff]
    %v351 = vld [vmem:[#allocation8 + $0x3f8] sm:$0xff]
    %v352 = vld [vmem:[#allocation10] sm:$0xff]
    %v353 = vld [vmem:[#allocation10 + $0x8] sm:$0xff]
    %v354 = vld [vmem:[#allocation10 + $0x10] sm:$0xff]
    %v355 = vld [vmem:[#allocation10 + $0x18] sm:$0xff]
    %v356 = vld [vmem:[#allocation10 + $0x20] sm:$0xff]
    %v357 = vld [vmem:[#allocation10 + $0x28] sm:$0xff]
    %v358 = vld [vmem:[#allocation10 + $0x30] sm:$0xff]
    %v359 = vld [vmem:[#allocation10 + $0x38] sm:$0xff]
    %v360 = vld [vmem:[#allocation10 + $0x40] sm:$0xff]
    %v361 = vld [vmem:[#allocation10 + $0x48] sm:$0xff]
    %v362 = vld [vmem:[#allocation10 + $0x50] sm:$0xff]
    %v363 = vld [vmem:[#allocation10 + $0x58] sm:$0xff]
    %v364 = vld [vmem:[#allocation10 + $0x60] sm:$0xff]
    %v365 = vld [vmem:[#allocation10 + $0x68] sm:$0xff]
    %v366 = vld [vmem:[#allocation10 + $0x70] sm:$0xff]
    %v367 = vld [vmem:[#allocation10 + $0x78] sm:$0xff]
    %v368 = vld [vmem:[#allocation10 + $0x80] sm:$0xff]
    %v369 = vld [vmem:[#allocation10 + $0x88] sm:$0xff]
    %v370 = vld [vmem:[#allocation10 + $0x90] sm:$0xff]
    %v371 = vld [vmem:[#allocation10 + $0x98] sm:$0xff]
    %v372 = vld [vmem:[#allocation10 + $0xa0] sm:$0xff]
    %v373 = vld [vmem:[#allocation10 + $0xa8] sm:$0xff]
    %v374 = vld [vmem:[#allocation10 + $0xb0] sm:$0xff]
    %v375 = vld [vmem:[#allocation10 + $0xb8] sm:$0xff]
    %v376 = vld [vmem:[#allocation10 + $0xc0] sm:$0xff]
    %v377 = vld [vmem:[#allocation10 + $0xc8] sm:$0xff]
    %v378 = vld [vmem:[#allocation10 + $0xd0] sm:$0xff]
    %v379 = vld [vmem:[#allocation10 + $0xd8] sm:$0xff]
    %v380 = vld [vmem:[#allocation10 + $0xe0] sm:$0xff]
    %v381 = vld [vmem:[#allocation10 + $0xe8] sm:$0xff]
    %v382 = vld [vmem:[#allocation10 + $0xf0] sm:$0xff]
    %v383 = vld [vmem:[#allocation10 + $0xf8] sm:$0xff]
    %v384 = vld [vmem:[#allocation10 + $0x100] sm:$0xff]
    %v385 = vld [vmem:[#allocation10 + $0x108] sm:$0xff]
    %v386 = vld [vmem:[#allocation10 + $0x110] sm:$0xff]
    %v387 = vld [vmem:[#allocation10 + $0x118] sm:$0xff]
    %v388 = vld [vmem:[#allocation10 + $0x120] sm:$0xff]
    %v389 = vld [vmem:[#allocation10 + $0x128] sm:$0xff]
    %v390 = vld [vmem:[#allocation10 + $0x130] sm:$0xff]
    %v391 = vld [vmem:[#allocation10 + $0x138] sm:$0xff]
    %v392 = vld [vmem:[#allocation10 + $0x140] sm:$0xff]
    %v393 = vld [vmem:[#allocation10 + $0x148] sm:$0xff]
    %v394 = vld [vmem:[#allocation10 + $0x150] sm:$0xff]
    %v395 = vld [vmem:[#allocation10 + $0x158] sm:$0xff]
    %v396 = vld [vmem:[#allocation10 + $0x160] sm:$0xff]
    %v397 = vld [vmem:[#allocation10 + $0x168] sm:$0xff]
    %v398 = vld [vmem:[#allocation10 + $0x170] sm:$0xff]
    %v399 = vld [vmem:[#allocation10 + $0x178] sm:$0xff]
    %v400 = vld [vmem:[#allocation10 + $0x180] sm:$0xff]
    %v401 = vld [vmem:[#allocation10 + $0x188] sm:$0xff]
    %v402 = vld [vmem:[#allocation10 + $0x190] sm:$0xff]
    %v403 = vld [vmem:[#allocation10 + $0x198] sm:$0xff]
    %v404 = vld [vmem:[#allocation10 + $0x1a0] sm:$0xff]
    %v405 = vld [vmem:[#allocation10 + $0x1a8] sm:$0xff]
    %v406 = vld [vmem:[#allocation10 + $0x1b0] sm:$0xff]
    %v407 = vld [vmem:[#allocation10 + $0x1b8] sm:$0xff]
    %v408 = vld [vmem:[#allocation10 + $0x1c0] sm:$0xff]
    %v409 = vld [vmem:[#allocation10 + $0x1c8] sm:$0xff]
    %v410 = vld [vmem:[#allocation10 + $0x1d0] sm:$0xff]
    %v411 = vld [vmem:[#allocation10 + $0x1d8] sm:$0xff]
    %v412 = vld [vmem:[#allocation10 + $0x1e0] sm:$0xff]
    %v413 = vld [vmem:[#allocation10 + $0x1e8] sm:$0xff]
    %v414 = vld [vmem:[#allocation10 + $0x1f0] sm:$0xff]
    %v415 = vld [vmem:[#allocation10 + $0x1f8] sm:$0xff]
    %v416 = vld [vmem:[#allocation10 + $0x200] sm:$0xff]
    %v417 = vld [vmem:[#allocation10 + $0x208] sm:$0xff]
    %v418 = vld [vmem:[#allocation10 + $0x210] sm:$0xff]
    %v419 = vld [vmem:[#allocation10 + $0x218] sm:$0xff]
    %v420 = vld [vmem:[#allocation10 + $0x220] sm:$0xff]
    %v421 = vld [vmem:[#allocation10 + $0x228] sm:$0xff]
    %v422 = vld [vmem:[#allocation10 + $0x230] sm:$0xff]
    %v423 = vld [vmem:[#allocation10 + $0x238] sm:$0xff]
    %v424 = vld [vmem:[#allocation10 + $0x240] sm:$0xff]
    %v425 = vld [vmem:[#allocation10 + $0x248] sm:$0xff]
    %v426 = vld [vmem:[#allocation10 + $0x250] sm:$0xff]
    %v427 = vld [vmem:[#allocation10 + $0x258] sm:$0xff]
    %v428 = vld [vmem:[#allocation10 + $0x260] sm:$0xff]
    %v429 = vld [vmem:[#allocation10 + $0x268] sm:$0xff]
    %v430 = vld [vmem:[#allocation10 + $0x270] sm:$0xff]
    %v431 = vld [vmem:[#allocation10 + $0x278] sm:$0xff]
    %v432 = vld [vmem:[#allocation10 + $0x280] sm:$0xff]
    %v433 = vld [vmem:[#allocation10 + $0x288] sm:$0xff]
    %v434 = vld [vmem:[#allocation10 + $0x290] sm:$0xff]
    %v435 = vld [vmem:[#allocation10 + $0x298] sm:$0xff]
    %v436 = vld [vmem:[#allocation10 + $0x2a0] sm:$0xff]
    %v437 = vld [vmem:[#allocation10 + $0x2a8] sm:$0xff]
    %v438 = vld [vmem:[#allocation10 + $0x2b0] sm:$0xff]
    %v439 = vld [vmem:[#allocation10 + $0x2b8] sm:$0xff]
    %v440 = vld [vmem:[#allocation10 + $0x2c0] sm:$0xff]
    %v441 = vld [vmem:[#allocation10 + $0x2c8] sm:$0xff]
    %v442 = vld [vmem:[#allocation10 + $0x2d0] sm:$0xff]
    %v443 = vld [vmem:[#allocation10 + $0x2d8] sm:$0xff]
    %v444 = vld [vmem:[#allocation10 + $0x2e0] sm:$0xff]
    %v445 = vld [vmem:[#allocation10 + $0x2e8] sm:$0xff]
    %v446 = vld [vmem:[#allocation10 + $0x2f0] sm:$0xff]
    %v447 = vld [vmem:[#allocation10 + $0x2f8] sm:$0xff]
    %v448 = vld [vmem:[#allocation10 + $0x300] sm:$0xff]
    %v449 = vld [vmem:[#allocation10 + $0x308] sm:$0xff]
    %v450 = vld [vmem:[#allocation10 + $0x310] sm:$0xff]
    %v451 = vld [vmem:[#allocation10 + $0x318] sm:$0xff]
    %v452 = vld [vmem:[#allocation10 + $0x320] sm:$0xff]
    %v453 = vld [vmem:[#allocation10 + $0x328] sm:$0xff]
    %v454 = vld [vmem:[#allocation10 + $0x330] sm:$0xff]
    %v455 = vld [vmem:[#allocation10 + $0x338] sm:$0xff]
    %v456 = vld [vmem:[#allocation10 + $0x340] sm:$0xff]
    %v457 = vld [vmem:[#allocation10 + $0x348] sm:$0xff]
    %v458 = vld [vmem:[#allocation10 + $0x350] sm:$0xff]
    %v459 = vld [vmem:[#allocation10 + $0x358] sm:$0xff]
    %v460 = vld [vmem:[#allocation10 + $0x360] sm:$0xff]
    %v461 = vld [vmem:[#allocation10 + $0x368] sm:$0xff]
    %v462 = vld [vmem:[#allocation10 + $0x370] sm:$0xff]
    %v463 = vld [vmem:[#allocation10 + $0x378] sm:$0xff]
    %v464 = vld [vmem:[#allocation10 + $0x380] sm:$0xff]
    %v465 = vld [vmem:[#allocation10 + $0x388] sm:$0xff]
    %v466 = vld [vmem:[#allocation10 + $0x390] sm:$0xff]
    %v467 = vld [vmem:[#allocation10 + $0x398] sm:$0xff]
    %v468 = vld [vmem:[#allocation10 + $0x3a0] sm:$0xff]
    %v469 = vld [vmem:[#allocation10 + $0x3a8] sm:$0xff]
    %v470 = vld [vmem:[#allocation10 + $0x3b0] sm:$0xff]
    %v471 = vld [vmem:[#allocation10 + $0x3b8] sm:$0xff]
    %v472 = vld [vmem:[#allocation10 + $0x3c0] sm:$0xff]
    %v473 = vld [vmem:[#allocation10 + $0x3c8] sm:$0xff]
    %v474 = vld [vmem:[#allocation10 + $0x3d0] sm:$0xff]
    %v475 = vld [vmem:[#allocation10 + $0x3d8] sm:$0xff]
    %v476 = vld [vmem:[#allocation10 + $0x3e0] sm:$0xff]
    %v477 = vld [vmem:[#allocation10 + $0x3e8] sm:$0xff]
    %v478 = vld [vmem:[#allocation10 + $0x3f0] sm:$0xff]
    %v479 = vld [vmem:[#allocation10 + $0x3f8] sm:$0xff]
    %v480 = vld [vmem:[#allocation10 + $0x400] sm:$0xff]
    %v481 = vld [vmem:[#allocation10 + $0x408] sm:$0xff]
    %v482 = vld [vmem:[#allocation10 + $0x410] sm:$0xff]
    %v483 = vld [vmem:[#allocation10 + $0x418] sm:$0xff]
    %v484 = vld [vmem:[#allocation10 + $0x420] sm:$0xff]
    %v485 = vld [vmem:[#allocation10 + $0x428] sm:$0xff]
    %v486 = vld [vmem:[#allocation10 + $0x430] sm:$0xff]
    %v487 = vld [vmem:[#allocation10 + $0x438] sm:$0xff]
    %v488 = vld [vmem:[#allocation10 + $0x440] sm:$0xff]
    %v489 = vld [vmem:[#allocation10 + $0x448] sm:$0xff]
    %v490 = vld [vmem:[#allocation10 + $0x450] sm:$0xff]
    %v491 = vld [vmem:[#allocation10 + $0x458] sm:$0xff]
    %v492 = vld [vmem:[#allocation10 + $0x460] sm:$0xff]
    %v493 = vld [vmem:[#allocation10 + $0x468] sm:$0xff]
    %v494 = vld [vmem:[#allocation10 + $0x470] sm:$0xff]
    %v495 = vld [vmem:[#allocation10 + $0x478] sm:$0xff]
    %v496 = vld [vmem:[#allocation10 + $0x480] sm:$0xff]
    %v497 = vld [vmem:[#allocation10 + $0x488] sm:$0xff]
    %v498 = vld [vmem:[#allocation10 + $0x490] sm:$0xff]
    %v499 = vld [vmem:[#allocation10 + $0x498] sm:$0xff]
    %v500 = vld [vmem:[#allocation10 + $0x4a0] sm:$0xff]
    %v501 = vld [vmem:[#allocation10 + $0x4a8] sm:$0xff]
    %v502 = vld [vmem:[#allocation10 + $0x4b0] sm:$0xff]
    %v503 = vld [vmem:[#allocation10 + $0x4b8] sm:$0xff]
    %v504 = vld [vmem:[#allocation10 + $0x4c0] sm:$0xff]
    %v505 = vld [vmem:[#allocation10 + $0x4c8] sm:$0xff]
    %v506 = vld [vmem:[#allocation10 + $0x4d0] sm:$0xff]
    %v507 = vld [vmem:[#allocation10 + $0x4d8] sm:$0xff]
    %v508 = vld [vmem:[#allocation10 + $0x4e0] sm:$0xff]
    %v509 = vld [vmem:[#allocation10 + $0x4e8] sm:$0xff]
    %v510 = vld [vmem:[#allocation10 + $0x4f0] sm:$0xff]
    %v511 = vld [vmem:[#allocation10 + $0x4f8] sm:$0xff]
    %v512 = vld [vmem:[#allocation10 + $0x500] sm:$0xff]
    %v513 = vld [vmem:[#allocation10 + $0x508] sm:$0xff]
    %v514 = vld [vmem:[#allocation10 + $0x510] sm:$0xff]
    %v515 = vld [vmem:[#allocation10 + $0x518] sm:$0xff]
    %v516 = vld [vmem:[#allocation10 + $0x520] sm:$0xff]
    %v517 = vld [vmem:[#allocation10 + $0x528] sm:$0xff]
    %v518 = vld [vmem:[#allocation10 + $0x530] sm:$0xff]
    %v519 = vld [vmem:[#allocation10 + $0x538] sm:$0xff]
    %v520 = vld [vmem:[#allocation10 + $0x540] sm:$0xff]
    %v521 = vld [vmem:[#allocation10 + $0x548] sm:$0xff]
    %v522 = vld [vmem:[#allocation10 + $0x550] sm:$0xff]
    %v523 = vld [vmem:[#allocation10 + $0x558] sm:$0xff]
    %v524 = vld [vmem:[#allocation10 + $0x560] sm:$0xff]
    %v525 = vld [vmem:[#allocation10 + $0x568] sm:$0xff]
    %v526 = vld [vmem:[#allocation10 + $0x570] sm:$0xff]
    %v527 = vld [vmem:[#allocation10 + $0x578] sm:$0xff]
    %v528 = vld [vmem:[#allocation10 + $0x580] sm:$0xff]
    %v529 = vld [vmem:[#allocation10 + $0x588] sm:$0xff]
    %v530 = vld [vmem:[#allocation10 + $0x590] sm:$0xff]
    %v531 = vld [vmem:[#allocation10 + $0x598] sm:$0xff]
    %v532 = vld [vmem:[#allocation10 + $0x5a0] sm:$0xff]
    %v533 = vld [vmem:[#allocation10 + $0x5a8] sm:$0xff]
    %v534 = vld [vmem:[#allocation10 + $0x5b0] sm:$0xff]
    %v535 = vld [vmem:[#allocation10 + $0x5b8] sm:$0xff]
    %v536 = vld [vmem:[#allocation10 + $0x5c0] sm:$0xff]
    %v537 = vld [vmem:[#allocation10 + $0x5c8] sm:$0xff]
    %v538 = vld [vmem:[#allocation10 + $0x5d0] sm:$0xff]
    %v539 = vld [vmem:[#allocation10 + $0x5d8] sm:$0xff]
    %v540 = vld [vmem:[#allocation10 + $0x5e0] sm:$0xff]
    %v541 = vld [vmem:[#allocation10 + $0x5e8] sm:$0xff]
    %v542 = vld [vmem:[#allocation10 + $0x5f0] sm:$0xff]
    %v543 = vld [vmem:[#allocation10 + $0x5f8] sm:$0xff]
    %v544 = vld [vmem:[#allocation10 + $0x600] sm:$0xff]
    %v545 = vld [vmem:[#allocation10 + $0x608] sm:$0xff]
    %v546 = vld [vmem:[#allocation10 + $0x610] sm:$0xff]
    %v547 = vld [vmem:[#allocation10 + $0x618] sm:$0xff]
    %v548 = vld [vmem:[#allocation10 + $0x620] sm:$0xff]
    %v549 = vld [vmem:[#allocation10 + $0x628] sm:$0xff]
    %v550 = vld [vmem:[#allocation10 + $0x630] sm:$0xff]
    %v551 = vld [vmem:[#allocation10 + $0x638] sm:$0xff]
    %v552 = vld [vmem:[#allocation10 + $0x640] sm:$0xff]
    %v553 = vld [vmem:[#allocation10 + $0x648] sm:$0xff]
    %v554 = vld [vmem:[#allocation10 + $0x650] sm:$0xff]
    %v555 = vld [vmem:[#allocation10 + $0x658] sm:$0xff]
    %v556 = vld [vmem:[#allocation10 + $0x660] sm:$0xff]
    %v557 = vld [vmem:[#allocation10 + $0x668] sm:$0xff]
    %v558 = vld [vmem:[#allocation10 + $0x670] sm:$0xff]
    %v559 = vld [vmem:[#allocation10 + $0x678] sm:$0xff]
    %v560 = vld [vmem:[#allocation10 + $0x680] sm:$0xff]
    %v561 = vld [vmem:[#allocation10 + $0x688] sm:$0xff]
    %v562 = vld [vmem:[#allocation10 + $0x690] sm:$0xff]
    %v563 = vld [vmem:[#allocation10 + $0x698] sm:$0xff]
    %v564 = vld [vmem:[#allocation10 + $0x6a0] sm:$0xff]
    %v565 = vld [vmem:[#allocation10 + $0x6a8] sm:$0xff]
    %v566 = vld [vmem:[#allocation10 + $0x6b0] sm:$0xff]
    %v567 = vld [vmem:[#allocation10 + $0x6b8] sm:$0xff]
    %v568 = vld [vmem:[#allocation10 + $0x6c0] sm:$0xff]
    %v569 = vld [vmem:[#allocation10 + $0x6c8] sm:$0xff]
    %v570 = vld [vmem:[#allocation10 + $0x6d0] sm:$0xff]
    %v571 = vld [vmem:[#allocation10 + $0x6d8] sm:$0xff]
    %v572 = vld [vmem:[#allocation10 + $0x6e0] sm:$0xff]
    %v573 = vld [vmem:[#allocation10 + $0x6e8] sm:$0xff]
    %v574 = vld [vmem:[#allocation10 + $0x6f0] sm:$0xff]
    %v575 = vld [vmem:[#allocation10 + $0x6f8] sm:$0xff]
    %v576 = vld [vmem:[#allocation10 + $0x700] sm:$0xff]
    %v577 = vld [vmem:[#allocation10 + $0x708] sm:$0xff]
    %v578 = vld [vmem:[#allocation10 + $0x710] sm:$0xff]
    %v579 = vld [vmem:[#allocation10 + $0x718] sm:$0xff]
    %v580 = vld [vmem:[#allocation10 + $0x720] sm:$0xff]
    %v581 = vld [vmem:[#allocation10 + $0x728] sm:$0xff]
    %v582 = vld [vmem:[#allocation10 + $0x730] sm:$0xff]
    %v583 = vld [vmem:[#allocation10 + $0x738] sm:$0xff]
    %v584 = vld [vmem:[#allocation10 + $0x740] sm:$0xff]
    %v585 = vld [vmem:[#allocation10 + $0x748] sm:$0xff]
    %v586 = vld [vmem:[#allocation10 + $0x750] sm:$0xff]
    %v587 = vld [vmem:[#allocation10 + $0x758] sm:$0xff]
    %v588 = vld [vmem:[#allocation10 + $0x760] sm:$0xff]
    %v589 = vld [vmem:[#allocation10 + $0x768] sm:$0xff]
    %v590 = vld [vmem:[#allocation10 + $0x770] sm:$0xff]
    %v591 = vld [vmem:[#allocation10 + $0x778] sm:$0xff]
    %v592 = vld [vmem:[#allocation10 + $0x780] sm:$0xff]
    %v593 = vld [vmem:[#allocation10 + $0x788] sm:$0xff]
    %v594 = vld [vmem:[#allocation10 + $0x790] sm:$0xff]
    %v595 = vld [vmem:[#allocation10 + $0x798] sm:$0xff]
    %v596 = vld [vmem:[#allocation10 + $0x7a0] sm:$0xff]
    %v597 = vld [vmem:[#allocation10 + $0x7a8] sm:$0xff]
    %v598 = vld [vmem:[#allocation10 + $0x7b0] sm:$0xff]
    %v599 = vld [vmem:[#allocation10 + $0x7b8] sm:$0xff]
    %v600 = vld [vmem:[#allocation10 + $0x7c0] sm:$0xff]
    %v601 = vld [vmem:[#allocation10 + $0x7c8] sm:$0xff]
    %v602 = vld [vmem:[#allocation10 + $0x7d0] sm:$0xff]
    %v603 = vld [vmem:[#allocation10 + $0x7d8] sm:$0xff]
    %v604 = vld [vmem:[#allocation10 + $0x7e0] sm:$0xff]
    %v605 = vld [vmem:[#allocation10 + $0x7e8] sm:$0xff]
    %v606 = vld [vmem:[#allocation10 + $0x7f0] sm:$0xff]
    %v607 = vld [vmem:[#allocation10 + $0x7f8] sm:$0xff]
    %v608 = vld [vmem:[#allocation10 + $0x800] sm:$0xff]
    %v609 = vld [vmem:[#allocation10 + $0x808] sm:$0xff]
    %v610 = vld [vmem:[#allocation10 + $0x810] sm:$0xff]
    %v611 = vld [vmem:[#allocation10 + $0x818] sm:$0xff]
    %v612 = vld [vmem:[#allocation10 + $0x820] sm:$0xff]
    %v613 = vld [vmem:[#allocation10 + $0x828] sm:$0xff]
    %v614 = vld [vmem:[#allocation10 + $0x830] sm:$0xff]
    %v615 = vld [vmem:[#allocation10 + $0x838] sm:$0xff]
    %v616 = vld [vmem:[#allocation10 + $0x840] sm:$0xff]
    %v617 = vld [vmem:[#allocation10 + $0x848] sm:$0xff]
    %v618 = vld [vmem:[#allocation10 + $0x850] sm:$0xff]
    %v619 = vld [vmem:[#allocation10 + $0x858] sm:$0xff]
    %v620 = vld [vmem:[#allocation10 + $0x860] sm:$0xff]
    %v621 = vld [vmem:[#allocation10 + $0x868] sm:$0xff]
    %v622 = vld [vmem:[#allocation10 + $0x870] sm:$0xff]
    %v623 = vld [vmem:[#allocation10 + $0x878] sm:$0xff]
    %v624 = vld [vmem:[#allocation10 + $0x880] sm:$0xff]
    %v625 = vld [vmem:[#allocation10 + $0x888] sm:$0xff]
    %v626 = vld [vmem:[#allocation10 + $0x890] sm:$0xff]
    %v627 = vld [vmem:[#allocation10 + $0x898] sm:$0xff]
    %v628 = vld [vmem:[#allocation10 + $0x8a0] sm:$0xff]
    %v629 = vld [vmem:[#allocation10 + $0x8a8] sm:$0xff]
    %v630 = vld [vmem:[#allocation10 + $0x8b0] sm:$0xff]
    %v631 = vld [vmem:[#allocation10 + $0x8b8] sm:$0xff]
    %v632 = vld [vmem:[#allocation10 + $0x8c0] sm:$0xff]
    %v633 = vld [vmem:[#allocation10 + $0x8c8] sm:$0xff]
    %v634 = vld [vmem:[#allocation10 + $0x8d0] sm:$0xff]
    %v635 = vld [vmem:[#allocation10 + $0x8d8] sm:$0xff]
    %v636 = vld [vmem:[#allocation10 + $0x8e0] sm:$0xff]
    %v637 = vld [vmem:[#allocation10 + $0x8e8] sm:$0xff]
    %v638 = vld [vmem:[#allocation10 + $0x8f0] sm:$0xff]
    %v639 = vld [vmem:[#allocation10 + $0x8f8] sm:$0xff]
    %v640 = vld [vmem:[#allocation10 + $0x900] sm:$0xff]
    %v641 = vld [vmem:[#allocation10 + $0x908] sm:$0xff]
    %v642 = vld [vmem:[#allocation10 + $0x910] sm:$0xff]
    %v643 = vld [vmem:[#allocation10 + $0x918] sm:$0xff]
    %v644 = vld [vmem:[#allocation10 + $0x920] sm:$0xff]
    %v645 = vld [vmem:[#allocation10 + $0x928] sm:$0xff]
    %v646 = vld [vmem:[#allocation10 + $0x930] sm:$0xff]
    %v647 = vld [vmem:[#allocation10 + $0x938] sm:$0xff]
    %v648 = vld [vmem:[#allocation10 + $0x940] sm:$0xff]
    %v649 = vld [vmem:[#allocation10 + $0x948] sm:$0xff]
    %v650 = vld [vmem:[#allocation10 + $0x950] sm:$0xff]
    %v651 = vld [vmem:[#allocation10 + $0x958] sm:$0xff]
    %v652 = vld [vmem:[#allocation10 + $0x960] sm:$0xff]
    %v653 = vld [vmem:[#allocation10 + $0x968] sm:$0xff]
    %v654 = vld [vmem:[#allocation10 + $0x970] sm:$0xff]
    %v655 = vld [vmem:[#allocation10 + $0x978] sm:$0xff]
    %v656 = vld [vmem:[#allocation10 + $0x980] sm:$0xff]
    %v657 = vld [vmem:[#allocation10 + $0x988] sm:$0xff]
    %v658 = vld [vmem:[#allocation10 + $0x990] sm:$0xff]
    %v659 = vld [vmem:[#allocation10 + $0x998] sm:$0xff]
    %v660 = vld [vmem:[#allocation10 + $0x9a0] sm:$0xff]
    %v661 = vld [vmem:[#allocation10 + $0x9a8] sm:$0xff]
    %v662 = vld [vmem:[#allocation10 + $0x9b0] sm:$0xff]
    %v663 = vld [vmem:[#allocation10 + $0x9b8] sm:$0xff]
    %v664 = vld [vmem:[#allocation10 + $0x9c0] sm:$0xff]
    %v665 = vld [vmem:[#allocation10 + $0x9c8] sm:$0xff]
    %v666 = vld [vmem:[#allocation10 + $0x9d0] sm:$0xff]
    %v667 = vld [vmem:[#allocation10 + $0x9d8] sm:$0xff]
    %v668 = vld [vmem:[#allocation10 + $0x9e0] sm:$0xff]
    %v669 = vld [vmem:[#allocation10 + $0x9e8] sm:$0xff]
    %v670 = vld [vmem:[#allocation10 + $0x9f0] sm:$0xff]
    %v671 = vld [vmem:[#allocation10 + $0x9f8] sm:$0xff]
    %v672 = vld [vmem:[#allocation10 + $0xa00] sm:$0xff]
    %v673 = vld [vmem:[#allocation10 + $0xa08] sm:$0xff]
    %v674 = vld [vmem:[#allocation10 + $0xa10] sm:$0xff]
    %v675 = vld [vmem:[#allocation10 + $0xa18] sm:$0xff]
    %v676 = vld [vmem:[#allocation10 + $0xa20] sm:$0xff]
    %v677 = vld [vmem:[#allocation10 + $0xa28] sm:$0xff]
    %v678 = vld [vmem:[#allocation10 + $0xa30] sm:$0xff]
    %v679 = vld [vmem:[#allocation10 + $0xa38] sm:$0xff]
    %v680 = vld [vmem:[#allocation10 + $0xa40] sm:$0xff]
    %v681 = vld [vmem:[#allocation10 + $0xa48] sm:$0xff]
    %v682 = vld [vmem:[#allocation10 + $0xa50] sm:$0xff]
    %v683 = vld [vmem:[#allocation10 + $0xa58] sm:$0xff]
    %v684 = vld [vmem:[#allocation10 + $0xa60] sm:$0xff]
    %v685 = vld [vmem:[#allocation10 + $0xa68] sm:$0xff]
    %v686 = vld [vmem:[#allocation10 + $0xa70] sm:$0xff]
    %v687 = vld [vmem:[#allocation10 + $0xa78] sm:$0xff]
    %v688 = vld [vmem:[#allocation10 + $0xa80] sm:$0xff]
    %v689 = vld [vmem:[#allocation10 + $0xa88] sm:$0xff]
    %v690 = vld [vmem:[#allocation10 + $0xa90] sm:$0xff]
    %v691 = vld [vmem:[#allocation10 + $0xa98] sm:$0xff]
    %v692 = vld [vmem:[#allocation10 + $0xaa0] sm:$0xff]
    %v693 = vld [vmem:[#allocation10 + $0xaa8] sm:$0xff]
    %v694 = vld [vmem:[#allocation10 + $0xab0] sm:$0xff]
    %v695 = vld [vmem:[#allocation10 + $0xab8] sm:$0xff]
    %v696 = vld [vmem:[#allocation10 + $0xac0] sm:$0xff]
    %v697 = vld [vmem:[#allocation10 + $0xac8] sm:$0xff]
    %v698 = vld [vmem:[#allocation10 + $0xad0] sm:$0xff]
    %v699 = vld [vmem:[#allocation10 + $0xad8] sm:$0xff]
    %v700 = vld [vmem:[#allocation10 + $0xae0] sm:$0xff]
    %v701 = vld [vmem:[#allocation10 + $0xae8] sm:$0xff]
    %v702 = vld [vmem:[#allocation10 + $0xaf0] sm:$0xff]
    %v703 = vld [vmem:[#allocation10 + $0xaf8] sm:$0xff]
    %v704 = vld [vmem:[#allocation10 + $0xb00] sm:$0xff]
    %v705 = vld [vmem:[#allocation10 + $0xb08] sm:$0xff]
    %v706 = vld [vmem:[#allocation10 + $0xb10] sm:$0xff]
    %v707 = vld [vmem:[#allocation10 + $0xb18] sm:$0xff]
    %v708 = vld [vmem:[#allocation10 + $0xb20] sm:$0xff]
    %v709 = vld [vmem:[#allocation10 + $0xb28] sm:$0xff]
    %v710 = vld [vmem:[#allocation10 + $0xb30] sm:$0xff]
    %v711 = vld [vmem:[#allocation10 + $0xb38] sm:$0xff]
    %v712 = vld [vmem:[#allocation10 + $0xb40] sm:$0xff]
    %v713 = vld [vmem:[#allocation10 + $0xb48] sm:$0xff]
    %v714 = vld [vmem:[#allocation10 + $0xb50] sm:$0xff]
    %v715 = vld [vmem:[#allocation10 + $0xb58] sm:$0xff]
    %v716 = vld [vmem:[#allocation10 + $0xb60] sm:$0xff]
    %v717 = vld [vmem:[#allocation10 + $0xb68] sm:$0xff]
    %v718 = vld [vmem:[#allocation10 + $0xb70] sm:$0xff]
    %v719 = vld [vmem:[#allocation10 + $0xb78] sm:$0xff]
    %v720 = vld [vmem:[#allocation10 + $0xb80] sm:$0xff]
    %v721 = vld [vmem:[#allocation10 + $0xb88] sm:$0xff]
    %v722 = vld [vmem:[#allocation10 + $0xb90] sm:$0xff]
    %v723 = vld [vmem:[#allocation10 + $0xb98] sm:$0xff]
    %v724 = vld [vmem:[#allocation10 + $0xba0] sm:$0xff]
    %v725 = vld [vmem:[#allocation10 + $0xba8] sm:$0xff]
    %v726 = vld [vmem:[#allocation10 + $0xbb0] sm:$0xff]
    %v727 = vld [vmem:[#allocation10 + $0xbb8] sm:$0xff]
    %v728 = vld [vmem:[#allocation10 + $0xbc0] sm:$0xff]
    %v729 = vld [vmem:[#allocation10 + $0xbc8] sm:$0xff]
    %v730 = vld [vmem:[#allocation10 + $0xbd0] sm:$0xff]
    %v731 = vld [vmem:[#allocation10 + $0xbd8] sm:$0xff]
    %v732 = vld [vmem:[#allocation10 + $0xbe0] sm:$0xff]
    %v733 = vld [vmem:[#allocation10 + $0xbe8] sm:$0xff]
    %v734 = vld [vmem:[#allocation10 + $0xbf0] sm:$0xff]
    %v735 = vld [vmem:[#allocation10 + $0xbf8] sm:$0xff]
    %v736 = vld [vmem:[#allocation10 + $0xc00] sm:$0xff]
    %v737 = vld [vmem:[#allocation10 + $0xc08] sm:$0xff]
    %v738 = vld [vmem:[#allocation10 + $0xc10] sm:$0xff]
    %v739 = vld [vmem:[#allocation10 + $0xc18] sm:$0xff]
    %v740 = vld [vmem:[#allocation10 + $0xc20] sm:$0xff]
    %v741 = vld [vmem:[#allocation10 + $0xc28] sm:$0xff]
    %v742 = vld [vmem:[#allocation10 + $0xc30] sm:$0xff]
    %v743 = vld [vmem:[#allocation10 + $0xc38] sm:$0xff]
    %v744 = vld [vmem:[#allocation10 + $0xc40] sm:$0xff]
    %v745 = vld [vmem:[#allocation10 + $0xc48] sm:$0xff]
    %v746 = vld [vmem:[#allocation10 + $0xc50] sm:$0xff]
    %v747 = vld [vmem:[#allocation10 + $0xc58] sm:$0xff]
    %v748 = vld [vmem:[#allocation10 + $0xc60] sm:$0xff]
    %v749 = vld [vmem:[#allocation10 + $0xc68] sm:$0xff]
    %v750 = vld [vmem:[#allocation10 + $0xc70] sm:$0xff]
    %v751 = vld [vmem:[#allocation10 + $0xc78] sm:$0xff]
    %v752 = vld [vmem:[#allocation10 + $0xc80] sm:$0xff]
    %v753 = vld [vmem:[#allocation10 + $0xc88] sm:$0xff]
    %v754 = vld [vmem:[#allocation10 + $0xc90] sm:$0xff]
    %v755 = vld [vmem:[#allocation10 + $0xc98] sm:$0xff]
    %v756 = vld [vmem:[#allocation10 + $0xca0] sm:$0xff]
    %v757 = vld [vmem:[#allocation10 + $0xca8] sm:$0xff]
    %v758 = vld [vmem:[#allocation10 + $0xcb0] sm:$0xff]
    %v759 = vld [vmem:[#allocation10 + $0xcb8] sm:$0xff]
    %v760 = vld [vmem:[#allocation10 + $0xcc0] sm:$0xff]
    %v761 = vld [vmem:[#allocation10 + $0xcc8] sm:$0xff]
    %v762 = vld [vmem:[#allocation10 + $0xcd0] sm:$0xff]
    %v763 = vld [vmem:[#allocation10 + $0xcd8] sm:$0xff]
    %v764 = vld [vmem:[#allocation10 + $0xce0] sm:$0xff]
    %v765 = vld [vmem:[#allocation10 + $0xce8] sm:$0xff]
    %v766 = vld [vmem:[#allocation10 + $0xcf0] sm:$0xff]
    %v767 = vld [vmem:[#allocation10 + $0xcf8] sm:$0xff]
    %v768 = vld [vmem:[#allocation10 + $0xd00] sm:$0xff]
    %v769 = vld [vmem:[#allocation10 + $0xd08] sm:$0xff]
    %v770 = vld [vmem:[#allocation10 + $0xd10] sm:$0xff]
    %v771 = vld [vmem:[#allocation10 + $0xd18] sm:$0xff]
    %v772 = vld [vmem:[#allocation10 + $0xd20] sm:$0xff]
    %v773 = vld [vmem:[#allocation10 + $0xd28] sm:$0xff]
    %v774 = vld [vmem:[#allocation10 + $0xd30] sm:$0xff]
    %v775 = vld [vmem:[#allocation10 + $0xd38] sm:$0xff]
    %v776 = vld [vmem:[#allocation10 + $0xd40] sm:$0xff]
    %v777 = vld [vmem:[#allocation10 + $0xd48] sm:$0xff]
    %v778 = vld [vmem:[#allocation10 + $0xd50] sm:$0xff]
    %v779 = vld [vmem:[#allocation10 + $0xd58] sm:$0xff]
    %v780 = vld [vmem:[#allocation10 + $0xd60] sm:$0xff]
    %v781 = vld [vmem:[#allocation10 + $0xd68] sm:$0xff]
    %v782 = vld [vmem:[#allocation10 + $0xd70] sm:$0xff]
    %v783 = vld [vmem:[#allocation10 + $0xd78] sm:$0xff]
    %v784 = vld [vmem:[#allocation10 + $0xd80] sm:$0xff]
    %v785 = vld [vmem:[#allocation10 + $0xd88] sm:$0xff]
    %v786 = vld [vmem:[#allocation10 + $0xd90] sm:$0xff]
    %v787 = vld [vmem:[#allocation10 + $0xd98] sm:$0xff]
    %v788 = vld [vmem:[#allocation10 + $0xda0] sm:$0xff]
    %v789 = vld [vmem:[#allocation10 + $0xda8] sm:$0xff]
    %v790 = vld [vmem:[#allocation10 + $0xdb0] sm:$0xff]
    %v791 = vld [vmem:[#allocation10 + $0xdb8] sm:$0xff]
    %v792 = vld [vmem:[#allocation10 + $0xdc0] sm:$0xff]
    %v793 = vld [vmem:[#allocation10 + $0xdc8] sm:$0xff]
    %v794 = vld [vmem:[#allocation10 + $0xdd0] sm:$0xff]
    %v795 = vld [vmem:[#allocation10 + $0xdd8] sm:$0xff]
    %v796 = vld [vmem:[#allocation10 + $0xde0] sm:$0xff]
    %v797 = vld [vmem:[#allocation10 + $0xde8] sm:$0xff]
    %v798 = vld [vmem:[#allocation10 + $0xdf0] sm:$0xff]
    %v799 = vld [vmem:[#allocation10 + $0xdf8] sm:$0xff]
    %v800 = vld [vmem:[#allocation10 + $0xe00] sm:$0xff]
    %v801 = vld [vmem:[#allocation10 + $0xe08] sm:$0xff]
    %v802 = vld [vmem:[#allocation10 + $0xe10] sm:$0xff]
    %v803 = vld [vmem:[#allocation10 + $0xe18] sm:$0xff]
    %v804 = vld [vmem:[#allocation10 + $0xe20] sm:$0xff]
    %v805 = vld [vmem:[#allocation10 + $0xe28] sm:$0xff]
    %v806 = vld [vmem:[#allocation10 + $0xe30] sm:$0xff]
    %v807 = vld [vmem:[#allocation10 + $0xe38] sm:$0xff]
    %v808 = vld [vmem:[#allocation10 + $0xe40] sm:$0xff]
    %v809 = vld [vmem:[#allocation10 + $0xe48] sm:$0xff]
    %v810 = vld [vmem:[#allocation10 + $0xe50] sm:$0xff]
    %v811 = vld [vmem:[#allocation10 + $0xe58] sm:$0xff]
    %v812 = vld [vmem:[#allocation10 + $0xe60] sm:$0xff]
    %v813 = vld [vmem:[#allocation10 + $0xe68] sm:$0xff]
    %v814 = vld [vmem:[#allocation10 + $0xe70] sm:$0xff]
    %v815 = vld [vmem:[#allocation10 + $0xe78] sm:$0xff]
    %v816 = vld [vmem:[#allocation10 + $0xe80] sm:$0xff]
    %v817 = vld [vmem:[#allocation10 + $0xe88] sm:$0xff]
    %v818 = vld [vmem:[#allocation10 + $0xe90] sm:$0xff]
    %v819 = vld [vmem:[#allocation10 + $0xe98] sm:$0xff]
    %v820 = vld [vmem:[#allocation10 + $0xea0] sm:$0xff]
    %v821 = vld [vmem:[#allocation10 + $0xea8] sm:$0xff]
    %v822 = vld [vmem:[#allocation10 + $0xeb0] sm:$0xff]
    %v823 = vld [vmem:[#allocation10 + $0xeb8] sm:$0xff]
    %v824 = vld [vmem:[#allocation10 + $0xec0] sm:$0xff]
    %v825 = vld [vmem:[#allocation10 + $0xec8] sm:$0xff]
    %v826 = vld [vmem:[#allocation10 + $0xed0] sm:$0xff]
    %v827 = vld [vmem:[#allocation10 + $0xed8] sm:$0xff]
    %v828 = vld [vmem:[#allocation10 + $0xee0] sm:$0xff]
    %v829 = vld [vmem:[#allocation10 + $0xee8] sm:$0xff]
    %v830 = vld [vmem:[#allocation10 + $0xef0] sm:$0xff]
    %v831 = vld [vmem:[#allocation10 + $0xef8] sm:$0xff]
    %v832 = vld [vmem:[#allocation10 + $0xf00] sm:$0xff]
    %v833 = vld [vmem:[#allocation10 + $0xf08] sm:$0xff]
    %v834 = vld [vmem:[#allocation10 + $0xf10] sm:$0xff]
    %v835 = vld [vmem:[#allocation10 + $0xf18] sm:$0xff]
    %v836 = vld [vmem:[#allocation10 + $0xf20] sm:$0xff]
    %v837 = vld [vmem:[#allocation10 + $0xf28] sm:$0xff]
    %v838 = vld [vmem:[#allocation10 + $0xf30] sm:$0xff]
    %v839 = vld [vmem:[#allocation10 + $0xf38] sm:$0xff]
    %v840 = vld [vmem:[#allocation10 + $0xf40] sm:$0xff]
    %v841 = vld [vmem:[#allocation10 + $0xf48] sm:$0xff]
    %v842 = vld [vmem:[#allocation10 + $0xf50] sm:$0xff]
    %v843 = vld [vmem:[#allocation10 + $0xf58] sm:$0xff]
    %v844 = vld [vmem:[#allocation10 + $0xf60] sm:$0xff]
    %v845 = vld [vmem:[#allocation10 + $0xf68] sm:$0xff]
    %v846 = vld [vmem:[#allocation10 + $0xf70] sm:$0xff]
    %v847 = vld [vmem:[#allocation10 + $0xf78] sm:$0xff]
    %v848 = vld [vmem:[#allocation10 + $0xf80] sm:$0xff]
    %v849 = vld [vmem:[#allocation10 + $0xf88] sm:$0xff]
    %v850 = vld [vmem:[#allocation10 + $0xf90] sm:$0xff]
    %v851 = vld [vmem:[#allocation10 + $0xf98] sm:$0xff]
    %v852 = vld [vmem:[#allocation10 + $0xfa0] sm:$0xff]
    %v853 = vld [vmem:[#allocation10 + $0xfa8] sm:$0xff]
    %v854 = vld [vmem:[#allocation10 + $0xfb0] sm:$0xff]
    %v855 = vld [vmem:[#allocation10 + $0xfb8] sm:$0xff]
    %v856 = vld [vmem:[#allocation10 + $0xfc0] sm:$0xff]
    %v857 = vld [vmem:[#allocation10 + $0xfc8] sm:$0xff]
    %v858 = vld [vmem:[#allocation10 + $0xfd0] sm:$0xff]
    %v859 = vld [vmem:[#allocation10 + $0xfd8] sm:$0xff]
    %v860 = vld [vmem:[#allocation10 + $0xfe0] sm:$0xff]
    %v861 = vld [vmem:[#allocation10 + $0xfe8] sm:$0xff]
    %v862 = vld [vmem:[#allocation10 + $0xff0] sm:$0xff]
    %v863 = vld [vmem:[#allocation10 + $0xff8] sm:$0xff]
    %v864 = vld [vmem:[#allocation11] sm:$0xff]
    %v865 = vld [vmem:[#allocation11 + $0x8] sm:$0xff]
    %v866 = vld [vmem:[#allocation11 + $0x10] sm:$0xff]
    %v867 = vld [vmem:[#allocation11 + $0x18] sm:$0xff]
    %v868 = vld [vmem:[#allocation11 + $0x20] sm:$0xff]
    %v869 = vld [vmem:[#allocation11 + $0x28] sm:$0xff]
    %v870 = vld [vmem:[#allocation11 + $0x30] sm:$0xff]
    %v871 = vld [vmem:[#allocation11 + $0x38] sm:$0xff]
    %v872 = vld [vmem:[#allocation11 + $0x40] sm:$0xff]
    %v873 = vld [vmem:[#allocation11 + $0x48] sm:$0xff]
    %v874 = vld [vmem:[#allocation11 + $0x50] sm:$0xff]
    %v875 = vld [vmem:[#allocation11 + $0x58] sm:$0xff]
    %v876 = vld [vmem:[#allocation11 + $0x60] sm:$0xff]
    %v877 = vld [vmem:[#allocation11 + $0x68] sm:$0xff]
    %v878 = vld [vmem:[#allocation11 + $0x70] sm:$0xff]
    %v879 = vld [vmem:[#allocation11 + $0x78] sm:$0xff]
    %v880 = vld [vmem:[#allocation11 + $0x80] sm:$0xff]
    %v881 = vld [vmem:[#allocation11 + $0x88] sm:$0xff]
    %v882 = vld [vmem:[#allocation11 + $0x90] sm:$0xff]
    %v883 = vld [vmem:[#allocation11 + $0x98] sm:$0xff]
    %v884 = vld [vmem:[#allocation11 + $0xa0] sm:$0xff]
    %v885 = vld [vmem:[#allocation11 + $0xa8] sm:$0xff]
    %v886 = vld [vmem:[#allocation11 + $0xb0] sm:$0xff]
    %v887 = vld [vmem:[#allocation11 + $0xb8] sm:$0xff]
    %v888 = vld [vmem:[#allocation13] sm:$0x1]
    %v889 = vld [vmem:[#allocation14] sm:$0xff]
    %v890 = vld [vmem:[#allocation14 + $0x8] sm:$0xff]
    %v891 = vld [vmem:[#allocation14 + $0x10] sm:$0xff]
    %v892 = vld [vmem:[#allocation14 + $0x18] sm:$0xff]
    %v893 = vld [vmem:[#allocation14 + $0x20] sm:$0xff]
    %v894 = vld [vmem:[#allocation14 + $0x28] sm:$0xff]
    %v895 = vld [vmem:[#allocation14 + $0x30] sm:$0xff]
    %v896 = vld [vmem:[#allocation14 + $0x38] sm:$0xff]
    %v897 = vld [vmem:[#allocation14 + $0x40] sm:$0xff]
    %v898 = vld [vmem:[#allocation14 + $0x48] sm:$0xff]
    %v899 = vld [vmem:[#allocation14 + $0x50] sm:$0xff]
    %v900 = vld [vmem:[#allocation14 + $0x58] sm:$0xff]
    %v901 = vld [vmem:[#allocation14 + $0x60] sm:$0xff]
    %v902 = vld [vmem:[#allocation14 + $0x68] sm:$0xff]
    %v903 = vld [vmem:[#allocation14 + $0x70] sm:$0xff]
    %v904 = vld [vmem:[#allocation14 + $0x78] sm:$0xff]
    %v905 = vld [vmem:[#allocation14 + $0x80] sm:$0xff]
    %v906 = vld [vmem:[#allocation14 + $0x88] sm:$0xff]
    %v907 = vld [vmem:[#allocation14 + $0x90] sm:$0xff]
    %v908 = vld [vmem:[#allocation14 + $0x98] sm:$0xff]
    %v909 = vld [vmem:[#allocation14 + $0xa0] sm:$0xff]
    %v910 = vld [vmem:[#allocation14 + $0xa8] sm:$0xff]
    %v911 = vld [vmem:[#allocation14 + $0xb0] sm:$0xff]
    %v912 = vld [vmem:[#allocation14 + $0xb8] sm:$0xff]
    %v913 = vld [vmem:[#allocation14 + $0xc0] sm:$0xff]
    %v914 = vld [vmem:[#allocation14 + $0xc8] sm:$0xff]
    %v915 = vld [vmem:[#allocation14 + $0xd0] sm:$0xff]
    %v916 = vld [vmem:[#allocation14 + $0xd8] sm:$0xff]
    %v917 = vld [vmem:[#allocation14 + $0xe0] sm:$0xff]
    %v918 = vld [vmem:[#allocation14 + $0xe8] sm:$0xff]
    %v919 = vld [vmem:[#allocation14 + $0xf0] sm:$0xff]
    %v920 = vld [vmem:[#allocation14 + $0xf8] sm:$0xff]
    %v921 = vld [vmem:[#allocation16] sm:$0x1]
    %v922 = vld [vmem:[%s10] sm:$0xff]
    %v923 = vld [vmem:[%s10 + $0x8] sm:$0xff]
    %v924 = vld [vmem:[%s10 + $0x10] sm:$0xff]
    %v925 = vld [vmem:[%s10 + $0x18] sm:$0xff]
    %v926 = vld [vmem:[%s10 + $0x20] sm:$0xff]
    %v927 = vld [vmem:[%s10 + $0x28] sm:$0xff]
    %v928 = vld [vmem:[%s10 + $0x30] sm:$0xff]
    %v929 = vld [vmem:[%s10 + $0x38] sm:$0xff]
    %v930 = vld [vmem:[%s10 + $0x40] sm:$0xff]
    %v931 = vld [vmem:[%s10 + $0x48] sm:$0xff]
    %v932 = vld [vmem:[%s10 + $0x50] sm:$0xff]
    %v933 = vld [vmem:[%s10 + $0x58] sm:$0xff]
    %v934 = vld [vmem:[%s10 + $0x60] sm:$0xff]
    %v935 = vld [vmem:[%s10 + $0x68] sm:$0xff]
    %v936 = vld [vmem:[%s10 + $0x70] sm:$0xff]
    %v937 = vld [vmem:[%s10 + $0x78] sm:$0xff]
    %v938 = vld [vmem:[#allocation17] sm:$0xff]
    %v939 = vld [vmem:[#allocation17 + $0x8] sm:$0xff]
    %940 = vmatpush.msra.mxu0 %v207
    %941 = vmatpush.msra.mxu0 %v206
    %942 = vmatpush.msra.mxu0 %v205
    %943 = vmatpush.msra.mxu0 %v204
    %944 = vmatpush.msra.mxu0 %v203
    %945 = vmatpush.msra.mxu0 %v202
    %946 = vmatpush.msra.mxu0 %v201
    %947 = vmatpush.msra.mxu0 %v200
    %948 = vmatpush.msra.mxu0 %v199
    %949 = vmatpush.msra.mxu0 %v198
    %950 = vmatpush.msra.mxu0 %v197
    %951 = vmatpush.msra.mxu0 %v196
    %952 = vmatpush.msra.mxu0 %v195
    %953 = vmatpush.msra.mxu0 %v194
    %954 = vmatpush.msra.mxu0 %v193
    %955 = vmatpush.msra.mxu0 %v192
    %956 = vmatmul.f32.gmra.mxu0 %v190
    %v957 = vpop.f32.mrf.mxu0
    %v958 = vadd.f32 0.0, %v957
    %959 = vdwg.mxu0
    %960 = vmatpush.msra.mxu0 %v223
    %961 = vmatpush.msra.mxu0 %v222
    %962 = vmatpush.msra.mxu0 %v221
    %963 = vmatpush.msra.mxu0 %v220
    %964 = vmatpush.msra.mxu0 %v219
    %965 = vmatpush.msra.mxu0 %v218
    %966 = vmatpush.msra.mxu0 %v217
    %967 = vmatpush.msra.mxu0 %v216
    %968 = vmatpush.msra.mxu0 %v215
    %969 = vmatpush.msra.mxu0 %v214
    %970 = vmatpush.msra.mxu0 %v213
    %971 = vmatpush.msra.mxu0 %v212
    %972 = vmatpush.msra.mxu0 %v211
    %973 = vmatpush.msra.mxu0 %v210
    %974 = vmatpush.msra.mxu0 %v209
    %975 = vmatpush.msra.mxu0 %v208
    %976 = vmatmul.f32.gmra.mxu0 %v191
    %v977 = vpop.f32.mrf.mxu0
    %v978 = vadd.f32 %v958, %v977
    %979 = vdwg.mxu0
    %vm980 = vcmp.ge.f32.partialorder %v978, 0.0
    %v981 = vmul.f32 %v978, 0.01
    %v982 = vsel %vm980, %v978, %v981
    %v983 = vld [vmem:[#allocation5] sm:$0x1]
    %v984 = vld [vmem:[#allocation5 + $0x2] sm:$0x1]
    %v985 = vld [vmem:[#allocation5 + $0x4] sm:$0x1]
    %v986 = vld [vmem:[#allocation5 + $0x6] sm:$0x1]
    %v987 = vld [vmem:[#allocation5 + $0x8] sm:$0x1]
    %v988 = vld [vmem:[#allocation5 + $0xa] sm:$0x1]
    %v989 = vld [vmem:[#allocation5 + $0xc] sm:$0x1]
    %v990 = vld [vmem:[#allocation5 + $0xe] sm:$0x1]
    %v999 = vrot.slane %v984, 7
    %vm1000 = vcmask 1041409
    %v1001 = vsel %vm1000, %v999, %v983
    %v1002 = vrot.slane %v985, 6
    %vm1003 = vcmask 1042434
    %v1004 = vsel %vm1003, %v1002, %v1001
    %v1005 = vrot.slane %v986, 5
    %vm1006 = vcmask 1043459
    %v1007 = vsel %vm1006, %v1005, %v1004
    %v1008 = vrot.slane %v987, 4
    %vm1009 = vcmask 1044484
    %v1010 = vsel %vm1009, %v1008, %v1007
    %v1011 = vrot.slane %v988, 3
    %vm1012 = vcmask 1045509
    %v1013 = vsel %vm1012, %v1011, %v1010
    %v1014 = vrot.slane %v989, 2
    %vm1015 = vcmask 1046534
    %v1016 = vsel %vm1015, %v1014, %v1013
    %v1017 = vrot.slane %v990, 1
    %vm1018 = vcmask 1047559
    %v1019 = vsel %vm1018, %v1017, %v1016
    %v1021 = vadd.f32 %v982, %v1019
    %v1022 = vmul.f32 %v1021, 100.0
    %vm1023 = vcmask 523264
    %v1025 = vsel %vm1023, %v1022, 0
    %1027 = vmatpush.msra.mxu0 0.0
    %1028 = vmatpush.msra.mxu0 0.0
    %1029 = vmatpush.msra.mxu0 0.0
    %1030 = vmatpush.msra.mxu0 0.0
    %1031 = vmatpush.msra.mxu0 0.0
    %1032 = vmatpush.msra.mxu0 0.0
    %1033 = vmatpush.msra.mxu0 0.0
    %1034 = vmatpush.msra.mxu0 0.0
    %1035 = vmatpush.msra.mxu0 %v871
    %1036 = vmatpush.msra.mxu0 %v870
    %1037 = vmatpush.msra.mxu0 %v869
    %1038 = vmatpush.msra.mxu0 %v868
    %1039 = vmatpush.msra.mxu0 %v867
    %1040 = vmatpush.msra.mxu0 %v866
    %1041 = vmatpush.msra.mxu0 %v865
    %1042 = vmatpush.msra.mxu0 %v864
    %1043 = vmatmul.f32.gmra.mxu0 %v1025
    %v1044 = vpop.f32.mrf.mxu0
    %v1045 = vadd.f32 0.0, %v1044
    %1046 = vdwg.mxu0
    %v1047 = vmax.f32 %v1022, %v1045
    %v1049 = vsel %vm1023, %v1047, 0
    %1051 = vmatpush.msra.mxu0 0.0
    %1052 = vmatpush.msra.mxu0 0.0
    %1053 = vmatpush.msra.mxu0 0.0
    %1054 = vmatpush.msra.mxu0 0.0
    %1055 = vmatpush.msra.mxu0 0.0
    %1056 = vmatpush.msra.mxu0 0.0
    %1057 = vmatpush.msra.mxu0 0.0
    %1058 = vmatpush.msra.mxu0 0.0
    %1059 = vmatpush.msra.mxu0 %v879
    %1060 = vmatpush.msra.mxu0 %v878
    %1061 = vmatpush.msra.mxu0 %v877
    %1062 = vmatpush.msra.mxu0 %v876
    %1063 = vmatpush.msra.mxu0 %v875
    %1064 = vmatpush.msra.mxu0 %v874
    %1065 = vmatpush.msra.mxu0 %v873
    %1066 = vmatpush.msra.mxu0 %v872
    %1067 = vmatmul.f32.gmra.mxu0 %v1049
    %v1068 = vpop.f32.mrf.mxu0
    %v1069 = vadd.f32 0.0, %v1068
    %1070 = vdwg.mxu0
    %v1071 = vmax.f32 %v1047, %v1069
    %v1073 = vsel %vm1023, %v1071, 0
    %1075 = vmatpush.msra.mxu0 0.0
    %1076 = vmatpush.msra.mxu0 0.0
    %1077 = vmatpush.msra.mxu0 0.0
    %1078 = vmatpush.msra.mxu0 0.0
    %1079 = vmatpush.msra.mxu0 0.0
    %1080 = vmatpush.msra.mxu0 0.0
    %1081 = vmatpush.msra.mxu0 0.0
    %1082 = vmatpush.msra.mxu0 0.0
    %1083 = vmatpush.msra.mxu0 %v887
    %1084 = vmatpush.msra.mxu0 %v886
    %1085 = vmatpush.msra.mxu0 %v885
    %1086 = vmatpush.msra.mxu0 %v884
    %1087 = vmatpush.msra.mxu0 %v883
    %1088 = vmatpush.msra.mxu0 %v882
    %1089 = vmatpush.msra.mxu0 %v881
    %1090 = vmatpush.msra.mxu0 %v880
    %1091 = vmatmul.f32.gmra.mxu0 %v1073
    %v1092 = vpop.f32.mrf.mxu0
    %v1093 = vadd.f32 0.0, %v1092
    %1094 = vdwg.mxu0
    %v1095 = vmax.f32 %v1071, %v1093
    %v1096 = vsub.f32 %v1022, %v1095
    %v1097 = vmul.f32 %v1096, 1.442695
    %v1098 = vpow.pop %v1097
    %vm1099 = vcmp.gt.f32.partialorder %v1098, 0.0
    %v1100 = vsel %vm1099, 1.0, 0.0
    %v1102 = vperm.slane %v888, 0
    %v1104 = vmax.f32 %v1100, %v1102
    %v1106 = vsel %vm1023, %v1104, 0
    %1108 = vmatpush.msra.mxu0 0.0
    %1109 = vmatpush.msra.mxu0 0.0
    %1110 = vmatpush.msra.mxu0 0.0
    %1111 = vmatpush.msra.mxu0 0.0
    %1112 = vmatpush.msra.mxu0 0.0
    %1113 = vmatpush.msra.mxu0 0.0
    %1114 = vmatpush.msra.mxu0 0.0
    %1115 = vmatpush.msra.mxu0 0.0
    %1116 = vmatpush.msra.mxu0 %v336
    %1117 = vmatpush.msra.mxu0 %v320
    %1118 = vmatpush.msra.mxu0 %v304
    %1119 = vmatpush.msra.mxu0 %v288
    %1120 = vmatpush.msra.mxu0 %v272
    %1121 = vmatpush.msra.mxu0 %v256
    %1122 = vmatpush.msra.mxu0 %v240
    %1123 = vmatpush.msra.mxu0 %v224
    %1124 = vmatmul.f32.gmra.mxu0 %v1106
    %v1125 = vpop.f32.mrf.mxu0
    %v1126 = vadd.f32 0.0, %v1125
    %1127 = vdwg.mxu0
    %1128 = vmatpush.msra.mxu0 0.0
    %1129 = vmatpush.msra.mxu0 0.0
    %1130 = vmatpush.msra.mxu0 0.0
    %1131 = vmatpush.msra.mxu0 0.0
    %1132 = vmatpush.msra.mxu0 0.0
    %1133 = vmatpush.msra.mxu0 0.0
    %1134 = vmatpush.msra.mxu0 0.0
    %1135 = vmatpush.msra.mxu0 0.0
    %1136 = vmatpush.msra.mxu0 %v337
    %1137 = vmatpush.msra.mxu0 %v321
    %1138 = vmatpush.msra.mxu0 %v305
    %1139 = vmatpush.msra.mxu0 %v289
    %1140 = vmatpush.msra.mxu0 %v273
    %1141 = vmatpush.msra.mxu0 %v257
    %1142 = vmatpush.msra.mxu0 %v241
    %1143 = vmatpush.msra.mxu0 %v225
    %1144 = vmatmul.f32.gmra.mxu0 %v1106
    %v1145 = vpop.f32.mrf.mxu0
    %v1146 = vadd.f32 0.0, %v1145
    %1147 = vdwg.mxu0
    %1148 = vmatpush.msra.mxu0 0.0
    %1149 = vmatpush.msra.mxu0 0.0
    %1150 = vmatpush.msra.mxu0 0.0
    %1151 = vmatpush.msra.mxu0 0.0
    %1152 = vmatpush.msra.mxu0 0.0
    %1153 = vmatpush.msra.mxu0 0.0
    %1154 = vmatpush.msra.mxu0 0.0
    %1155 = vmatpush.msra.mxu0 0.0
    %1156 = vmatpush.msra.mxu0 %v338
    %1157 = vmatpush.msra.mxu0 %v322
    %1158 = vmatpush.msra.mxu0 %v306
    %1159 = vmatpush.msra.mxu0 %v290
    %1160 = vmatpush.msra.mxu0 %v274
    %1161 = vmatpush.msra.mxu0 %v258
    %1162 = vmatpush.msra.mxu0 %v242
    %1163 = vmatpush.msra.mxu0 %v226
    %1164 = vmatmul.f32.gmra.mxu0 %v1106
    %v1165 = vpop.f32.mrf.mxu0
    %v1166 = vadd.f32 0.0, %v1165
    %1167 = vdwg.mxu0
    %1168 = vmatpush.msra.mxu0 0.0
    %1169 = vmatpush.msra.mxu0 0.0
    %1170 = vmatpush.msra.mxu0 0.0
    %1171 = vmatpush.msra.mxu0 0.0
    %1172 = vmatpush.msra.mxu0 0.0
    %1173 = vmatpush.msra.mxu0 0.0
    %1174 = vmatpush.msra.mxu0 0.0
    %1175 = vmatpush.msra.mxu0 0.0
    %1176 = vmatpush.msra.mxu0 %v339
    %1177 = vmatpush.msra.mxu0 %v323
    %1178 = vmatpush.msra.mxu0 %v307
    %1179 = vmatpush.msra.mxu0 %v291
    %1180 = vmatpush.msra.mxu0 %v275
    %1181 = vmatpush.msra.mxu0 %v259
    %1182 = vmatpush.msra.mxu0 %v243
    %1183 = vmatpush.msra.mxu0 %v227
    %1184 = vmatmul.f32.gmra.mxu0 %v1106
    %v1185 = vpop.f32.mrf.mxu0
    %v1186 = vadd.f32 0.0, %v1185
    %1187 = vdwg.mxu0
    %1188 = vmatpush.msra.mxu0 0.0
    %1189 = vmatpush.msra.mxu0 0.0
    %1190 = vmatpush.msra.mxu0 0.0
    %1191 = vmatpush.msra.mxu0 0.0
    %1192 = vmatpush.msra.mxu0 0.0
    %1193 = vmatpush.msra.mxu0 0.0
    %1194 = vmatpush.msra.mxu0 0.0
    %1195 = vmatpush.msra.mxu0 0.0
    %1196 = vmatpush.msra.mxu0 %v340
    %1197 = vmatpush.msra.mxu0 %v324
    %1198 = vmatpush.msra.mxu0 %v308
    %1199 = vmatpush.msra.mxu0 %v292
    %1200 = vmatpush.msra.mxu0 %v276
    %1201 = vmatpush.msra.mxu0 %v260
    %1202 = vmatpush.msra.mxu0 %v244
    %1203 = vmatpush.msra.mxu0 %v228
    %1204 = vmatmul.f32.gmra.mxu0 %v1106
    %v1205 = vpop.f32.mrf.mxu0
    %v1206 = vadd.f32 0.0, %v1205
    %1207 = vdwg.mxu0
    %1208 = vmatpush.msra.mxu0 0.0
    %1209 = vmatpush.msra.mxu0 0.0
    %1210 = vmatpush.msra.mxu0 0.0
    %1211 = vmatpush.msra.mxu0 0.0
    %1212 = vmatpush.msra.mxu0 0.0
    %1213 = vmatpush.msra.mxu0 0.0
    %1214 = vmatpush.msra.mxu0 0.0
    %1215 = vmatpush.msra.mxu0 0.0
    %1216 = vmatpush.msra.mxu0 %v341
    %1217 = vmatpush.msra.mxu0 %v325
    %1218 = vmatpush.msra.mxu0 %v309
    %1219 = vmatpush.msra.mxu0 %v293
    %1220 = vmatpush.msra.mxu0 %v277
    %1221 = vmatpush.msra.mxu0 %v261
    %1222 = vmatpush.msra.mxu0 %v245
    %1223 = vmatpush.msra.mxu0 %v229
    %1224 = vmatmul.f32.gmra.mxu0 %v1106
    %v1225 = vpop.f32.mrf.mxu0
    %v1226 = vadd.f32 0.0, %v1225
    %1227 = vdwg.mxu0
    %1228 = vmatpush.msra.mxu0 0.0
    %1229 = vmatpush.msra.mxu0 0.0
    %1230 = vmatpush.msra.mxu0 0.0
    %1231 = vmatpush.msra.mxu0 0.0
    %1232 = vmatpush.msra.mxu0 0.0
    %1233 = vmatpush.msra.mxu0 0.0
    %1234 = vmatpush.msra.mxu0 0.0
    %1235 = vmatpush.msra.mxu0 0.0
    %1236 = vmatpush.msra.mxu0 %v342
    %1237 = vmatpush.msra.mxu0 %v326
    %1238 = vmatpush.msra.mxu0 %v310
    %1239 = vmatpush.msra.mxu0 %v294
    %1240 = vmatpush.msra.mxu0 %v278
    %1241 = vmatpush.msra.mxu0 %v262
    %1242 = vmatpush.msra.mxu0 %v246
    %1243 = vmatpush.msra.mxu0 %v230
    %1244 = vmatmul.f32.gmra.mxu0 %v1106
    %v1245 = vpop.f32.mrf.mxu0
    %v1246 = vadd.f32 0.0, %v1245
    %1247 = vdwg.mxu0
    %1248 = vmatpush.msra.mxu0 0.0
    %1249 = vmatpush.msra.mxu0 0.0
    %1250 = vmatpush.msra.mxu0 0.0
    %1251 = vmatpush.msra.mxu0 0.0
    %1252 = vmatpush.msra.mxu0 0.0
    %1253 = vmatpush.msra.mxu0 0.0
    %1254 = vmatpush.msra.mxu0 0.0
    %1255 = vmatpush.msra.mxu0 0.0
    %1256 = vmatpush.msra.mxu0 %v343
    %1257 = vmatpush.msra.mxu0 %v327
    %1258 = vmatpush.msra.mxu0 %v311
    %1259 = vmatpush.msra.mxu0 %v295
    %1260 = vmatpush.msra.mxu0 %v279
    %1261 = vmatpush.msra.mxu0 %v263
    %1262 = vmatpush.msra.mxu0 %v247
    %1263 = vmatpush.msra.mxu0 %v231
    %1264 = vmatmul.f32.gmra.mxu0 %v1106
    %v1265 = vpop.f32.mrf.mxu0
    %v1266 = vadd.f32 0.0, %v1265
    %1267 = vdwg.mxu0
    %1268 = vmatpush.msra.mxu0 0.0
    %1269 = vmatpush.msra.mxu0 0.0
    %1270 = vmatpush.msra.mxu0 0.0
    %1271 = vmatpush.msra.mxu0 0.0
    %1272 = vmatpush.msra.mxu0 0.0
    %1273 = vmatpush.msra.mxu0 0.0
    %1274 = vmatpush.msra.mxu0 0.0
    %1275 = vmatpush.msra.mxu0 0.0
    %1276 = vmatpush.msra.mxu0 %v344
    %1277 = vmatpush.msra.mxu0 %v328
    %1278 = vmatpush.msra.mxu0 %v312
    %1279 = vmatpush.msra.mxu0 %v296
    %1280 = vmatpush.msra.mxu0 %v280
    %1281 = vmatpush.msra.mxu0 %v264
    %1282 = vmatpush.msra.mxu0 %v248
    %1283 = vmatpush.msra.mxu0 %v232
    %1284 = vmatmul.f32.gmra.mxu0 %v1106
    %v1285 = vpop.f32.mrf.mxu0
    %v1286 = vadd.f32 0.0, %v1285
    %1287 = vdwg.mxu0
    %1288 = vmatpush.msra.mxu0 0.0
    %1289 = vmatpush.msra.mxu0 0.0
    %1290 = vmatpush.msra.mxu0 0.0
    %1291 = vmatpush.msra.mxu0 0.0
    %1292 = vmatpush.msra.mxu0 0.0
    %1293 = vmatpush.msra.mxu0 0.0
    %1294 = vmatpush.msra.mxu0 0.0
    %1295 = vmatpush.msra.mxu0 0.0
    %1296 = vmatpush.msra.mxu0 %v345
    %1297 = vmatpush.msra.mxu0 %v329
    %1298 = vmatpush.msra.mxu0 %v313
    %1299 = vmatpush.msra.mxu0 %v297
    %1300 = vmatpush.msra.mxu0 %v281
    %1301 = vmatpush.msra.mxu0 %v265
    %1302 = vmatpush.msra.mxu0 %v249
    %1303 = vmatpush.msra.mxu0 %v233
    %1304 = vmatmul.f32.gmra.mxu0 %v1106
    %v1305 = vpop.f32.mrf.mxu0
    %v1306 = vadd.f32 0.0, %v1305
    %1307 = vdwg.mxu0
    %1308 = vmatpush.msra.mxu0 0.0
    %1309 = vmatpush.msra.mxu0 0.0
    %1310 = vmatpush.msra.mxu0 0.0
    %1311 = vmatpush.msra.mxu0 0.0
    %1312 = vmatpush.msra.mxu0 0.0
    %1313 = vmatpush.msra.mxu0 0.0
    %1314 = vmatpush.msra.mxu0 0.0
    %1315 = vmatpush.msra.mxu0 0.0
    %1316 = vmatpush.msra.mxu0 %v346
    %1317 = vmatpush.msra.mxu0 %v330
    %1318 = vmatpush.msra.mxu0 %v314
    %1319 = vmatpush.msra.mxu0 %v298
    %1320 = vmatpush.msra.mxu0 %v282
    %1321 = vmatpush.msra.mxu0 %v266
    %1322 = vmatpush.msra.mxu0 %v250
    %1323 = vmatpush.msra.mxu0 %v234
    %1324 = vmatmul.f32.gmra.mxu0 %v1106
    %v1325 = vpop.f32.mrf.mxu0
    %v1326 = vadd.f32 0.0, %v1325
    %1327 = vdwg.mxu0
    %1328 = vmatpush.msra.mxu0 0.0
    %1329 = vmatpush.msra.mxu0 0.0
    %1330 = vmatpush.msra.mxu0 0.0
    %1331 = vmatpush.msra.mxu0 0.0
    %1332 = vmatpush.msra.mxu0 0.0
    %1333 = vmatpush.msra.mxu0 0.0
    %1334 = vmatpush.msra.mxu0 0.0
    %1335 = vmatpush.msra.mxu0 0.0
    %1336 = vmatpush.msra.mxu0 %v347
    %1337 = vmatpush.msra.mxu0 %v331
    %1338 = vmatpush.msra.mxu0 %v315
    %1339 = vmatpush.msra.mxu0 %v299
    %1340 = vmatpush.msra.mxu0 %v283
    %1341 = vmatpush.msra.mxu0 %v267
    %1342 = vmatpush.msra.mxu0 %v251
    %1343 = vmatpush.msra.mxu0 %v235
    %1344 = vmatmul.f32.gmra.mxu0 %v1106
    %v1345 = vpop.f32.mrf.mxu0
    %v1346 = vadd.f32 0.0, %v1345
    %1347 = vdwg.mxu0
    %1348 = vmatpush.msra.mxu0 0.0
    %1349 = vmatpush.msra.mxu0 0.0
    %1350 = vmatpush.msra.mxu0 0.0
    %1351 = vmatpush.msra.mxu0 0.0
    %1352 = vmatpush.msra.mxu0 0.0
    %1353 = vmatpush.msra.mxu0 0.0
    %1354 = vmatpush.msra.mxu0 0.0
    %1355 = vmatpush.msra.mxu0 0.0
    %1356 = vmatpush.msra.mxu0 %v348
    %1357 = vmatpush.msra.mxu0 %v332
    %1358 = vmatpush.msra.mxu0 %v316
    %1359 = vmatpush.msra.mxu0 %v300
    %1360 = vmatpush.msra.mxu0 %v284
    %1361 = vmatpush.msra.mxu0 %v268
    %1362 = vmatpush.msra.mxu0 %v252
    %1363 = vmatpush.msra.mxu0 %v236
    %1364 = vmatmul.f32.gmra.mxu0 %v1106
    %v1365 = vpop.f32.mrf.mxu0
    %v1366 = vadd.f32 0.0, %v1365
    %1367 = vdwg.mxu0
    %1368 = vmatpush.msra.mxu0 0.0
    %1369 = vmatpush.msra.mxu0 0.0
    %1370 = vmatpush.msra.mxu0 0.0
    %1371 = vmatpush.msra.mxu0 0.0
    %1372 = vmatpush.msra.mxu0 0.0
    %1373 = vmatpush.msra.mxu0 0.0
    %1374 = vmatpush.msra.mxu0 0.0
    %1375 = vmatpush.msra.mxu0 0.0
    %1376 = vmatpush.msra.mxu0 %v349
    %1377 = vmatpush.msra.mxu0 %v333
    %1378 = vmatpush.msra.mxu0 %v317
    %1379 = vmatpush.msra.mxu0 %v301
    %1380 = vmatpush.msra.mxu0 %v285
    %1381 = vmatpush.msra.mxu0 %v269
    %1382 = vmatpush.msra.mxu0 %v253
    %1383 = vmatpush.msra.mxu0 %v237
    %1384 = vmatmul.f32.gmra.mxu0 %v1106
    %v1385 = vpop.f32.mrf.mxu0
    %v1386 = vadd.f32 0.0, %v1385
    %1387 = vdwg.mxu0
    %1388 = vmatpush.msra.mxu0 0.0
    %1389 = vmatpush.msra.mxu0 0.0
    %1390 = vmatpush.msra.mxu0 0.0
    %1391 = vmatpush.msra.mxu0 0.0
    %1392 = vmatpush.msra.mxu0 0.0
    %1393 = vmatpush.msra.mxu0 0.0
    %1394 = vmatpush.msra.mxu0 0.0
    %1395 = vmatpush.msra.mxu0 0.0
    %1396 = vmatpush.msra.mxu0 %v350
    %1397 = vmatpush.msra.mxu0 %v334
    %1398 = vmatpush.msra.mxu0 %v318
    %1399 = vmatpush.msra.mxu0 %v302
    %1400 = vmatpush.msra.mxu0 %v286
    %1401 = vmatpush.msra.mxu0 %v270
    %1402 = vmatpush.msra.mxu0 %v254
    %1403 = vmatpush.msra.mxu0 %v238
    %1404 = vmatmul.f32.gmra.mxu0 %v1106
    %v1405 = vpop.f32.mrf.mxu0
    %v1406 = vadd.f32 0.0, %v1405
    %1407 = vdwg.mxu0
    %1408 = vmatpush.msra.mxu0 0.0
    %1409 = vmatpush.msra.mxu0 0.0
    %1410 = vmatpush.msra.mxu0 0.0
    %1411 = vmatpush.msra.mxu0 0.0
    %1412 = vmatpush.msra.mxu0 0.0
    %1413 = vmatpush.msra.mxu0 0.0
    %1414 = vmatpush.msra.mxu0 0.0
    %1415 = vmatpush.msra.mxu0 0.0
    %1416 = vmatpush.msra.mxu0 %v351
    %1417 = vmatpush.msra.mxu0 %v335
    %1418 = vmatpush.msra.mxu0 %v319
    %1419 = vmatpush.msra.mxu0 %v303
    %1420 = vmatpush.msra.mxu0 %v287
    %1421 = vmatpush.msra.mxu0 %v271
    %1422 = vmatpush.msra.mxu0 %v255
    %1423 = vmatpush.msra.mxu0 %v239
    %1424 = vmatmul.f32.gmra.mxu0 %v1106
    %v1425 = vpop.f32.mrf.mxu0
    %v1426 = vadd.f32 0.0, %v1425
    %1427 = vdwg.mxu0
    %v1428 = vmul.f32 %v1126, %v190
    %v1429 = vmul.f32 %v1146, %v191
    %v1430 = vmul.f32 %v1166, %v190
    %v1431 = vmul.f32 %v1186, %v191
    %v1432 = vmul.f32 %v1206, %v190
    %v1433 = vmul.f32 %v1226, %v191
    %v1434 = vmul.f32 %v1246, %v190
    %v1435 = vmul.f32 %v1266, %v191
    %v1436 = vmul.f32 %v1286, %v190
    %v1437 = vmul.f32 %v1306, %v191
    %v1438 = vmul.f32 %v1326, %v190
    %v1439 = vmul.f32 %v1346, %v191
    %v1440 = vmul.f32 %v1366, %v190
    %v1441 = vmul.f32 %v1386, %v191
    %v1442 = vmul.f32 %v1406, %v190
    %v1443 = vmul.f32 %v1426, %v191
    %1444 = vmatpush.msra.mxu0 %v382
    %1445 = vmatpush.msra.mxu0 %v380
    %1446 = vmatpush.msra.mxu0 %v378
    %1447 = vmatpush.msra.mxu0 %v376
    %1448 = vmatpush.msra.mxu0 %v374
    %1449 = vmatpush.msra.mxu0 %v372
    %1450 = vmatpush.msra.mxu0 %v370
    %1451 = vmatpush.msra.mxu0 %v368
    %1452 = vmatpush.msra.mxu0 %v366
    %1453 = vmatpush.msra.mxu0 %v364
    %1454 = vmatpush.msra.mxu0 %v362
    %1455 = vmatpush.msra.mxu0 %v360
    %1456 = vmatpush.msra.mxu0 %v358
    %1457 = vmatpush.msra.mxu0 %v356
    %1458 = vmatpush.msra.mxu0 %v354
    %1459 = vmatpush.msra.mxu0 %v352
    %1460 = vmatmul.f32.gmra.mxu0 %v1428
    %v1461 = vpop.f32.mrf.mxu0
    %v1462 = vadd.f32 0.0, %v1461
    %1463 = vdwg.mxu0
    %1464 = vmatpush.msra.mxu0 %v414
    %1465 = vmatpush.msra.mxu0 %v412
    %1466 = vmatpush.msra.mxu0 %v410
    %1467 = vmatpush.msra.mxu0 %v408
    %1468 = vmatpush.msra.mxu0 %v406
    %1469 = vmatpush.msra.mxu0 %v404
    %1470 = vmatpush.msra.mxu0 %v402
    %1471 = vmatpush.msra.mxu0 %v400
    %1472 = vmatpush.msra.mxu0 %v398
    %1473 = vmatpush.msra.mxu0 %v396
    %1474 = vmatpush.msra.mxu0 %v394
    %1475 = vmatpush.msra.mxu0 %v392
    %1476 = vmatpush.msra.mxu0 %v390
    %1477 = vmatpush.msra.mxu0 %v388
    %1478 = vmatpush.msra.mxu0 %v386
    %1479 = vmatpush.msra.mxu0 %v384
    %1480 = vmatmul.f32.gmra.mxu0 %v1429
    %v1481 = vpop.f32.mrf.mxu0
    %v1482 = vadd.f32 %v1462, %v1481
    %1483 = vdwg.mxu0
    %1484 = vmatpush.msra.mxu0 %v446
    %1485 = vmatpush.msra.mxu0 %v444
    %1486 = vmatpush.msra.mxu0 %v442
    %1487 = vmatpush.msra.mxu0 %v440
    %1488 = vmatpush.msra.mxu0 %v438
    %1489 = vmatpush.msra.mxu0 %v436
    %1490 = vmatpush.msra.mxu0 %v434
    %1491 = vmatpush.msra.mxu0 %v432
    %1492 = vmatpush.msra.mxu0 %v430
    %1493 = vmatpush.msra.mxu0 %v428
    %1494 = vmatpush.msra.mxu0 %v426
    %1495 = vmatpush.msra.mxu0 %v424
    %1496 = vmatpush.msra.mxu0 %v422
    %1497 = vmatpush.msra.mxu0 %v420
    %1498 = vmatpush.msra.mxu0 %v418
    %1499 = vmatpush.msra.mxu0 %v416
    %1500 = vmatmul.f32.gmra.mxu0 %v1430
    %v1501 = vpop.f32.mrf.mxu0
    %v1502 = vadd.f32 %v1482, %v1501
    %1503 = vdwg.mxu0
    %1504 = vmatpush.msra.mxu0 %v478
    %1505 = vmatpush.msra.mxu0 %v476
    %1506 = vmatpush.msra.mxu0 %v474
    %1507 = vmatpush.msra.mxu0 %v472
    %1508 = vmatpush.msra.mxu0 %v470
    %1509 = vmatpush.msra.mxu0 %v468
    %1510 = vmatpush.msra.mxu0 %v466
    %1511 = vmatpush.msra.mxu0 %v464
    %1512 = vmatpush.msra.mxu0 %v462
    %1513 = vmatpush.msra.mxu0 %v460
    %1514 = vmatpush.msra.mxu0 %v458
    %1515 = vmatpush.msra.mxu0 %v456
    %1516 = vmatpush.msra.mxu0 %v454
    %1517 = vmatpush.msra.mxu0 %v452
    %1518 = vmatpush.msra.mxu0 %v450
    %1519 = vmatpush.msra.mxu0 %v448
    %1520 = vmatmul.f32.gmra.mxu0 %v1431
    %v1521 = vpop.f32.mrf.mxu0
    %v1522 = vadd.f32 %v1502, %v1521
    %1523 = vdwg.mxu0
    %1524 = vmatpush.msra.mxu0 %v510
    %1525 = vmatpush.msra.mxu0 %v508
    %1526 = vmatpush.msra.mxu0 %v506
    %1527 = vmatpush.msra.mxu0 %v504
    %1528 = vmatpush.msra.mxu0 %v502
    %1529 = vmatpush.msra.mxu0 %v500
    %1530 = vmatpush.msra.mxu0 %v498
    %1531 = vmatpush.msra.mxu0 %v496
    %1532 = vmatpush.msra.mxu0 %v494
    %1533 = vmatpush.msra.mxu0 %v492
    %1534 = vmatpush.msra.mxu0 %v490
    %1535 = vmatpush.msra.mxu0 %v488
    %1536 = vmatpush.msra.mxu0 %v486
    %1537 = vmatpush.msra.mxu0 %v484
    %1538 = vmatpush.msra.mxu0 %v482
    %1539 = vmatpush.msra.mxu0 %v480
    %1540 = vmatmul.f32.gmra.mxu0 %v1432
    %v1541 = vpop.f32.mrf.mxu0
    %v1542 = vadd.f32 %v1522, %v1541
    %1543 = vdwg.mxu0
    %1544 = vmatpush.msra.mxu0 %v542
    %1545 = vmatpush.msra.mxu0 %v540
    %1546 = vmatpush.msra.mxu0 %v538
    %1547 = vmatpush.msra.mxu0 %v536
    %1548 = vmatpush.msra.mxu0 %v534
    %1549 = vmatpush.msra.mxu0 %v532
    %1550 = vmatpush.msra.mxu0 %v530
    %1551 = vmatpush.msra.mxu0 %v528
    %1552 = vmatpush.msra.mxu0 %v526
    %1553 = vmatpush.msra.mxu0 %v524
    %1554 = vmatpush.msra.mxu0 %v522
    %1555 = vmatpush.msra.mxu0 %v520
    %1556 = vmatpush.msra.mxu0 %v518
    %1557 = vmatpush.msra.mxu0 %v516
    %1558 = vmatpush.msra.mxu0 %v514
    %1559 = vmatpush.msra.mxu0 %v512
    %1560 = vmatmul.f32.gmra.mxu0 %v1433
    %v1561 = vpop.f32.mrf.mxu0
    %v1562 = vadd.f32 %v1542, %v1561
    %1563 = vdwg.mxu0
    %1564 = vmatpush.msra.mxu0 %v574
    %1565 = vmatpush.msra.mxu0 %v572
    %1566 = vmatpush.msra.mxu0 %v570
    %1567 = vmatpush.msra.mxu0 %v568
    %1568 = vmatpush.msra.mxu0 %v566
    %1569 = vmatpush.msra.mxu0 %v564
    %1570 = vmatpush.msra.mxu0 %v562
    %1571 = vmatpush.msra.mxu0 %v560
    %1572 = vmatpush.msra.mxu0 %v558
    %1573 = vmatpush.msra.mxu0 %v556
    %1574 = vmatpush.msra.mxu0 %v554
    %1575 = vmatpush.msra.mxu0 %v552
    %1576 = vmatpush.msra.mxu0 %v550
    %1577 = vmatpush.msra.mxu0 %v548
    %1578 = vmatpush.msra.mxu0 %v546
    %1579 = vmatpush.msra.mxu0 %v544
    %1580 = vmatmul.f32.gmra.mxu0 %v1434
    %v1581 = vpop.f32.mrf.mxu0
    %v1582 = vadd.f32 %v1562, %v1581
    %1583 = vdwg.mxu0
    %1584 = vmatpush.msra.mxu0 %v606
    %1585 = vmatpush.msra.mxu0 %v604
    %1586 = vmatpush.msra.mxu0 %v602
    %1587 = vmatpush.msra.mxu0 %v600
    %1588 = vmatpush.msra.mxu0 %v598
    %1589 = vmatpush.msra.mxu0 %v596
    %1590 = vmatpush.msra.mxu0 %v594
    %1591 = vmatpush.msra.mxu0 %v592
    %1592 = vmatpush.msra.mxu0 %v590
    %1593 = vmatpush.msra.mxu0 %v588
    %1594 = vmatpush.msra.mxu0 %v586
    %1595 = vmatpush.msra.mxu0 %v584
    %1596 = vmatpush.msra.mxu0 %v582
    %1597 = vmatpush.msra.mxu0 %v580
    %1598 = vmatpush.msra.mxu0 %v578
    %1599 = vmatpush.msra.mxu0 %v576
    %1600 = vmatmul.f32.gmra.mxu0 %v1435
    %v1601 = vpop.f32.mrf.mxu0
    %v1602 = vadd.f32 %v1582, %v1601
    %1603 = vdwg.mxu0
    %1604 = vmatpush.msra.mxu0 %v638
    %1605 = vmatpush.msra.mxu0 %v636
    %1606 = vmatpush.msra.mxu0 %v634
    %1607 = vmatpush.msra.mxu0 %v632
    %1608 = vmatpush.msra.mxu0 %v630
    %1609 = vmatpush.msra.mxu0 %v628
    %1610 = vmatpush.msra.mxu0 %v626
    %1611 = vmatpush.msra.mxu0 %v624
    %1612 = vmatpush.msra.mxu0 %v622
    %1613 = vmatpush.msra.mxu0 %v620
    %1614 = vmatpush.msra.mxu0 %v618
    %1615 = vmatpush.msra.mxu0 %v616
    %1616 = vmatpush.msra.mxu0 %v614
    %1617 = vmatpush.msra.mxu0 %v612
    %1618 = vmatpush.msra.mxu0 %v610
    %1619 = vmatpush.msra.mxu0 %v608
    %1620 = vmatmul.f32.gmra.mxu0 %v1436
    %v1621 = vpop.f32.mrf.mxu0
    %v1622 = vadd.f32 %v1602, %v1621
    %1623 = vdwg.mxu0
    %1624 = vmatpush.msra.mxu0 %v670
    %1625 = vmatpush.msra.mxu0 %v668
    %1626 = vmatpush.msra.mxu0 %v666
    %1627 = vmatpush.msra.mxu0 %v664
    %1628 = vmatpush.msra.mxu0 %v662
    %1629 = vmatpush.msra.mxu0 %v660
    %1630 = vmatpush.msra.mxu0 %v658
    %1631 = vmatpush.msra.mxu0 %v656
    %1632 = vmatpush.msra.mxu0 %v654
    %1633 = vmatpush.msra.mxu0 %v652
    %1634 = vmatpush.msra.mxu0 %v650
    %1635 = vmatpush.msra.mxu0 %v648
    %1636 = vmatpush.msra.mxu0 %v646
    %1637 = vmatpush.msra.mxu0 %v644
    %1638 = vmatpush.msra.mxu0 %v642
    %1639 = vmatpush.msra.mxu0 %v640
    %1640 = vmatmul.f32.gmra.mxu0 %v1437
    %v1641 = vpop.f32.mrf.mxu0
    %v1642 = vadd.f32 %v1622, %v1641
    %1643 = vdwg.mxu0
    %1644 = vmatpush.msra.mxu0 %v702
    %1645 = vmatpush.msra.mxu0 %v700
    %1646 = vmatpush.msra.mxu0 %v698
    %1647 = vmatpush.msra.mxu0 %v696
    %1648 = vmatpush.msra.mxu0 %v694
    %1649 = vmatpush.msra.mxu0 %v692
    %1650 = vmatpush.msra.mxu0 %v690
    %1651 = vmatpush.msra.mxu0 %v688
    %1652 = vmatpush.msra.mxu0 %v686
    %1653 = vmatpush.msra.mxu0 %v684
    %1654 = vmatpush.msra.mxu0 %v682
    %1655 = vmatpush.msra.mxu0 %v680
    %1656 = vmatpush.msra.mxu0 %v678
    %1657 = vmatpush.msra.mxu0 %v676
    %1658 = vmatpush.msra.mxu0 %v674
    %1659 = vmatpush.msra.mxu0 %v672
    %1660 = vmatmul.f32.gmra.mxu0 %v1438
    %v1661 = vpop.f32.mrf.mxu0
    %v1662 = vadd.f32 %v1642, %v1661
    %1663 = vdwg.mxu0
    %1664 = vmatpush.msra.mxu0 %v734
    %1665 = vmatpush.msra.mxu0 %v732
    %1666 = vmatpush.msra.mxu0 %v730
    %1667 = vmatpush.msra.mxu0 %v728
    %1668 = vmatpush.msra.mxu0 %v726
    %1669 = vmatpush.msra.mxu0 %v724
    %1670 = vmatpush.msra.mxu0 %v722
    %1671 = vmatpush.msra.mxu0 %v720
    %1672 = vmatpush.msra.mxu0 %v718
    %1673 = vmatpush.msra.mxu0 %v716
    %1674 = vmatpush.msra.mxu0 %v714
    %1675 = vmatpush.msra.mxu0 %v712
    %1676 = vmatpush.msra.mxu0 %v710
    %1677 = vmatpush.msra.mxu0 %v708
    %1678 = vmatpush.msra.mxu0 %v706
    %1679 = vmatpush.msra.mxu0 %v704
    %1680 = vmatmul.f32.gmra.mxu0 %v1439
    %v1681 = vpop.f32.mrf.mxu0
    %v1682 = vadd.f32 %v1662, %v1681
    %1683 = vdwg.mxu0
    %1684 = vmatpush.msra.mxu0 %v766
    %1685 = vmatpush.msra.mxu0 %v764
    %1686 = vmatpush.msra.mxu0 %v762
    %1687 = vmatpush.msra.mxu0 %v760
    %1688 = vmatpush.msra.mxu0 %v758
    %1689 = vmatpush.msra.mxu0 %v756
    %1690 = vmatpush.msra.mxu0 %v754
    %1691 = vmatpush.msra.mxu0 %v752
    %1692 = vmatpush.msra.mxu0 %v750
    %1693 = vmatpush.msra.mxu0 %v748
    %1694 = vmatpush.msra.mxu0 %v746
    %1695 = vmatpush.msra.mxu0 %v744
    %1696 = vmatpush.msra.mxu0 %v742
    %1697 = vmatpush.msra.mxu0 %v740
    %1698 = vmatpush.msra.mxu0 %v738
    %1699 = vmatpush.msra.mxu0 %v736
    %1700 = vmatmul.f32.gmra.mxu0 %v1440
    %v1701 = vpop.f32.mrf.mxu0
    %v1702 = vadd.f32 %v1682, %v1701
    %1703 = vdwg.mxu0
    %1704 = vmatpush.msra.mxu0 %v798
    %1705 = vmatpush.msra.mxu0 %v796
    %1706 = vmatpush.msra.mxu0 %v794
    %1707 = vmatpush.msra.mxu0 %v792
    %1708 = vmatpush.msra.mxu0 %v790
    %1709 = vmatpush.msra.mxu0 %v788
    %1710 = vmatpush.msra.mxu0 %v786
    %1711 = vmatpush.msra.mxu0 %v784
    %1712 = vmatpush.msra.mxu0 %v782
    %1713 = vmatpush.msra.mxu0 %v780
    %1714 = vmatpush.msra.mxu0 %v778
    %1715 = vmatpush.msra.mxu0 %v776
    %1716 = vmatpush.msra.mxu0 %v774
    %1717 = vmatpush.msra.mxu0 %v772
    %1718 = vmatpush.msra.mxu0 %v770
    %1719 = vmatpush.msra.mxu0 %v768
    %1720 = vmatmul.f32.gmra.mxu0 %v1441
    %v1721 = vpop.f32.mrf.mxu0
    %v1722 = vadd.f32 %v1702, %v1721
    %1723 = vdwg.mxu0
    %1724 = vmatpush.msra.mxu0 %v830
    %1725 = vmatpush.msra.mxu0 %v828
    %1726 = vmatpush.msra.mxu0 %v826
    %1727 = vmatpush.msra.mxu0 %v824
    %1728 = vmatpush.msra.mxu0 %v822
    %1729 = vmatpush.msra.mxu0 %v820
    %1730 = vmatpush.msra.mxu0 %v818
    %1731 = vmatpush.msra.mxu0 %v816
    %1732 = vmatpush.msra.mxu0 %v814
    %1733 = vmatpush.msra.mxu0 %v812
    %1734 = vmatpush.msra.mxu0 %v810
    %1735 = vmatpush.msra.mxu0 %v808
    %1736 = vmatpush.msra.mxu0 %v806
    %1737 = vmatpush.msra.mxu0 %v804
    %1738 = vmatpush.msra.mxu0 %v802
    %1739 = vmatpush.msra.mxu0 %v800
    %1740 = vmatmul.f32.gmra.mxu0 %v1442
    %v1741 = vpop.f32.mrf.mxu0
    %v1742 = vadd.f32 %v1722, %v1741
    %1743 = vdwg.mxu0
    %1744 = vmatpush.msra.mxu0 %v862
    %1745 = vmatpush.msra.mxu0 %v860
    %1746 = vmatpush.msra.mxu0 %v858
    %1747 = vmatpush.msra.mxu0 %v856
    %1748 = vmatpush.msra.mxu0 %v854
    %1749 = vmatpush.msra.mxu0 %v852
    %1750 = vmatpush.msra.mxu0 %v850
    %1751 = vmatpush.msra.mxu0 %v848
    %1752 = vmatpush.msra.mxu0 %v846
    %1753 = vmatpush.msra.mxu0 %v844
    %1754 = vmatpush.msra.mxu0 %v842
    %1755 = vmatpush.msra.mxu0 %v840
    %1756 = vmatpush.msra.mxu0 %v838
    %1757 = vmatpush.msra.mxu0 %v836
    %1758 = vmatpush.msra.mxu0 %v834
    %1759 = vmatpush.msra.mxu0 %v832
    %1760 = vmatmul.f32.gmra.mxu0 %v1443
    %v1761 = vpop.f32.mrf.mxu0
    %v1762 = vadd.f32 %v1742, %v1761
    %1763 = vdwg.mxu0
    %1764 = vmatpush.msra.mxu0 %v383
    %1765 = vmatpush.msra.mxu0 %v381
    %1766 = vmatpush.msra.mxu0 %v379
    %1767 = vmatpush.msra.mxu0 %v377
    %1768 = vmatpush.msra.mxu0 %v375
    %1769 = vmatpush.msra.mxu0 %v373
    %1770 = vmatpush.msra.mxu0 %v371
    %1771 = vmatpush.msra.mxu0 %v369
    %1772 = vmatpush.msra.mxu0 %v367
    %1773 = vmatpush.msra.mxu0 %v365
    %1774 = vmatpush.msra.mxu0 %v363
    %1775 = vmatpush.msra.mxu0 %v361
    %1776 = vmatpush.msra.mxu0 %v359
    %1777 = vmatpush.msra.mxu0 %v357
    %1778 = vmatpush.msra.mxu0 %v355
    %1779 = vmatpush.msra.mxu0 %v353
    %1780 = vmatmul.f32.gmra.mxu0 %v1428
    %v1781 = vpop.f32.mrf.mxu0
    %v1782 = vadd.f32 0.0, %v1781
    %1783 = vdwg.mxu0
    %1784 = vmatpush.msra.mxu0 %v415
    %1785 = vmatpush.msra.mxu0 %v413
    %1786 = vmatpush.msra.mxu0 %v411
    %1787 = vmatpush.msra.mxu0 %v409
    %1788 = vmatpush.msra.mxu0 %v407
    %1789 = vmatpush.msra.mxu0 %v405
    %1790 = vmatpush.msra.mxu0 %v403
    %1791 = vmatpush.msra.mxu0 %v401
    %1792 = vmatpush.msra.mxu0 %v399
    %1793 = vmatpush.msra.mxu0 %v397
    %1794 = vmatpush.msra.mxu0 %v395
    %1795 = vmatpush.msra.mxu0 %v393
    %1796 = vmatpush.msra.mxu0 %v391
    %1797 = vmatpush.msra.mxu0 %v389
    %1798 = vmatpush.msra.mxu0 %v387
    %1799 = vmatpush.msra.mxu0 %v385
    %1800 = vmatmul.f32.gmra.mxu0 %v1429
    %v1801 = vpop.f32.mrf.mxu0
    %v1802 = vadd.f32 %v1782, %v1801
    %1803 = vdwg.mxu0
    %1804 = vmatpush.msra.mxu0 %v447
    %1805 = vmatpush.msra.mxu0 %v445
    %1806 = vmatpush.msra.mxu0 %v443
    %1807 = vmatpush.msra.mxu0 %v441
    %1808 = vmatpush.msra.mxu0 %v439
    %1809 = vmatpush.msra.mxu0 %v437
    %1810 = vmatpush.msra.mxu0 %v435
    %1811 = vmatpush.msra.mxu0 %v433
    %1812 = vmatpush.msra.mxu0 %v431
    %1813 = vmatpush.msra.mxu0 %v429
    %1814 = vmatpush.msra.mxu0 %v427
    %1815 = vmatpush.msra.mxu0 %v425
    %1816 = vmatpush.msra.mxu0 %v423
    %1817 = vmatpush.msra.mxu0 %v421
    %1818 = vmatpush.msra.mxu0 %v419
    %1819 = vmatpush.msra.mxu0 %v417
    %1820 = vmatmul.f32.gmra.mxu0 %v1430
    %v1821 = vpop.f32.mrf.mxu0
    %v1822 = vadd.f32 %v1802, %v1821
    %1823 = vdwg.mxu0
    %1824 = vmatpush.msra.mxu0 %v479
    %1825 = vmatpush.msra.mxu0 %v477
    %1826 = vmatpush.msra.mxu0 %v475
    %1827 = vmatpush.msra.mxu0 %v473
    %1828 = vmatpush.msra.mxu0 %v471
    %1829 = vmatpush.msra.mxu0 %v469
    %1830 = vmatpush.msra.mxu0 %v467
    %1831 = vmatpush.msra.mxu0 %v465
    %1832 = vmatpush.msra.mxu0 %v463
    %1833 = vmatpush.msra.mxu0 %v461
    %1834 = vmatpush.msra.mxu0 %v459
    %1835 = vmatpush.msra.mxu0 %v457
    %1836 = vmatpush.msra.mxu0 %v455
    %1837 = vmatpush.msra.mxu0 %v453
    %1838 = vmatpush.msra.mxu0 %v451
    %1839 = vmatpush.msra.mxu0 %v449
    %1840 = vmatmul.f32.gmra.mxu0 %v1431
    %v1841 = vpop.f32.mrf.mxu0
    %v1842 = vadd.f32 %v1822, %v1841
    %1843 = vdwg.mxu0
    %1844 = vmatpush.msra.mxu0 %v511
    %1845 = vmatpush.msra.mxu0 %v509
    %1846 = vmatpush.msra.mxu0 %v507
    %1847 = vmatpush.msra.mxu0 %v505
    %1848 = vmatpush.msra.mxu0 %v503
    %1849 = vmatpush.msra.mxu0 %v501
    %1850 = vmatpush.msra.mxu0 %v499
    %1851 = vmatpush.msra.mxu0 %v497
    %1852 = vmatpush.msra.mxu0 %v495
    %1853 = vmatpush.msra.mxu0 %v493
    %1854 = vmatpush.msra.mxu0 %v491
    %1855 = vmatpush.msra.mxu0 %v489
    %1856 = vmatpush.msra.mxu0 %v487
    %1857 = vmatpush.msra.mxu0 %v485
    %1858 = vmatpush.msra.mxu0 %v483
    %1859 = vmatpush.msra.mxu0 %v481
    %1860 = vmatmul.f32.gmra.mxu0 %v1432
    %v1861 = vpop.f32.mrf.mxu0
    %v1862 = vadd.f32 %v1842, %v1861
    %1863 = vdwg.mxu0
    %1864 = vmatpush.msra.mxu0 %v543
    %1865 = vmatpush.msra.mxu0 %v541
    %1866 = vmatpush.msra.mxu0 %v539
    %1867 = vmatpush.msra.mxu0 %v537
    %1868 = vmatpush.msra.mxu0 %v535
    %1869 = vmatpush.msra.mxu0 %v533
    %1870 = vmatpush.msra.mxu0 %v531
    %1871 = vmatpush.msra.mxu0 %v529
    %1872 = vmatpush.msra.mxu0 %v527
    %1873 = vmatpush.msra.mxu0 %v525
    %1874 = vmatpush.msra.mxu0 %v523
    %1875 = vmatpush.msra.mxu0 %v521
    %1876 = vmatpush.msra.mxu0 %v519
    %1877 = vmatpush.msra.mxu0 %v517
    %1878 = vmatpush.msra.mxu0 %v515
    %1879 = vmatpush.msra.mxu0 %v513
    %1880 = vmatmul.f32.gmra.mxu0 %v1433
    %v1881 = vpop.f32.mrf.mxu0
    %v1882 = vadd.f32 %v1862, %v1881
    %1883 = vdwg.mxu0
    %1884 = vmatpush.msra.mxu0 %v575
    %1885 = vmatpush.msra.mxu0 %v573
    %1886 = vmatpush.msra.mxu0 %v571
    %1887 = vmatpush.msra.mxu0 %v569
    %1888 = vmatpush.msra.mxu0 %v567
    %1889 = vmatpush.msra.mxu0 %v565
    %1890 = vmatpush.msra.mxu0 %v563
    %1891 = vmatpush.msra.mxu0 %v561
    %1892 = vmatpush.msra.mxu0 %v559
    %1893 = vmatpush.msra.mxu0 %v557
    %1894 = vmatpush.msra.mxu0 %v555
    %1895 = vmatpush.msra.mxu0 %v553
    %1896 = vmatpush.msra.mxu0 %v551
    %1897 = vmatpush.msra.mxu0 %v549
    %1898 = vmatpush.msra.mxu0 %v547
    %1899 = vmatpush.msra.mxu0 %v545
    %1900 = vmatmul.f32.gmra.mxu0 %v1434
    %v1901 = vpop.f32.mrf.mxu0
    %v1902 = vadd.f32 %v1882, %v1901
    %1903 = vdwg.mxu0
    %1904 = vmatpush.msra.mxu0 %v607
    %1905 = vmatpush.msra.mxu0 %v605
    %1906 = vmatpush.msra.mxu0 %v603
    %1907 = vmatpush.msra.mxu0 %v601
    %1908 = vmatpush.msra.mxu0 %v599
    %1909 = vmatpush.msra.mxu0 %v597
    %1910 = vmatpush.msra.mxu0 %v595
    %1911 = vmatpush.msra.mxu0 %v593
    %1912 = vmatpush.msra.mxu0 %v591
    %1913 = vmatpush.msra.mxu0 %v589
    %1914 = vmatpush.msra.mxu0 %v587
    %1915 = vmatpush.msra.mxu0 %v585
    %1916 = vmatpush.msra.mxu0 %v583
    %1917 = vmatpush.msra.mxu0 %v581
    %1918 = vmatpush.msra.mxu0 %v579
    %1919 = vmatpush.msra.mxu0 %v577
    %1920 = vmatmul.f32.gmra.mxu0 %v1435
    %v1921 = vpop.f32.mrf.mxu0
    %v1922 = vadd.f32 %v1902, %v1921
    %1923 = vdwg.mxu0
    %1924 = vmatpush.msra.mxu0 %v639
    %1925 = vmatpush.msra.mxu0 %v637
    %1926 = vmatpush.msra.mxu0 %v635
    %1927 = vmatpush.msra.mxu0 %v633
    %1928 = vmatpush.msra.mxu0 %v631
    %1929 = vmatpush.msra.mxu0 %v629
    %1930 = vmatpush.msra.mxu0 %v627
    %1931 = vmatpush.msra.mxu0 %v625
    %1932 = vmatpush.msra.mxu0 %v623
    %1933 = vmatpush.msra.mxu0 %v621
    %1934 = vmatpush.msra.mxu0 %v619
    %1935 = vmatpush.msra.mxu0 %v617
    %1936 = vmatpush.msra.mxu0 %v615
    %1937 = vmatpush.msra.mxu0 %v613
    %1938 = vmatpush.msra.mxu0 %v611
    %1939 = vmatpush.msra.mxu0 %v609
    %1940 = vmatmul.f32.gmra.mxu0 %v1436
    %v1941 = vpop.f32.mrf.mxu0
    %v1942 = vadd.f32 %v1922, %v1941
    %1943 = vdwg.mxu0
    %1944 = vmatpush.msra.mxu0 %v671
    %1945 = vmatpush.msra.mxu0 %v669
    %1946 = vmatpush.msra.mxu0 %v667
    %1947 = vmatpush.msra.mxu0 %v665
    %1948 = vmatpush.msra.mxu0 %v663
    %1949 = vmatpush.msra.mxu0 %v661
    %1950 = vmatpush.msra.mxu0 %v659
    %1951 = vmatpush.msra.mxu0 %v657
    %1952 = vmatpush.msra.mxu0 %v655
    %1953 = vmatpush.msra.mxu0 %v653
    %1954 = vmatpush.msra.mxu0 %v651
    %1955 = vmatpush.msra.mxu0 %v649
    %1956 = vmatpush.msra.mxu0 %v647
    %1957 = vmatpush.msra.mxu0 %v645
    %1958 = vmatpush.msra.mxu0 %v643
    %1959 = vmatpush.msra.mxu0 %v641
    %1960 = vmatmul.f32.gmra.mxu0 %v1437
    %v1961 = vpop.f32.mrf.mxu0
    %v1962 = vadd.f32 %v1942, %v1961
    %1963 = vdwg.mxu0
    %1964 = vmatpush.msra.mxu0 %v703
    %1965 = vmatpush.msra.mxu0 %v701
    %1966 = vmatpush.msra.mxu0 %v699
    %1967 = vmatpush.msra.mxu0 %v697
    %1968 = vmatpush.msra.mxu0 %v695
    %1969 = vmatpush.msra.mxu0 %v693
    %1970 = vmatpush.msra.mxu0 %v691
    %1971 = vmatpush.msra.mxu0 %v689
    %1972 = vmatpush.msra.mxu0 %v687
    %1973 = vmatpush.msra.mxu0 %v685
    %1974 = vmatpush.msra.mxu0 %v683
    %1975 = vmatpush.msra.mxu0 %v681
    %1976 = vmatpush.msra.mxu0 %v679
    %1977 = vmatpush.msra.mxu0 %v677
    %1978 = vmatpush.msra.mxu0 %v675
    %1979 = vmatpush.msra.mxu0 %v673
    %1980 = vmatmul.f32.gmra.mxu0 %v1438
    %v1981 = vpop.f32.mrf.mxu0
    %v1982 = vadd.f32 %v1962, %v1981
    %1983 = vdwg.mxu0
    %1984 = vmatpush.msra.mxu0 %v735
    %1985 = vmatpush.msra.mxu0 %v733
    %1986 = vmatpush.msra.mxu0 %v731
    %1987 = vmatpush.msra.mxu0 %v729
    %1988 = vmatpush.msra.mxu0 %v727
    %1989 = vmatpush.msra.mxu0 %v725
    %1990 = vmatpush.msra.mxu0 %v723
    %1991 = vmatpush.msra.mxu0 %v721
    %1992 = vmatpush.msra.mxu0 %v719
    %1993 = vmatpush.msra.mxu0 %v717
    %1994 = vmatpush.msra.mxu0 %v715
    %1995 = vmatpush.msra.mxu0 %v713
    %1996 = vmatpush.msra.mxu0 %v711
    %1997 = vmatpush.msra.mxu0 %v709
    %1998 = vmatpush.msra.mxu0 %v707
    %1999 = vmatpush.msra.mxu0 %v705
    %2000 = vmatmul.f32.gmra.mxu0 %v1439
    %v2001 = vpop.f32.mrf.mxu0
    %v2002 = vadd.f32 %v1982, %v2001
    %2003 = vdwg.mxu0
    %2004 = vmatpush.msra.mxu0 %v767
    %2005 = vmatpush.msra.mxu0 %v765
    %2006 = vmatpush.msra.mxu0 %v763
    %2007 = vmatpush.msra.mxu0 %v761
    %2008 = vmatpush.msra.mxu0 %v759
    %2009 = vmatpush.msra.mxu0 %v757
    %2010 = vmatpush.msra.mxu0 %v755
    %2011 = vmatpush.msra.mxu0 %v753
    %2012 = vmatpush.msra.mxu0 %v751
    %2013 = vmatpush.msra.mxu0 %v749
    %2014 = vmatpush.msra.mxu0 %v747
    %2015 = vmatpush.msra.mxu0 %v745
    %2016 = vmatpush.msra.mxu0 %v743
    %2017 = vmatpush.msra.mxu0 %v741
    %2018 = vmatpush.msra.mxu0 %v739
    %2019 = vmatpush.msra.mxu0 %v737
    %2020 = vmatmul.f32.gmra.mxu0 %v1440
    %v2021 = vpop.f32.mrf.mxu0
    %v2022 = vadd.f32 %v2002, %v2021
    %2023 = vdwg.mxu0
    %2024 = vmatpush.msra.mxu0 %v799
    %2025 = vmatpush.msra.mxu0 %v797
    %2026 = vmatpush.msra.mxu0 %v795
    %2027 = vmatpush.msra.mxu0 %v793
    %2028 = vmatpush.msra.mxu0 %v791
    %2029 = vmatpush.msra.mxu0 %v789
    %2030 = vmatpush.msra.mxu0 %v787
    %2031 = vmatpush.msra.mxu0 %v785
    %2032 = vmatpush.msra.mxu0 %v783
    %2033 = vmatpush.msra.mxu0 %v781
    %2034 = vmatpush.msra.mxu0 %v779
    %2035 = vmatpush.msra.mxu0 %v777
    %2036 = vmatpush.msra.mxu0 %v775
    %2037 = vmatpush.msra.mxu0 %v773
    %2038 = vmatpush.msra.mxu0 %v771
    %2039 = vmatpush.msra.mxu0 %v769
    %2040 = vmatmul.f32.gmra.mxu0 %v1441
    %v2041 = vpop.f32.mrf.mxu0
    %v2042 = vadd.f32 %v2022, %v2041
    %2043 = vdwg.mxu0
    %2044 = vmatpush.msra.mxu0 %v831
    %2045 = vmatpush.msra.mxu0 %v829
    %2046 = vmatpush.msra.mxu0 %v827
    %2047 = vmatpush.msra.mxu0 %v825
    %2048 = vmatpush.msra.mxu0 %v823
    %2049 = vmatpush.msra.mxu0 %v821
    %2050 = vmatpush.msra.mxu0 %v819
    %2051 = vmatpush.msra.mxu0 %v817
    %2052 = vmatpush.msra.mxu0 %v815
    %2053 = vmatpush.msra.mxu0 %v813
    %2054 = vmatpush.msra.mxu0 %v811
    %2055 = vmatpush.msra.mxu0 %v809
    %2056 = vmatpush.msra.mxu0 %v807
    %2057 = vmatpush.msra.mxu0 %v805
    %2058 = vmatpush.msra.mxu0 %v803
    %2059 = vmatpush.msra.mxu0 %v801
    %2060 = vmatmul.f32.gmra.mxu0 %v1442
    %v2061 = vpop.f32.mrf.mxu0
    %v2062 = vadd.f32 %v2042, %v2061
    %2063 = vdwg.mxu0
    %2064 = vmatpush.msra.mxu0 %v863
    %2065 = vmatpush.msra.mxu0 %v861
    %2066 = vmatpush.msra.mxu0 %v859
    %2067 = vmatpush.msra.mxu0 %v857
    %2068 = vmatpush.msra.mxu0 %v855
    %2069 = vmatpush.msra.mxu0 %v853
    %2070 = vmatpush.msra.mxu0 %v851
    %2071 = vmatpush.msra.mxu0 %v849
    %2072 = vmatpush.msra.mxu0 %v847
    %2073 = vmatpush.msra.mxu0 %v845
    %2074 = vmatpush.msra.mxu0 %v843
    %2075 = vmatpush.msra.mxu0 %v841
    %2076 = vmatpush.msra.mxu0 %v839
    %2077 = vmatpush.msra.mxu0 %v837
    %2078 = vmatpush.msra.mxu0 %v835
    %2079 = vmatpush.msra.mxu0 %v833
    %2080 = vmatmul.f32.gmra.mxu0 %v1443
    %v2081 = vpop.f32.mrf.mxu0
    %v2082 = vadd.f32 %v2062, %v2081
    %2083 = vdwg.mxu0
    %v2085 = vperm.slane %v921, 0
    %2087 = vmatpush.msra.mxu0 %v904
    %2088 = vmatpush.msra.mxu0 %v903
    %2089 = vmatpush.msra.mxu0 %v902
    %2090 = vmatpush.msra.mxu0 %v901
    %2091 = vmatpush.msra.mxu0 %v900
    %2092 = vmatpush.msra.mxu0 %v899
    %2093 = vmatpush.msra.mxu0 %v898
    %2094 = vmatpush.msra.mxu0 %v897
    %2095 = vmatpush.msra.mxu0 %v896
    %2096 = vmatpush.msra.mxu0 %v895
    %2097 = vmatpush.msra.mxu0 %v894
    %2098 = vmatpush.msra.mxu0 %v893
    %2099 = vmatpush.msra.mxu0 %v892
    %2100 = vmatpush.msra.mxu0 %v891
    %2101 = vmatpush.msra.mxu0 %v890
    %2102 = vmatpush.msra.mxu0 %v889
    %2103 = vmatmul.f32.gmra.mxu0 %v1762
    %v2104 = vpop.f32.mrf.mxu0
    %v2105 = vadd.f32 %v2085, %v2104
    %2106 = vdwg.mxu0
    %2107 = vmatpush.msra.mxu0 %v920
    %2108 = vmatpush.msra.mxu0 %v919
    %2109 = vmatpush.msra.mxu0 %v918
    %2110 = vmatpush.msra.mxu0 %v917
    %2111 = vmatpush.msra.mxu0 %v916
    %2112 = vmatpush.msra.mxu0 %v915
    %2113 = vmatpush.msra.mxu0 %v914
    %2114 = vmatpush.msra.mxu0 %v913
    %2115 = vmatpush.msra.mxu0 %v912
    %2116 = vmatpush.msra.mxu0 %v911
    %2117 = vmatpush.msra.mxu0 %v910
    %2118 = vmatpush.msra.mxu0 %v909
    %2119 = vmatpush.msra.mxu0 %v908
    %2120 = vmatpush.msra.mxu0 %v907
    %2121 = vmatpush.msra.mxu0 %v906
    %2122 = vmatpush.msra.mxu0 %v905
    %2123 = vmatmul.f32.gmra.mxu0 %v2082
    %v2124 = vpop.f32.mrf.mxu0
    %v2125 = vadd.f32 %v2105, %v2124
    %2126 = vdwg.mxu0
    %v2127 = vmax.f32 %v2125, 0.0
    %v2128 = vld [vmem:[#allocation7] sm:$0x1]
    %v2129 = vld [vmem:[#allocation7 + $0x2] sm:$0x1]
    %v2130 = vld [vmem:[#allocation7 + $0x4] sm:$0x1]
    %v2131 = vld [vmem:[#allocation7 + $0x6] sm:$0x1]
    %v2132 = vld [vmem:[#allocation7 + $0x8] sm:$0x1]
    %v2133 = vld [vmem:[#allocation7 + $0xa] sm:$0x1]
    %v2134 = vld [vmem:[#allocation7 + $0xc] sm:$0x1]
    %v2135 = vld [vmem:[#allocation7 + $0xe] sm:$0x1]
    %v2144 = vrot.slane %v2129, 7
    %v2145 = vsel %vm1000, %v2144, %v2128
    %v2146 = vrot.slane %v2130, 6
    %v2147 = vsel %vm1003, %v2146, %v2145
    %v2148 = vrot.slane %v2131, 5
    %v2149 = vsel %vm1006, %v2148, %v2147
    %v2150 = vrot.slane %v2132, 4
    %v2151 = vsel %vm1009, %v2150, %v2149
    %v2152 = vrot.slane %v2133, 3
    %v2153 = vsel %vm1012, %v2152, %v2151
    %v2154 = vrot.slane %v2134, 2
    %v2155 = vsel %vm1015, %v2154, %v2153
    %v2156 = vrot.slane %v2135, 1
    %v2157 = vsel %vm1018, %v2156, %v2155
    %2159 = vmatpush.msra.mxu0 %v937
    %2160 = vmatpush.msra.mxu0 %v936
    %2161 = vmatpush.msra.mxu0 %v935
    %2162 = vmatpush.msra.mxu0 %v934
    %2163 = vmatpush.msra.mxu0 %v933
    %2164 = vmatpush.msra.mxu0 %v932
    %2165 = vmatpush.msra.mxu0 %v931
    %2166 = vmatpush.msra.mxu0 %v930
    %2167 = vmatpush.msra.mxu0 %v929
    %2168 = vmatpush.msra.mxu0 %v928
    %2169 = vmatpush.msra.mxu0 %v927
    %2170 = vmatpush.msra.mxu0 %v926
    %2171 = vmatpush.msra.mxu0 %v925
    %2172 = vmatpush.msra.mxu0 %v924
    %2173 = vmatpush.msra.mxu0 %v923
    %2174 = vmatpush.msra.mxu0 %v922
    %2175 = vmatmul.f32.gmra.mxu0 %v2127
    %v2176 = vpop.f32.mrf.mxu0
    %v2177 = vadd.f32 %v2157, %v2176
    %2178 = vdwg.mxu0
    %vm2179 = vcmask 64512
    %v2180 = vsel %vm2179, %v2177, -inf
    %2181 = vmax.xlane.f32.xlu0 %v2180
    %v2182 = vpop.xlane.xlu0 %2181
    %v2183 = vsub.f32 %v2177, %v2182
    %v2184 = vmul.f32 %v2183, 1.442695
    %v2185 = vpow.pop %v2184
    %v2186 = vsel %vm2179, %v2185, 0.0
    %2187 = vadd.xlane.f32.xlu0 %v2186
    %v2188 = vpop.xlane.xlu0 %2187
    %v2189 = vrcp.pop %v2188
    %v2190 = vmul.f32 %v2188, %v2189
    %v2191 = vsub.f32 1.0, %v2190
    %v2192 = vmul.f32 %v2189, %v2191
    %v2193 = vadd.f32 %v2189, %v2192
    %vm2194 = vweird.f32 %v2188
    %vm2195 = vweird.f32 %v2189
    %vm2196 = vmor %vm2194, %vm2195
    %v2197 = vsel %vm2196, %v2189, %v2193
    %v2198 = vand.u32 2147483647, %v2188
    %vm2199 = vcmp.eq.f32.partialorder %v2198, 8.507059e+37
    %v2200 = vand.u32 %v2188, 2147483648
    %v2201 = vor.u32 1.1754944e-38, %v2200
    %v2202 = vsel %vm2199, %v2201, %v2197
    %v2203 = vmul.f32 %v2185, %v2202
    %v2205 = vsel %vm2179, %v2203, 0
    %2207 = vmatpush.msra.mxu0 0.0
    %2208 = vmatpush.msra.mxu0 0.0
    %2209 = vmatpush.msra.mxu0 0.0
    %2210 = vmatpush.msra.mxu0 0.0
    %2211 = vmatpush.msra.mxu0 0.0
    %2212 = vmatpush.msra.mxu0 0.0
    %2213 = vmatpush.msra.mxu0 0.0
    %2214 = vmatpush.msra.mxu0 0.0
    %2215 = vmatpush.msra.mxu0 0.0
    %2216 = vmatpush.msra.mxu0 0.0
    %2217 = vmatpush.msra.mxu0 0.0
    %2218 = vmatpush.msra.mxu0 0.0
    %2219 = vmatpush.msra.mxu0 0.0
    %2220 = vmatpush.msra.mxu0 0.0
    %2221 = vmatpush.msra.mxu0 0.0
    %2222 = vmatpush.msra.mxu0 %v938
    %2223 = vmatmul.f32.gmra.mxu0 %v2205
    %v2224 = vpop.f32.mrf.mxu0
    %v2225 = vadd.f32 0.0, %v2224
    %2226 = vdwg.mxu0
    %2227 = vmatpush.msra.mxu0 0.0
    %2228 = vmatpush.msra.mxu0 0.0
    %2229 = vmatpush.msra.mxu0 0.0
    %2230 = vmatpush.msra.mxu0 0.0
    %2231 = vmatpush.msra.mxu0 0.0
    %2232 = vmatpush.msra.mxu0 0.0
    %2233 = vmatpush.msra.mxu0 0.0
    %2234 = vmatpush.msra.mxu0 0.0
    %2235 = vmatpush.msra.mxu0 0.0
    %2236 = vmatpush.msra.mxu0 0.0
    %2237 = vmatpush.msra.mxu0 0.0
    %2238 = vmatpush.msra.mxu0 0.0
    %2239 = vmatpush.msra.mxu0 0.0
    %2240 = vmatpush.msra.mxu0 0.0
    %2241 = vmatpush.msra.mxu0 0.0
    %2242 = vmatpush.msra.mxu0 %v939
    %2243 = vmatmul.f32.gmra.mxu0 %v2205
    %v2244 = vpop.f32.mrf.mxu0
    %v2245 = vadd.f32 0.0, %v2244
    %2246 = vdwg.mxu0
    %v2247 = vmul.f32 %v1762, %v2225
    %v2248 = vmul.f32 %v2082, %v2245
    %vm2249 = vcmp.ge.f32.partialorder %v2247, 0.0
    %vm2250 = vcmp.ge.f32.partialorder %v2248, 0.0
    %v2251 = vmul.f32 %v2247, 0.01
    %v2252 = vmul.f32 %v2248, 0.01
    %v2253 = vsel %vm2249, %v2247, %v2251
    %v2254 = vsel %vm2250, %v2248, %v2252
    %v2255 = vadd.f32 %v2253, %v190
    %v2256 = vadd.f32 %v2254, %v191
    %2257 = vmatpush.msra.mxu0 %v207
    %2258 = vmatpush.msra.mxu0 %v206
    %2259 = vmatpush.msra.mxu0 %v205
    %2260 = vmatpush.msra.mxu0 %v204
    %2261 = vmatpush.msra.mxu0 %v203
    %2262 = vmatpush.msra.mxu0 %v202
    %2263 = vmatpush.msra.mxu0 %v201
    %2264 = vmatpush.msra.mxu0 %v200
    %2265 = vmatpush.msra.mxu0 %v199
    %2266 = vmatpush.msra.mxu0 %v198
    %2267 = vmatpush.msra.mxu0 %v197
    %2268 = vmatpush.msra.mxu0 %v196
    %2269 = vmatpush.msra.mxu0 %v195
    %2270 = vmatpush.msra.mxu0 %v194
    %2271 = vmatpush.msra.mxu0 %v193
    %2272 = vmatpush.msra.mxu0 %v192
    %2273 = vmatmul.f32.gmra.mxu0 %v2255
    %v2274 = vpop.f32.mrf.mxu0
    %v2275 = vadd.f32 0.0, %v2274
    %2276 = vdwg.mxu0
    %2277 = vmatpush.msra.mxu0 %v223
    %2278 = vmatpush.msra.mxu0 %v222
    %2279 = vmatpush.msra.mxu0 %v221
    %2280 = vmatpush.msra.mxu0 %v220
    %2281 = vmatpush.msra.mxu0 %v219
    %2282 = vmatpush.msra.mxu0 %v218
    %2283 = vmatpush.msra.mxu0 %v217
    %2284 = vmatpush.msra.mxu0 %v216
    %2285 = vmatpush.msra.mxu0 %v215
    %2286 = vmatpush.msra.mxu0 %v214
    %2287 = vmatpush.msra.mxu0 %v213
    %2288 = vmatpush.msra.mxu0 %v212
    %2289 = vmatpush.msra.mxu0 %v211
    %2290 = vmatpush.msra.mxu0 %v210
    %2291 = vmatpush.msra.mxu0 %v209
    %2292 = vmatpush.msra.mxu0 %v208
    %2293 = vmatmul.f32.gmra.mxu0 %v2256
    %v2294 = vpop.f32.mrf.mxu0
    %v2295 = vadd.f32 %v2275, %v2294
    %2296 = vdwg.mxu0
    %vm2297 = vcmp.ge.f32.partialorder %v2295, 0.0
    %v2298 = vmul.f32 %v2295, 0.01
    %v2299 = vsel %vm2297, %v2295, %v2298
    %v2300 = vld [vmem:[#allocation5 + $0x1] sm:$0x1]
    %v2301 = vld [vmem:[#allocation5 + $0x3] sm:$0x1]
    %v2302 = vld [vmem:[#allocation5 + $0x5] sm:$0x1]
    %v2303 = vld [vmem:[#allocation5 + $0x7] sm:$0x1]
    %v2304 = vld [vmem:[#allocation5 + $0x9] sm:$0x1]
    %v2305 = vld [vmem:[#allocation5 + $0xb] sm:$0x1]
    %v2306 = vld [vmem:[#allocation5 + $0xd] sm:$0x1]
    %v2307 = vld [vmem:[#allocation5 + $0xf] sm:$0x1]
    %v2316 = vrot.slane %v2301, 7
    %v2317 = vsel %vm1000, %v2316, %v2300
    %v2318 = vrot.slane %v2302, 6
    %v2319 = vsel %vm1003, %v2318, %v2317
    %v2320 = vrot.slane %v2303, 5
    %v2321 = vsel %vm1006, %v2320, %v2319
    %v2322 = vrot.slane %v2304, 4
    %v2323 = vsel %vm1009, %v2322, %v2321
    %v2324 = vrot.slane %v2305, 3
    %v2325 = vsel %vm1012, %v2324, %v2323
    %v2326 = vrot.slane %v2306, 2
    %v2327 = vsel %vm1015, %v2326, %v2325
    %v2328 = vrot.slane %v2307, 1
    %v2329 = vsel %vm1018, %v2328, %v2327
    %v2331 = vadd.f32 %v2299, %v2329
    %v2332 = vmul.f32 %v2331, 100.0
    %v2334 = vsel %vm1023, %v2332, 0
    %2336 = vmatpush.msra.mxu0 0.0
    %2337 = vmatpush.msra.mxu0 0.0
    %2338 = vmatpush.msra.mxu0 0.0
    %2339 = vmatpush.msra.mxu0 0.0
    %2340 = vmatpush.msra.mxu0 0.0
    %2341 = vmatpush.msra.mxu0 0.0
    %2342 = vmatpush.msra.mxu0 0.0
    %2343 = vmatpush.msra.mxu0 0.0
    %2344 = vmatpush.msra.mxu0 %v871
    %2345 = vmatpush.msra.mxu0 %v870
    %2346 = vmatpush.msra.mxu0 %v869
    %2347 = vmatpush.msra.mxu0 %v868
    %2348 = vmatpush.msra.mxu0 %v867
    %2349 = vmatpush.msra.mxu0 %v866
    %2350 = vmatpush.msra.mxu0 %v865
    %2351 = vmatpush.msra.mxu0 %v864
    %2352 = vmatmul.f32.gmra.mxu0 %v2334
    %v2353 = vpop.f32.mrf.mxu0
    %v2354 = vadd.f32 0.0, %v2353
    %2355 = vdwg.mxu0
    %v2356 = vmax.f32 %v2332, %v2354
    %v2358 = vsel %vm1023, %v2356, 0
    %2360 = vmatpush.msra.mxu0 0.0
    %2361 = vmatpush.msra.mxu0 0.0
    %2362 = vmatpush.msra.mxu0 0.0
    %2363 = vmatpush.msra.mxu0 0.0
    %2364 = vmatpush.msra.mxu0 0.0
    %2365 = vmatpush.msra.mxu0 0.0
    %2366 = vmatpush.msra.mxu0 0.0
    %2367 = vmatpush.msra.mxu0 0.0
    %2368 = vmatpush.msra.mxu0 %v879
    %2369 = vmatpush.msra.mxu0 %v878
    %2370 = vmatpush.msra.mxu0 %v877
    %2371 = vmatpush.msra.mxu0 %v876
    %2372 = vmatpush.msra.mxu0 %v875
    %2373 = vmatpush.msra.mxu0 %v874
    %2374 = vmatpush.msra.mxu0 %v873
    %2375 = vmatpush.msra.mxu0 %v872
    %2376 = vmatmul.f32.gmra.mxu0 %v2358
    %v2377 = vpop.f32.mrf.mxu0
    %v2378 = vadd.f32 0.0, %v2377
    %2379 = vdwg.mxu0
    %v2380 = vmax.f32 %v2356, %v2378
    %v2382 = vsel %vm1023, %v2380, 0
    %2384 = vmatpush.msra.mxu0 0.0
    %2385 = vmatpush.msra.mxu0 0.0
    %2386 = vmatpush.msra.mxu0 0.0
    %2387 = vmatpush.msra.mxu0 0.0
    %2388 = vmatpush.msra.mxu0 0.0
    %2389 = vmatpush.msra.mxu0 0.0
    %2390 = vmatpush.msra.mxu0 0.0
    %2391 = vmatpush.msra.mxu0 0.0
    %2392 = vmatpush.msra.mxu0 %v887
    %2393 = vmatpush.msra.mxu0 %v886
    %2394 = vmatpush.msra.mxu0 %v885
    %2395 = vmatpush.msra.mxu0 %v884
    %2396 = vmatpush.msra.mxu0 %v883
    %2397 = vmatpush.msra.mxu0 %v882
    %2398 = vmatpush.msra.mxu0 %v881
    %2399 = vmatpush.msra.mxu0 %v880
    %2400 = vmatmul.f32.gmra.mxu0 %v2382
    %v2401 = vpop.f32.mrf.mxu0
    %v2402 = vadd.f32 0.0, %v2401
    %2403 = vdwg.mxu0
    %v2404 = vmax.f32 %v2380, %v2402
    %v2405 = vsub.f32 %v2332, %v2404
    %v2406 = vmul.f32 %v2405, 1.442695
    %v2407 = vpow.pop %v2406
    %vm2408 = vcmp.gt.f32.partialorder %v2407, 0.0
    %v2409 = vsel %vm2408, 1.0, 0.0
    %v2410 = vmax.f32 %v2409, %v1102
    %v2412 = vsel %vm1023, %v2410, 0
    %2414 = vmatpush.msra.mxu0 0.0
    %2415 = vmatpush.msra.mxu0 0.0
    %2416 = vmatpush.msra.mxu0 0.0
    %2417 = vmatpush.msra.mxu0 0.0
    %2418 = vmatpush.msra.mxu0 0.0
    %2419 = vmatpush.msra.mxu0 0.0
    %2420 = vmatpush.msra.mxu0 0.0
    %2421 = vmatpush.msra.mxu0 0.0
    %2422 = vmatpush.msra.mxu0 %v336
    %2423 = vmatpush.msra.mxu0 %v320
    %2424 = vmatpush.msra.mxu0 %v304
    %2425 = vmatpush.msra.mxu0 %v288
    %2426 = vmatpush.msra.mxu0 %v272
    %2427 = vmatpush.msra.mxu0 %v256
    %2428 = vmatpush.msra.mxu0 %v240
    %2429 = vmatpush.msra.mxu0 %v224
    %2430 = vmatmul.f32.gmra.mxu0 %v2412
    %v2431 = vpop.f32.mrf.mxu0
    %v2432 = vadd.f32 0.0, %v2431
    %2433 = vdwg.mxu0
    %2434 = vmatpush.msra.mxu0 0.0
    %2435 = vmatpush.msra.mxu0 0.0
    %2436 = vmatpush.msra.mxu0 0.0
    %2437 = vmatpush.msra.mxu0 0.0
    %2438 = vmatpush.msra.mxu0 0.0
    %2439 = vmatpush.msra.mxu0 0.0
    %2440 = vmatpush.msra.mxu0 0.0
    %2441 = vmatpush.msra.mxu0 0.0
    %2442 = vmatpush.msra.mxu0 %v337
    %2443 = vmatpush.msra.mxu0 %v321
    %2444 = vmatpush.msra.mxu0 %v305
    %2445 = vmatpush.msra.mxu0 %v289
    %2446 = vmatpush.msra.mxu0 %v273
    %2447 = vmatpush.msra.mxu0 %v257
    %2448 = vmatpush.msra.mxu0 %v241
    %2449 = vmatpush.msra.mxu0 %v225
    %2450 = vmatmul.f32.gmra.mxu0 %v2412
    %v2451 = vpop.f32.mrf.mxu0
    %v2452 = vadd.f32 0.0, %v2451
    %2453 = vdwg.mxu0
    %2454 = vmatpush.msra.mxu0 0.0
    %2455 = vmatpush.msra.mxu0 0.0
    %2456 = vmatpush.msra.mxu0 0.0
    %2457 = vmatpush.msra.mxu0 0.0
    %2458 = vmatpush.msra.mxu0 0.0
    %2459 = vmatpush.msra.mxu0 0.0
    %2460 = vmatpush.msra.mxu0 0.0
    %2461 = vmatpush.msra.mxu0 0.0
    %2462 = vmatpush.msra.mxu0 %v338
    %2463 = vmatpush.msra.mxu0 %v322
    %2464 = vmatpush.msra.mxu0 %v306
    %2465 = vmatpush.msra.mxu0 %v290
    %2466 = vmatpush.msra.mxu0 %v274
    %2467 = vmatpush.msra.mxu0 %v258
    %2468 = vmatpush.msra.mxu0 %v242
    %2469 = vmatpush.msra.mxu0 %v226
    %2470 = vmatmul.f32.gmra.mxu0 %v2412
    %v2471 = vpop.f32.mrf.mxu0
    %v2472 = vadd.f32 0.0, %v2471
    %2473 = vdwg.mxu0
    %2474 = vmatpush.msra.mxu0 0.0
    %2475 = vmatpush.msra.mxu0 0.0
    %2476 = vmatpush.msra.mxu0 0.0
    %2477 = vmatpush.msra.mxu0 0.0
    %2478 = vmatpush.msra.mxu0 0.0
    %2479 = vmatpush.msra.mxu0 0.0
    %2480 = vmatpush.msra.mxu0 0.0
    %2481 = vmatpush.msra.mxu0 0.0
    %2482 = vmatpush.msra.mxu0 %v339
    %2483 = vmatpush.msra.mxu0 %v323
    %2484 = vmatpush.msra.mxu0 %v307
    %2485 = vmatpush.msra.mxu0 %v291
    %2486 = vmatpush.msra.mxu0 %v275
    %2487 = vmatpush.msra.mxu0 %v259
    %2488 = vmatpush.msra.mxu0 %v243
    %2489 = vmatpush.msra.mxu0 %v227
    %2490 = vmatmul.f32.gmra.mxu0 %v2412
    %v2491 = vpop.f32.mrf.mxu0
    %v2492 = vadd.f32 0.0, %v2491
    %2493 = vdwg.mxu0
    %2494 = vmatpush.msra.mxu0 0.0
    %2495 = vmatpush.msra.mxu0 0.0
    %2496 = vmatpush.msra.mxu0 0.0
    %2497 = vmatpush.msra.mxu0 0.0
    %2498 = vmatpush.msra.mxu0 0.0
    %2499 = vmatpush.msra.mxu0 0.0
    %2500 = vmatpush.msra.mxu0 0.0
    %2501 = vmatpush.msra.mxu0 0.0
    %2502 = vmatpush.msra.mxu0 %v340
    %2503 = vmatpush.msra.mxu0 %v324
    %2504 = vmatpush.msra.mxu0 %v308
    %2505 = vmatpush.msra.mxu0 %v292
    %2506 = vmatpush.msra.mxu0 %v276
    %2507 = vmatpush.msra.mxu0 %v260
    %2508 = vmatpush.msra.mxu0 %v244
    %2509 = vmatpush.msra.mxu0 %v228
    %2510 = vmatmul.f32.gmra.mxu0 %v2412
    %v2511 = vpop.f32.mrf.mxu0
    %v2512 = vadd.f32 0.0, %v2511
    %2513 = vdwg.mxu0
    %2514 = vmatpush.msra.mxu0 0.0
    %2515 = vmatpush.msra.mxu0 0.0
    %2516 = vmatpush.msra.mxu0 0.0
    %2517 = vmatpush.msra.mxu0 0.0
    %2518 = vmatpush.msra.mxu0 0.0
    %2519 = vmatpush.msra.mxu0 0.0
    %2520 = vmatpush.msra.mxu0 0.0
    %2521 = vmatpush.msra.mxu0 0.0
    %2522 = vmatpush.msra.mxu0 %v341
    %2523 = vmatpush.msra.mxu0 %v325
    %2524 = vmatpush.msra.mxu0 %v309
    %2525 = vmatpush.msra.mxu0 %v293
    %2526 = vmatpush.msra.mxu0 %v277
    %2527 = vmatpush.msra.mxu0 %v261
    %2528 = vmatpush.msra.mxu0 %v245
    %2529 = vmatpush.msra.mxu0 %v229
    %2530 = vmatmul.f32.gmra.mxu0 %v2412
    %v2531 = vpop.f32.mrf.mxu0
    %v2532 = vadd.f32 0.0, %v2531
    %2533 = vdwg.mxu0
    %2534 = vmatpush.msra.mxu0 0.0
    %2535 = vmatpush.msra.mxu0 0.0
    %2536 = vmatpush.msra.mxu0 0.0
    %2537 = vmatpush.msra.mxu0 0.0
    %2538 = vmatpush.msra.mxu0 0.0
    %2539 = vmatpush.msra.mxu0 0.0
    %2540 = vmatpush.msra.mxu0 0.0
    %2541 = vmatpush.msra.mxu0 0.0
    %2542 = vmatpush.msra.mxu0 %v342
    %2543 = vmatpush.msra.mxu0 %v326
    %2544 = vmatpush.msra.mxu0 %v310
    %2545 = vmatpush.msra.mxu0 %v294
    %2546 = vmatpush.msra.mxu0 %v278
    %2547 = vmatpush.msra.mxu0 %v262
    %2548 = vmatpush.msra.mxu0 %v246
    %2549 = vmatpush.msra.mxu0 %v230
    %2550 = vmatmul.f32.gmra.mxu0 %v2412
    %v2551 = vpop.f32.mrf.mxu0
    %v2552 = vadd.f32 0.0, %v2551
    %2553 = vdwg.mxu0
    %2554 = vmatpush.msra.mxu0 0.0
    %2555 = vmatpush.msra.mxu0 0.0
    %2556 = vmatpush.msra.mxu0 0.0
    %2557 = vmatpush.msra.mxu0 0.0
    %2558 = vmatpush.msra.mxu0 0.0
    %2559 = vmatpush.msra.mxu0 0.0
    %2560 = vmatpush.msra.mxu0 0.0
    %2561 = vmatpush.msra.mxu0 0.0
    %2562 = vmatpush.msra.mxu0 %v343
    %2563 = vmatpush.msra.mxu0 %v327
    %2564 = vmatpush.msra.mxu0 %v311
    %2565 = vmatpush.msra.mxu0 %v295
    %2566 = vmatpush.msra.mxu0 %v279
    %2567 = vmatpush.msra.mxu0 %v263
    %2568 = vmatpush.msra.mxu0 %v247
    %2569 = vmatpush.msra.mxu0 %v231
    %2570 = vmatmul.f32.gmra.mxu0 %v2412
    %v2571 = vpop.f32.mrf.mxu0
    %v2572 = vadd.f32 0.0, %v2571
    %2573 = vdwg.mxu0
    %2574 = vmatpush.msra.mxu0 0.0
    %2575 = vmatpush.msra.mxu0 0.0
    %2576 = vmatpush.msra.mxu0 0.0
    %2577 = vmatpush.msra.mxu0 0.0
    %2578 = vmatpush.msra.mxu0 0.0
    %2579 = vmatpush.msra.mxu0 0.0
    %2580 = vmatpush.msra.mxu0 0.0
    %2581 = vmatpush.msra.mxu0 0.0
    %2582 = vmatpush.msra.mxu0 %v344
    %2583 = vmatpush.msra.mxu0 %v328
    %2584 = vmatpush.msra.mxu0 %v312
    %2585 = vmatpush.msra.mxu0 %v296
    %2586 = vmatpush.msra.mxu0 %v280
    %2587 = vmatpush.msra.mxu0 %v264
    %2588 = vmatpush.msra.mxu0 %v248
    %2589 = vmatpush.msra.mxu0 %v232
    %2590 = vmatmul.f32.gmra.mxu0 %v2412
    %v2591 = vpop.f32.mrf.mxu0
    %v2592 = vadd.f32 0.0, %v2591
    %2593 = vdwg.mxu0
    %2594 = vmatpush.msra.mxu0 0.0
    %2595 = vmatpush.msra.mxu0 0.0
    %2596 = vmatpush.msra.mxu0 0.0
    %2597 = vmatpush.msra.mxu0 0.0
    %2598 = vmatpush.msra.mxu0 0.0
    %2599 = vmatpush.msra.mxu0 0.0
    %2600 = vmatpush.msra.mxu0 0.0
    %2601 = vmatpush.msra.mxu0 0.0
    %2602 = vmatpush.msra.mxu0 %v345
    %2603 = vmatpush.msra.mxu0 %v329
    %2604 = vmatpush.msra.mxu0 %v313
    %2605 = vmatpush.msra.mxu0 %v297
    %2606 = vmatpush.msra.mxu0 %v281
    %2607 = vmatpush.msra.mxu0 %v265
    %2608 = vmatpush.msra.mxu0 %v249
    %2609 = vmatpush.msra.mxu0 %v233
    %2610 = vmatmul.f32.gmra.mxu0 %v2412
    %v2611 = vpop.f32.mrf.mxu0
    %v2612 = vadd.f32 0.0, %v2611
    %2613 = vdwg.mxu0
    %2614 = vmatpush.msra.mxu0 0.0
    %2615 = vmatpush.msra.mxu0 0.0
    %2616 = vmatpush.msra.mxu0 0.0
    %2617 = vmatpush.msra.mxu0 0.0
    %2618 = vmatpush.msra.mxu0 0.0
    %2619 = vmatpush.msra.mxu0 0.0
    %2620 = vmatpush.msra.mxu0 0.0
    %2621 = vmatpush.msra.mxu0 0.0
    %2622 = vmatpush.msra.mxu0 %v346
    %2623 = vmatpush.msra.mxu0 %v330
    %2624 = vmatpush.msra.mxu0 %v314
    %2625 = vmatpush.msra.mxu0 %v298
    %2626 = vmatpush.msra.mxu0 %v282
    %2627 = vmatpush.msra.mxu0 %v266
    %2628 = vmatpush.msra.mxu0 %v250
    %2629 = vmatpush.msra.mxu0 %v234
    %2630 = vmatmul.f32.gmra.mxu0 %v2412
    %v2631 = vpop.f32.mrf.mxu0
    %v2632 = vadd.f32 0.0, %v2631
    %2633 = vdwg.mxu0
    %2634 = vmatpush.msra.mxu0 0.0
    %2635 = vmatpush.msra.mxu0 0.0
    %2636 = vmatpush.msra.mxu0 0.0
    %2637 = vmatpush.msra.mxu0 0.0
    %2638 = vmatpush.msra.mxu0 0.0
    %2639 = vmatpush.msra.mxu0 0.0
    %2640 = vmatpush.msra.mxu0 0.0
    %2641 = vmatpush.msra.mxu0 0.0
    %2642 = vmatpush.msra.mxu0 %v347
    %2643 = vmatpush.msra.mxu0 %v331
    %2644 = vmatpush.msra.mxu0 %v315
    %2645 = vmatpush.msra.mxu0 %v299
    %2646 = vmatpush.msra.mxu0 %v283
    %2647 = vmatpush.msra.mxu0 %v267
    %2648 = vmatpush.msra.mxu0 %v251
    %2649 = vmatpush.msra.mxu0 %v235
    %2650 = vmatmul.f32.gmra.mxu0 %v2412
    %v2651 = vpop.f32.mrf.mxu0
    %v2652 = vadd.f32 0.0, %v2651
    %2653 = vdwg.mxu0
    %2654 = vmatpush.msra.mxu0 0.0
    %2655 = vmatpush.msra.mxu0 0.0
    %2656 = vmatpush.msra.mxu0 0.0
    %2657 = vmatpush.msra.mxu0 0.0
    %2658 = vmatpush.msra.mxu0 0.0
    %2659 = vmatpush.msra.mxu0 0.0
    %2660 = vmatpush.msra.mxu0 0.0
    %2661 = vmatpush.msra.mxu0 0.0
    %2662 = vmatpush.msra.mxu0 %v348
    %2663 = vmatpush.msra.mxu0 %v332
    %2664 = vmatpush.msra.mxu0 %v316
    %2665 = vmatpush.msra.mxu0 %v300
    %2666 = vmatpush.msra.mxu0 %v284
    %2667 = vmatpush.msra.mxu0 %v268
    %2668 = vmatpush.msra.mxu0 %v252
    %2669 = vmatpush.msra.mxu0 %v236
    %2670 = vmatmul.f32.gmra.mxu0 %v2412
    %v2671 = vpop.f32.mrf.mxu0
    %v2672 = vadd.f32 0.0, %v2671
    %2673 = vdwg.mxu0
    %2674 = vmatpush.msra.mxu0 0.0
    %2675 = vmatpush.msra.mxu0 0.0
    %2676 = vmatpush.msra.mxu0 0.0
    %2677 = vmatpush.msra.mxu0 0.0
    %2678 = vmatpush.msra.mxu0 0.0
    %2679 = vmatpush.msra.mxu0 0.0
    %2680 = vmatpush.msra.mxu0 0.0
    %2681 = vmatpush.msra.mxu0 0.0
    %2682 = vmatpush.msra.mxu0 %v349
    %2683 = vmatpush.msra.mxu0 %v333
    %2684 = vmatpush.msra.mxu0 %v317
    %2685 = vmatpush.msra.mxu0 %v301
    %2686 = vmatpush.msra.mxu0 %v285
    %2687 = vmatpush.msra.mxu0 %v269
    %2688 = vmatpush.msra.mxu0 %v253
    %2689 = vmatpush.msra.mxu0 %v237
    %2690 = vmatmul.f32.gmra.mxu0 %v2412
    %v2691 = vpop.f32.mrf.mxu0
    %v2692 = vadd.f32 0.0, %v2691
    %2693 = vdwg.mxu0
    %2694 = vmatpush.msra.mxu0 0.0
    %2695 = vmatpush.msra.mxu0 0.0
    %2696 = vmatpush.msra.mxu0 0.0
    %2697 = vmatpush.msra.mxu0 0.0
    %2698 = vmatpush.msra.mxu0 0.0
    %2699 = vmatpush.msra.mxu0 0.0
    %2700 = vmatpush.msra.mxu0 0.0
    %2701 = vmatpush.msra.mxu0 0.0
    %2702 = vmatpush.msra.mxu0 %v350
    %2703 = vmatpush.msra.mxu0 %v334
    %2704 = vmatpush.msra.mxu0 %v318
    %2705 = vmatpush.msra.mxu0 %v302
    %2706 = vmatpush.msra.mxu0 %v286
    %2707 = vmatpush.msra.mxu0 %v270
    %2708 = vmatpush.msra.mxu0 %v254
    %2709 = vmatpush.msra.mxu0 %v238
    %2710 = vmatmul.f32.gmra.mxu0 %v2412
    %v2711 = vpop.f32.mrf.mxu0
    %v2712 = vadd.f32 0.0, %v2711
    %2713 = vdwg.mxu0
    %2714 = vmatpush.msra.mxu0 0.0
    %2715 = vmatpush.msra.mxu0 0.0
    %2716 = vmatpush.msra.mxu0 0.0
    %2717 = vmatpush.msra.mxu0 0.0
    %2718 = vmatpush.msra.mxu0 0.0
    %2719 = vmatpush.msra.mxu0 0.0
    %2720 = vmatpush.msra.mxu0 0.0
    %2721 = vmatpush.msra.mxu0 0.0
    %2722 = vmatpush.msra.mxu0 %v351
    %2723 = vmatpush.msra.mxu0 %v335
    %2724 = vmatpush.msra.mxu0 %v319
    %2725 = vmatpush.msra.mxu0 %v303
    %2726 = vmatpush.msra.mxu0 %v287
    %2727 = vmatpush.msra.mxu0 %v271
    %2728 = vmatpush.msra.mxu0 %v255
    %2729 = vmatpush.msra.mxu0 %v239
    %2730 = vmatmul.f32.gmra.mxu0 %v2412
    %v2731 = vpop.f32.mrf.mxu0
    %v2732 = vadd.f32 0.0, %v2731
    %2733 = vdwg.mxu0
    %v2734 = vmul.f32 %v2432, %v2255
    %v2735 = vmul.f32 %v2452, %v2256
    %v2736 = vmul.f32 %v2472, %v2255
    %v2737 = vmul.f32 %v2492, %v2256
    %v2738 = vmul.f32 %v2512, %v2255
    %v2739 = vmul.f32 %v2532, %v2256
    %v2740 = vmul.f32 %v2552, %v2255
    %v2741 = vmul.f32 %v2572, %v2256
    %v2742 = vmul.f32 %v2592, %v2255
    %v2743 = vmul.f32 %v2612, %v2256
    %v2744 = vmul.f32 %v2632, %v2255
    %v2745 = vmul.f32 %v2652, %v2256
    %v2746 = vmul.f32 %v2672, %v2255
    %v2747 = vmul.f32 %v2692, %v2256
    %v2748 = vmul.f32 %v2712, %v2255
    %v2749 = vmul.f32 %v2732, %v2256
    %2750 = vmatpush.msra.mxu0 %v382
    %2751 = vmatpush.msra.mxu0 %v380
    %2752 = vmatpush.msra.mxu0 %v378
    %2753 = vmatpush.msra.mxu0 %v376
    %2754 = vmatpush.msra.mxu0 %v374
    %2755 = vmatpush.msra.mxu0 %v372
    %2756 = vmatpush.msra.mxu0 %v370
    %2757 = vmatpush.msra.mxu0 %v368
    %2758 = vmatpush.msra.mxu0 %v366
    %2759 = vmatpush.msra.mxu0 %v364
    %2760 = vmatpush.msra.mxu0 %v362
    %2761 = vmatpush.msra.mxu0 %v360
    %2762 = vmatpush.msra.mxu0 %v358
    %2763 = vmatpush.msra.mxu0 %v356
    %2764 = vmatpush.msra.mxu0 %v354
    %2765 = vmatpush.msra.mxu0 %v352
    %2766 = vmatmul.f32.gmra.mxu0 %v2734
    %v2767 = vpop.f32.mrf.mxu0
    %v2768 = vadd.f32 0.0, %v2767
    %2769 = vdwg.mxu0
    %2770 = vmatpush.msra.mxu0 %v414
    %2771 = vmatpush.msra.mxu0 %v412
    %2772 = vmatpush.msra.mxu0 %v410
    %2773 = vmatpush.msra.mxu0 %v408
    %2774 = vmatpush.msra.mxu0 %v406
    %2775 = vmatpush.msra.mxu0 %v404
    %2776 = vmatpush.msra.mxu0 %v402
    %2777 = vmatpush.msra.mxu0 %v400
    %2778 = vmatpush.msra.mxu0 %v398
    %2779 = vmatpush.msra.mxu0 %v396
    %2780 = vmatpush.msra.mxu0 %v394
    %2781 = vmatpush.msra.mxu0 %v392
    %2782 = vmatpush.msra.mxu0 %v390
    %2783 = vmatpush.msra.mxu0 %v388
    %2784 = vmatpush.msra.mxu0 %v386
    %2785 = vmatpush.msra.mxu0 %v384
    %2786 = vmatmul.f32.gmra.mxu0 %v2735
    %v2787 = vpop.f32.mrf.mxu0
    %v2788 = vadd.f32 %v2768, %v2787
    %2789 = vdwg.mxu0
    %2790 = vmatpush.msra.mxu0 %v446
    %2791 = vmatpush.msra.mxu0 %v444
    %2792 = vmatpush.msra.mxu0 %v442
    %2793 = vmatpush.msra.mxu0 %v440
    %2794 = vmatpush.msra.mxu0 %v438
    %2795 = vmatpush.msra.mxu0 %v436
    %2796 = vmatpush.msra.mxu0 %v434
    %2797 = vmatpush.msra.mxu0 %v432
    %2798 = vmatpush.msra.mxu0 %v430
    %2799 = vmatpush.msra.mxu0 %v428
    %2800 = vmatpush.msra.mxu0 %v426
    %2801 = vmatpush.msra.mxu0 %v424
    %2802 = vmatpush.msra.mxu0 %v422
    %2803 = vmatpush.msra.mxu0 %v420
    %2804 = vmatpush.msra.mxu0 %v418
    %2805 = vmatpush.msra.mxu0 %v416
    %2806 = vmatmul.f32.gmra.mxu0 %v2736
    %v2807 = vpop.f32.mrf.mxu0
    %v2808 = vadd.f32 %v2788, %v2807
    %2809 = vdwg.mxu0
    %2810 = vmatpush.msra.mxu0 %v478
    %2811 = vmatpush.msra.mxu0 %v476
    %2812 = vmatpush.msra.mxu0 %v474
    %2813 = vmatpush.msra.mxu0 %v472
    %2814 = vmatpush.msra.mxu0 %v470
    %2815 = vmatpush.msra.mxu0 %v468
    %2816 = vmatpush.msra.mxu0 %v466
    %2817 = vmatpush.msra.mxu0 %v464
    %2818 = vmatpush.msra.mxu0 %v462
    %2819 = vmatpush.msra.mxu0 %v460
    %2820 = vmatpush.msra.mxu0 %v458
    %2821 = vmatpush.msra.mxu0 %v456
    %2822 = vmatpush.msra.mxu0 %v454
    %2823 = vmatpush.msra.mxu0 %v452
    %2824 = vmatpush.msra.mxu0 %v450
    %2825 = vmatpush.msra.mxu0 %v448
    %2826 = vmatmul.f32.gmra.mxu0 %v2737
    %v2827 = vpop.f32.mrf.mxu0
    %v2828 = vadd.f32 %v2808, %v2827
    %2829 = vdwg.mxu0
    %2830 = vmatpush.msra.mxu0 %v510
    %2831 = vmatpush.msra.mxu0 %v508
    %2832 = vmatpush.msra.mxu0 %v506
    %2833 = vmatpush.msra.mxu0 %v504
    %2834 = vmatpush.msra.mxu0 %v502
    %2835 = vmatpush.msra.mxu0 %v500
    %2836 = vmatpush.msra.mxu0 %v498
    %2837 = vmatpush.msra.mxu0 %v496
    %2838 = vmatpush.msra.mxu0 %v494
    %2839 = vmatpush.msra.mxu0 %v492
    %2840 = vmatpush.msra.mxu0 %v490
    %2841 = vmatpush.msra.mxu0 %v488
    %2842 = vmatpush.msra.mxu0 %v486
    %2843 = vmatpush.msra.mxu0 %v484
    %2844 = vmatpush.msra.mxu0 %v482
    %2845 = vmatpush.msra.mxu0 %v480
    %2846 = vmatmul.f32.gmra.mxu0 %v2738
    %v2847 = vpop.f32.mrf.mxu0
    %v2848 = vadd.f32 %v2828, %v2847
    %2849 = vdwg.mxu0
    %2850 = vmatpush.msra.mxu0 %v542
    %2851 = vmatpush.msra.mxu0 %v540
    %2852 = vmatpush.msra.mxu0 %v538
    %2853 = vmatpush.msra.mxu0 %v536
    %2854 = vmatpush.msra.mxu0 %v534
    %2855 = vmatpush.msra.mxu0 %v532
    %2856 = vmatpush.msra.mxu0 %v530
    %2857 = vmatpush.msra.mxu0 %v528
    %2858 = vmatpush.msra.mxu0 %v526
    %2859 = vmatpush.msra.mxu0 %v524
    %2860 = vmatpush.msra.mxu0 %v522
    %2861 = vmatpush.msra.mxu0 %v520
    %2862 = vmatpush.msra.mxu0 %v518
    %2863 = vmatpush.msra.mxu0 %v516
    %2864 = vmatpush.msra.mxu0 %v514
    %2865 = vmatpush.msra.mxu0 %v512
    %2866 = vmatmul.f32.gmra.mxu0 %v2739
    %v2867 = vpop.f32.mrf.mxu0
    %v2868 = vadd.f32 %v2848, %v2867
    %2869 = vdwg.mxu0
    %2870 = vmatpush.msra.mxu0 %v574
    %2871 = vmatpush.msra.mxu0 %v572
    %2872 = vmatpush.msra.mxu0 %v570
    %2873 = vmatpush.msra.mxu0 %v568
    %2874 = vmatpush.msra.mxu0 %v566
    %2875 = vmatpush.msra.mxu0 %v564
    %2876 = vmatpush.msra.mxu0 %v562
    %2877 = vmatpush.msra.mxu0 %v560
    %2878 = vmatpush.msra.mxu0 %v558
    %2879 = vmatpush.msra.mxu0 %v556
    %2880 = vmatpush.msra.mxu0 %v554
    %2881 = vmatpush.msra.mxu0 %v552
    %2882 = vmatpush.msra.mxu0 %v550
    %2883 = vmatpush.msra.mxu0 %v548
    %2884 = vmatpush.msra.mxu0 %v546
    %2885 = vmatpush.msra.mxu0 %v544
    %2886 = vmatmul.f32.gmra.mxu0 %v2740
    %v2887 = vpop.f32.mrf.mxu0
    %v2888 = vadd.f32 %v2868, %v2887
    %2889 = vdwg.mxu0
    %2890 = vmatpush.msra.mxu0 %v606
    %2891 = vmatpush.msra.mxu0 %v604
    %2892 = vmatpush.msra.mxu0 %v602
    %2893 = vmatpush.msra.mxu0 %v600
    %2894 = vmatpush.msra.mxu0 %v598
    %2895 = vmatpush.msra.mxu0 %v596
    %2896 = vmatpush.msra.mxu0 %v594
    %2897 = vmatpush.msra.mxu0 %v592
    %2898 = vmatpush.msra.mxu0 %v590
    %2899 = vmatpush.msra.mxu0 %v588
    %2900 = vmatpush.msra.mxu0 %v586
    %2901 = vmatpush.msra.mxu0 %v584
    %2902 = vmatpush.msra.mxu0 %v582
    %2903 = vmatpush.msra.mxu0 %v580
    %2904 = vmatpush.msra.mxu0 %v578
    %2905 = vmatpush.msra.mxu0 %v576
    %2906 = vmatmul.f32.gmra.mxu0 %v2741
    %v2907 = vpop.f32.mrf.mxu0
    %v2908 = vadd.f32 %v2888, %v2907
    %2909 = vdwg.mxu0
    %2910 = vmatpush.msra.mxu0 %v638
    %2911 = vmatpush.msra.mxu0 %v636
    %2912 = vmatpush.msra.mxu0 %v634
    %2913 = vmatpush.msra.mxu0 %v632
    %2914 = vmatpush.msra.mxu0 %v630
    %2915 = vmatpush.msra.mxu0 %v628
    %2916 = vmatpush.msra.mxu0 %v626
    %2917 = vmatpush.msra.mxu0 %v624
    %2918 = vmatpush.msra.mxu0 %v622
    %2919 = vmatpush.msra.mxu0 %v620
    %2920 = vmatpush.msra.mxu0 %v618
    %2921 = vmatpush.msra.mxu0 %v616
    %2922 = vmatpush.msra.mxu0 %v614
    %2923 = vmatpush.msra.mxu0 %v612
    %2924 = vmatpush.msra.mxu0 %v610
    %2925 = vmatpush.msra.mxu0 %v608
    %2926 = vmatmul.f32.gmra.mxu0 %v2742
    %v2927 = vpop.f32.mrf.mxu0
    %v2928 = vadd.f32 %v2908, %v2927
    %2929 = vdwg.mxu0
    %2930 = vmatpush.msra.mxu0 %v670
    %2931 = vmatpush.msra.mxu0 %v668
    %2932 = vmatpush.msra.mxu0 %v666
    %2933 = vmatpush.msra.mxu0 %v664
    %2934 = vmatpush.msra.mxu0 %v662
    %2935 = vmatpush.msra.mxu0 %v660
    %2936 = vmatpush.msra.mxu0 %v658
    %2937 = vmatpush.msra.mxu0 %v656
    %2938 = vmatpush.msra.mxu0 %v654
    %2939 = vmatpush.msra.mxu0 %v652
    %2940 = vmatpush.msra.mxu0 %v650
    %2941 = vmatpush.msra.mxu0 %v648
    %2942 = vmatpush.msra.mxu0 %v646
    %2943 = vmatpush.msra.mxu0 %v644
    %2944 = vmatpush.msra.mxu0 %v642
    %2945 = vmatpush.msra.mxu0 %v640
    %2946 = vmatmul.f32.gmra.mxu0 %v2743
    %v2947 = vpop.f32.mrf.mxu0
    %v2948 = vadd.f32 %v2928, %v2947
    %2949 = vdwg.mxu0
    %2950 = vmatpush.msra.mxu0 %v702
    %2951 = vmatpush.msra.mxu0 %v700
    %2952 = vmatpush.msra.mxu0 %v698
    %2953 = vmatpush.msra.mxu0 %v696
    %2954 = vmatpush.msra.mxu0 %v694
    %2955 = vmatpush.msra.mxu0 %v692
    %2956 = vmatpush.msra.mxu0 %v690
    %2957 = vmatpush.msra.mxu0 %v688
    %2958 = vmatpush.msra.mxu0 %v686
    %2959 = vmatpush.msra.mxu0 %v684
    %2960 = vmatpush.msra.mxu0 %v682
    %2961 = vmatpush.msra.mxu0 %v680
    %2962 = vmatpush.msra.mxu0 %v678
    %2963 = vmatpush.msra.mxu0 %v676
    %2964 = vmatpush.msra.mxu0 %v674
    %2965 = vmatpush.msra.mxu0 %v672
    %2966 = vmatmul.f32.gmra.mxu0 %v2744
    %v2967 = vpop.f32.mrf.mxu0
    %v2968 = vadd.f32 %v2948, %v2967
    %2969 = vdwg.mxu0
    %2970 = vmatpush.msra.mxu0 %v734
    %2971 = vmatpush.msra.mxu0 %v732
    %2972 = vmatpush.msra.mxu0 %v730
    %2973 = vmatpush.msra.mxu0 %v728
    %2974 = vmatpush.msra.mxu0 %v726
    %2975 = vmatpush.msra.mxu0 %v724
    %2976 = vmatpush.msra.mxu0 %v722
    %2977 = vmatpush.msra.mxu0 %v720
    %2978 = vmatpush.msra.mxu0 %v718
    %2979 = vmatpush.msra.mxu0 %v716
    %2980 = vmatpush.msra.mxu0 %v714
    %2981 = vmatpush.msra.mxu0 %v712
    %2982 = vmatpush.msra.mxu0 %v710
    %2983 = vmatpush.msra.mxu0 %v708
    %2984 = vmatpush.msra.mxu0 %v706
    %2985 = vmatpush.msra.mxu0 %v704
    %2986 = vmatmul.f32.gmra.mxu0 %v2745
    %v2987 = vpop.f32.mrf.mxu0
    %v2988 = vadd.f32 %v2968, %v2987
    %2989 = vdwg.mxu0
    %2990 = vmatpush.msra.mxu0 %v766
    %2991 = vmatpush.msra.mxu0 %v764
    %2992 = vmatpush.msra.mxu0 %v762
    %2993 = vmatpush.msra.mxu0 %v760
    %2994 = vmatpush.msra.mxu0 %v758
    %2995 = vmatpush.msra.mxu0 %v756
    %2996 = vmatpush.msra.mxu0 %v754
    %2997 = vmatpush.msra.mxu0 %v752
    %2998 = vmatpush.msra.mxu0 %v750
    %2999 = vmatpush.msra.mxu0 %v748
    %3000 = vmatpush.msra.mxu0 %v746
    %3001 = vmatpush.msra.mxu0 %v744
    %3002 = vmatpush.msra.mxu0 %v742
    %3003 = vmatpush.msra.mxu0 %v740
    %3004 = vmatpush.msra.mxu0 %v738
    %3005 = vmatpush.msra.mxu0 %v736
    %3006 = vmatmul.f32.gmra.mxu0 %v2746
    %v3007 = vpop.f32.mrf.mxu0
    %v3008 = vadd.f32 %v2988, %v3007
    %3009 = vdwg.mxu0
    %3010 = vmatpush.msra.mxu0 %v798
    %3011 = vmatpush.msra.mxu0 %v796
    %3012 = vmatpush.msra.mxu0 %v794
    %3013 = vmatpush.msra.mxu0 %v792
    %3014 = vmatpush.msra.mxu0 %v790
    %3015 = vmatpush.msra.mxu0 %v788
    %3016 = vmatpush.msra.mxu0 %v786
    %3017 = vmatpush.msra.mxu0 %v784
    %3018 = vmatpush.msra.mxu0 %v782
    %3019 = vmatpush.msra.mxu0 %v780
    %3020 = vmatpush.msra.mxu0 %v778
    %3021 = vmatpush.msra.mxu0 %v776
    %3022 = vmatpush.msra.mxu0 %v774
    %3023 = vmatpush.msra.mxu0 %v772
    %3024 = vmatpush.msra.mxu0 %v770
    %3025 = vmatpush.msra.mxu0 %v768
    %3026 = vmatmul.f32.gmra.mxu0 %v2747
    %v3027 = vpop.f32.mrf.mxu0
    %v3028 = vadd.f32 %v3008, %v3027
    %3029 = vdwg.mxu0
    %3030 = vmatpush.msra.mxu0 %v830
    %3031 = vmatpush.msra.mxu0 %v828
    %3032 = vmatpush.msra.mxu0 %v826
    %3033 = vmatpush.msra.mxu0 %v824
    %3034 = vmatpush.msra.mxu0 %v822
    %3035 = vmatpush.msra.mxu0 %v820
    %3036 = vmatpush.msra.mxu0 %v818
    %3037 = vmatpush.msra.mxu0 %v816
    %3038 = vmatpush.msra.mxu0 %v814
    %3039 = vmatpush.msra.mxu0 %v812
    %3040 = vmatpush.msra.mxu0 %v810
    %3041 = vmatpush.msra.mxu0 %v808
    %3042 = vmatpush.msra.mxu0 %v806
    %3043 = vmatpush.msra.mxu0 %v804
    %3044 = vmatpush.msra.mxu0 %v802
    %3045 = vmatpush.msra.mxu0 %v800
    %3046 = vmatmul.f32.gmra.mxu0 %v2748
    %v3047 = vpop.f32.mrf.mxu0
    %v3048 = vadd.f32 %v3028, %v3047
    %3049 = vdwg.mxu0
    %3050 = vmatpush.msra.mxu0 %v862
    %3051 = vmatpush.msra.mxu0 %v860
    %3052 = vmatpush.msra.mxu0 %v858
    %3053 = vmatpush.msra.mxu0 %v856
    %3054 = vmatpush.msra.mxu0 %v854
    %3055 = vmatpush.msra.mxu0 %v852
    %3056 = vmatpush.msra.mxu0 %v850
    %3057 = vmatpush.msra.mxu0 %v848
    %3058 = vmatpush.msra.mxu0 %v846
    %3059 = vmatpush.msra.mxu0 %v844
    %3060 = vmatpush.msra.mxu0 %v842
    %3061 = vmatpush.msra.mxu0 %v840
    %3062 = vmatpush.msra.mxu0 %v838
    %3063 = vmatpush.msra.mxu0 %v836
    %3064 = vmatpush.msra.mxu0 %v834
    %3065 = vmatpush.msra.mxu0 %v832
    %3066 = vmatmul.f32.gmra.mxu0 %v2749
    %v3067 = vpop.f32.mrf.mxu0
    %v3068 = vadd.f32 %v3048, %v3067
    %3069 = vdwg.mxu0
    %3070 = vmatpush.msra.mxu0 %v383
    %3071 = vmatpush.msra.mxu0 %v381
    %3072 = vmatpush.msra.mxu0 %v379
    %3073 = vmatpush.msra.mxu0 %v377
    %3074 = vmatpush.msra.mxu0 %v375
    %3075 = vmatpush.msra.mxu0 %v373
    %3076 = vmatpush.msra.mxu0 %v371
    %3077 = vmatpush.msra.mxu0 %v369
    %3078 = vmatpush.msra.mxu0 %v367
    %3079 = vmatpush.msra.mxu0 %v365
    %3080 = vmatpush.msra.mxu0 %v363
    %3081 = vmatpush.msra.mxu0 %v361
    %3082 = vmatpush.msra.mxu0 %v359
    %3083 = vmatpush.msra.mxu0 %v357
    %3084 = vmatpush.msra.mxu0 %v355
    %3085 = vmatpush.msra.mxu0 %v353
    %3086 = vmatmul.f32.gmra.mxu0 %v2734
    %v3087 = vpop.f32.mrf.mxu0
    %v3088 = vadd.f32 0.0, %v3087
    %3089 = vdwg.mxu0
    %3090 = vmatpush.msra.mxu0 %v415
    %3091 = vmatpush.msra.mxu0 %v413
    %3092 = vmatpush.msra.mxu0 %v411
    %3093 = vmatpush.msra.mxu0 %v409
    %3094 = vmatpush.msra.mxu0 %v407
    %3095 = vmatpush.msra.mxu0 %v405
    %3096 = vmatpush.msra.mxu0 %v403
    %3097 = vmatpush.msra.mxu0 %v401
    %3098 = vmatpush.msra.mxu0 %v399
    %3099 = vmatpush.msra.mxu0 %v397
    %3100 = vmatpush.msra.mxu0 %v395
    %3101 = vmatpush.msra.mxu0 %v393
    %3102 = vmatpush.msra.mxu0 %v391
    %3103 = vmatpush.msra.mxu0 %v389
    %3104 = vmatpush.msra.mxu0 %v387
    %3105 = vmatpush.msra.mxu0 %v385
    %3106 = vmatmul.f32.gmra.mxu0 %v2735
    %v3107 = vpop.f32.mrf.mxu0
    %v3108 = vadd.f32 %v3088, %v3107
    %3109 = vdwg.mxu0
    %3110 = vmatpush.msra.mxu0 %v447
    %3111 = vmatpush.msra.mxu0 %v445
    %3112 = vmatpush.msra.mxu0 %v443
    %3113 = vmatpush.msra.mxu0 %v441
    %3114 = vmatpush.msra.mxu0 %v439
    %3115 = vmatpush.msra.mxu0 %v437
    %3116 = vmatpush.msra.mxu0 %v435
    %3117 = vmatpush.msra.mxu0 %v433
    %3118 = vmatpush.msra.mxu0 %v431
    %3119 = vmatpush.msra.mxu0 %v429
    %3120 = vmatpush.msra.mxu0 %v427
    %3121 = vmatpush.msra.mxu0 %v425
    %3122 = vmatpush.msra.mxu0 %v423
    %3123 = vmatpush.msra.mxu0 %v421
    %3124 = vmatpush.msra.mxu0 %v419
    %3125 = vmatpush.msra.mxu0 %v417
    %3126 = vmatmul.f32.gmra.mxu0 %v2736
    %v3127 = vpop.f32.mrf.mxu0
    %v3128 = vadd.f32 %v3108, %v3127
    %3129 = vdwg.mxu0
    %3130 = vmatpush.msra.mxu0 %v479
    %3131 = vmatpush.msra.mxu0 %v477
    %3132 = vmatpush.msra.mxu0 %v475
    %3133 = vmatpush.msra.mxu0 %v473
    %3134 = vmatpush.msra.mxu0 %v471
    %3135 = vmatpush.msra.mxu0 %v469
    %3136 = vmatpush.msra.mxu0 %v467
    %3137 = vmatpush.msra.mxu0 %v465
    %3138 = vmatpush.msra.mxu0 %v463
    %3139 = vmatpush.msra.mxu0 %v461
    %3140 = vmatpush.msra.mxu0 %v459
    %3141 = vmatpush.msra.mxu0 %v457
    %3142 = vmatpush.msra.mxu0 %v455
    %3143 = vmatpush.msra.mxu0 %v453
    %3144 = vmatpush.msra.mxu0 %v451
    %3145 = vmatpush.msra.mxu0 %v449
    %3146 = vmatmul.f32.gmra.mxu0 %v2737
    %v3147 = vpop.f32.mrf.mxu0
    %v3148 = vadd.f32 %v3128, %v3147
    %3149 = vdwg.mxu0
    %3150 = vmatpush.msra.mxu0 %v511
    %3151 = vmatpush.msra.mxu0 %v509
    %3152 = vmatpush.msra.mxu0 %v507
    %3153 = vmatpush.msra.mxu0 %v505
    %3154 = vmatpush.msra.mxu0 %v503
    %3155 = vmatpush.msra.mxu0 %v501
    %3156 = vmatpush.msra.mxu0 %v499
    %3157 = vmatpush.msra.mxu0 %v497
    %3158 = vmatpush.msra.mxu0 %v495
    %3159 = vmatpush.msra.mxu0 %v493
    %3160 = vmatpush.msra.mxu0 %v491
    %3161 = vmatpush.msra.mxu0 %v489
    %3162 = vmatpush.msra.mxu0 %v487
    %3163 = vmatpush.msra.mxu0 %v485
    %3164 = vmatpush.msra.mxu0 %v483
    %3165 = vmatpush.msra.mxu0 %v481
    %3166 = vmatmul.f32.gmra.mxu0 %v2738
    %v3167 = vpop.f32.mrf.mxu0
    %v3168 = vadd.f32 %v3148, %v3167
    %3169 = vdwg.mxu0
    %3170 = vmatpush.msra.mxu0 %v543
    %3171 = vmatpush.msra.mxu0 %v541
    %3172 = vmatpush.msra.mxu0 %v539
    %3173 = vmatpush.msra.mxu0 %v537
    %3174 = vmatpush.msra.mxu0 %v535
    %3175 = vmatpush.msra.mxu0 %v533
    %3176 = vmatpush.msra.mxu0 %v531
    %3177 = vmatpush.msra.mxu0 %v529
    %3178 = vmatpush.msra.mxu0 %v527
    %3179 = vmatpush.msra.mxu0 %v525
    %3180 = vmatpush.msra.mxu0 %v523
    %3181 = vmatpush.msra.mxu0 %v521
    %3182 = vmatpush.msra.mxu0 %v519
    %3183 = vmatpush.msra.mxu0 %v517
    %3184 = vmatpush.msra.mxu0 %v515
    %3185 = vmatpush.msra.mxu0 %v513
    %3186 = vmatmul.f32.gmra.mxu0 %v2739
    %v3187 = vpop.f32.mrf.mxu0
    %v3188 = vadd.f32 %v3168, %v3187
    %3189 = vdwg.mxu0
    %3190 = vmatpush.msra.mxu0 %v575
    %3191 = vmatpush.msra.mxu0 %v573
    %3192 = vmatpush.msra.mxu0 %v571
    %3193 = vmatpush.msra.mxu0 %v569
    %3194 = vmatpush.msra.mxu0 %v567
    %3195 = vmatpush.msra.mxu0 %v565
    %3196 = vmatpush.msra.mxu0 %v563
    %3197 = vmatpush.msra.mxu0 %v561
    %3198 = vmatpush.msra.mxu0 %v559
    %3199 = vmatpush.msra.mxu0 %v557
    %3200 = vmatpush.msra.mxu0 %v555
    %3201 = vmatpush.msra.mxu0 %v553
    %3202 = vmatpush.msra.mxu0 %v551
    %3203 = vmatpush.msra.mxu0 %v549
    %3204 = vmatpush.msra.mxu0 %v547
    %3205 = vmatpush.msra.mxu0 %v545
    %3206 = vmatmul.f32.gmra.mxu0 %v2740
    %v3207 = vpop.f32.mrf.mxu0
    %v3208 = vadd.f32 %v3188, %v3207
    %3209 = vdwg.mxu0
    %3210 = vmatpush.msra.mxu0 %v607
    %3211 = vmatpush.msra.mxu0 %v605
    %3212 = vmatpush.msra.mxu0 %v603
    %3213 = vmatpush.msra.mxu0 %v601
    %3214 = vmatpush.msra.mxu0 %v599
    %3215 = vmatpush.msra.mxu0 %v597
    %3216 = vmatpush.msra.mxu0 %v595
    %3217 = vmatpush.msra.mxu0 %v593
    %3218 = vmatpush.msra.mxu0 %v591
    %3219 = vmatpush.msra.mxu0 %v589
    %3220 = vmatpush.msra.mxu0 %v587
    %3221 = vmatpush.msra.mxu0 %v585
    %3222 = vmatpush.msra.mxu0 %v583
    %3223 = vmatpush.msra.mxu0 %v581
    %3224 = vmatpush.msra.mxu0 %v579
    %3225 = vmatpush.msra.mxu0 %v577
    %3226 = vmatmul.f32.gmra.mxu0 %v2741
    %v3227 = vpop.f32.mrf.mxu0
    %v3228 = vadd.f32 %v3208, %v3227
    %3229 = vdwg.mxu0
    %3230 = vmatpush.msra.mxu0 %v639
    %3231 = vmatpush.msra.mxu0 %v637
    %3232 = vmatpush.msra.mxu0 %v635
    %3233 = vmatpush.msra.mxu0 %v633
    %3234 = vmatpush.msra.mxu0 %v631
    %3235 = vmatpush.msra.mxu0 %v629
    %3236 = vmatpush.msra.mxu0 %v627
    %3237 = vmatpush.msra.mxu0 %v625
    %3238 = vmatpush.msra.mxu0 %v623
    %3239 = vmatpush.msra.mxu0 %v621
    %3240 = vmatpush.msra.mxu0 %v619
    %3241 = vmatpush.msra.mxu0 %v617
    %3242 = vmatpush.msra.mxu0 %v615
    %3243 = vmatpush.msra.mxu0 %v613
    %3244 = vmatpush.msra.mxu0 %v611
    %3245 = vmatpush.msra.mxu0 %v609
    %3246 = vmatmul.f32.gmra.mxu0 %v2742
    %v3247 = vpop.f32.mrf.mxu0
    %v3248 = vadd.f32 %v3228, %v3247
    %3249 = vdwg.mxu0
    %3250 = vmatpush.msra.mxu0 %v671
    %3251 = vmatpush.msra.mxu0 %v669
    %3252 = vmatpush.msra.mxu0 %v667
    %3253 = vmatpush.msra.mxu0 %v665
    %3254 = vmatpush.msra.mxu0 %v663
    %3255 = vmatpush.msra.mxu0 %v661
    %3256 = vmatpush.msra.mxu0 %v659
    %3257 = vmatpush.msra.mxu0 %v657
    %3258 = vmatpush.msra.mxu0 %v655
    %3259 = vmatpush.msra.mxu0 %v653
    %3260 = vmatpush.msra.mxu0 %v651
    %3261 = vmatpush.msra.mxu0 %v649
    %3262 = vmatpush.msra.mxu0 %v647
    %3263 = vmatpush.msra.mxu0 %v645
    %3264 = vmatpush.msra.mxu0 %v643
    %3265 = vmatpush.msra.mxu0 %v641
    %3266 = vmatmul.f32.gmra.mxu0 %v2743
    %v3267 = vpop.f32.mrf.mxu0
    %v3268 = vadd.f32 %v3248, %v3267
    %3269 = vdwg.mxu0
    %3270 = vmatpush.msra.mxu0 %v703
    %3271 = vmatpush.msra.mxu0 %v701
    %3272 = vmatpush.msra.mxu0 %v699
    %3273 = vmatpush.msra.mxu0 %v697
    %3274 = vmatpush.msra.mxu0 %v695
    %3275 = vmatpush.msra.mxu0 %v693
    %3276 = vmatpush.msra.mxu0 %v691
    %3277 = vmatpush.msra.mxu0 %v689
    %3278 = vmatpush.msra.mxu0 %v687
    %3279 = vmatpush.msra.mxu0 %v685
    %3280 = vmatpush.msra.mxu0 %v683
    %3281 = vmatpush.msra.mxu0 %v681
    %3282 = vmatpush.msra.mxu0 %v679
    %3283 = vmatpush.msra.mxu0 %v677
    %3284 = vmatpush.msra.mxu0 %v675
    %3285 = vmatpush.msra.mxu0 %v673
    %3286 = vmatmul.f32.gmra.mxu0 %v2744
    %v3287 = vpop.f32.mrf.mxu0
    %v3288 = vadd.f32 %v3268, %v3287
    %3289 = vdwg.mxu0
    %3290 = vmatpush.msra.mxu0 %v735
    %3291 = vmatpush.msra.mxu0 %v733
    %3292 = vmatpush.msra.mxu0 %v731
    %3293 = vmatpush.msra.mxu0 %v729
    %3294 = vmatpush.msra.mxu0 %v727
    %3295 = vmatpush.msra.mxu0 %v725
    %3296 = vmatpush.msra.mxu0 %v723
    %3297 = vmatpush.msra.mxu0 %v721
    %3298 = vmatpush.msra.mxu0 %v719
    %3299 = vmatpush.msra.mxu0 %v717
    %3300 = vmatpush.msra.mxu0 %v715
    %3301 = vmatpush.msra.mxu0 %v713
    %3302 = vmatpush.msra.mxu0 %v711
    %3303 = vmatpush.msra.mxu0 %v709
    %3304 = vmatpush.msra.mxu0 %v707
    %3305 = vmatpush.msra.mxu0 %v705
    %3306 = vmatmul.f32.gmra.mxu0 %v2745
    %v3307 = vpop.f32.mrf.mxu0
    %v3308 = vadd.f32 %v3288, %v3307
    %3309 = vdwg.mxu0
    %3310 = vmatpush.msra.mxu0 %v767
    %3311 = vmatpush.msra.mxu0 %v765
    %3312 = vmatpush.msra.mxu0 %v763
    %3313 = vmatpush.msra.mxu0 %v761
    %3314 = vmatpush.msra.mxu0 %v759
    %3315 = vmatpush.msra.mxu0 %v757
    %3316 = vmatpush.msra.mxu0 %v755
    %3317 = vmatpush.msra.mxu0 %v753
    %3318 = vmatpush.msra.mxu0 %v751
    %3319 = vmatpush.msra.mxu0 %v749
    %3320 = vmatpush.msra.mxu0 %v747
    %3321 = vmatpush.msra.mxu0 %v745
    %3322 = vmatpush.msra.mxu0 %v743
    %3323 = vmatpush.msra.mxu0 %v741
    %3324 = vmatpush.msra.mxu0 %v739
    %3325 = vmatpush.msra.mxu0 %v737
    %3326 = vmatmul.f32.gmra.mxu0 %v2746
    %v3327 = vpop.f32.mrf.mxu0
    %v3328 = vadd.f32 %v3308, %v3327
    %3329 = vdwg.mxu0
    %3330 = vmatpush.msra.mxu0 %v799
    %3331 = vmatpush.msra.mxu0 %v797
    %3332 = vmatpush.msra.mxu0 %v795
    %3333 = vmatpush.msra.mxu0 %v793
    %3334 = vmatpush.msra.mxu0 %v791
    %3335 = vmatpush.msra.mxu0 %v789
    %3336 = vmatpush.msra.mxu0 %v787
    %3337 = vmatpush.msra.mxu0 %v785
    %3338 = vmatpush.msra.mxu0 %v783
    %3339 = vmatpush.msra.mxu0 %v781
    %3340 = vmatpush.msra.mxu0 %v779
    %3341 = vmatpush.msra.mxu0 %v777
    %3342 = vmatpush.msra.mxu0 %v775
    %3343 = vmatpush.msra.mxu0 %v773
    %3344 = vmatpush.msra.mxu0 %v771
    %3345 = vmatpush.msra.mxu0 %v769
    %3346 = vmatmul.f32.gmra.mxu0 %v2747
    %v3347 = vpop.f32.mrf.mxu0
    %v3348 = vadd.f32 %v3328, %v3347
    %3349 = vdwg.mxu0
    %3350 = vmatpush.msra.mxu0 %v831
    %3351 = vmatpush.msra.mxu0 %v829
    %3352 = vmatpush.msra.mxu0 %v827
    %3353 = vmatpush.msra.mxu0 %v825
    %3354 = vmatpush.msra.mxu0 %v823
    %3355 = vmatpush.msra.mxu0 %v821
    %3356 = vmatpush.msra.mxu0 %v819
    %3357 = vmatpush.msra.mxu0 %v817
    %3358 = vmatpush.msra.mxu0 %v815
    %3359 = vmatpush.msra.mxu0 %v813
    %3360 = vmatpush.msra.mxu0 %v811
    %3361 = vmatpush.msra.mxu0 %v809
    %3362 = vmatpush.msra.mxu0 %v807
    %3363 = vmatpush.msra.mxu0 %v805
    %3364 = vmatpush.msra.mxu0 %v803
    %3365 = vmatpush.msra.mxu0 %v801
    %3366 = vmatmul.f32.gmra.mxu0 %v2748
    %v3367 = vpop.f32.mrf.mxu0
    %v3368 = vadd.f32 %v3348, %v3367
    %3369 = vdwg.mxu0
    %3370 = vmatpush.msra.mxu0 %v863
    %3371 = vmatpush.msra.mxu0 %v861
    %3372 = vmatpush.msra.mxu0 %v859
    %3373 = vmatpush.msra.mxu0 %v857
    %3374 = vmatpush.msra.mxu0 %v855
    %3375 = vmatpush.msra.mxu0 %v853
    %3376 = vmatpush.msra.mxu0 %v851
    %3377 = vmatpush.msra.mxu0 %v849
    %3378 = vmatpush.msra.mxu0 %v847
    %3379 = vmatpush.msra.mxu0 %v845
    %3380 = vmatpush.msra.mxu0 %v843
    %3381 = vmatpush.msra.mxu0 %v841
    %3382 = vmatpush.msra.mxu0 %v839
    %3383 = vmatpush.msra.mxu0 %v837
    %3384 = vmatpush.msra.mxu0 %v835
    %3385 = vmatpush.msra.mxu0 %v833
    %3386 = vmatmul.f32.gmra.mxu0 %v2749
    %v3387 = vpop.f32.mrf.mxu0
    %v3388 = vadd.f32 %v3368, %v3387
    %3389 = vdwg.mxu0
    %3390 = vmatpush.msra.mxu0 %v904
    %3391 = vmatpush.msra.mxu0 %v903
    %3392 = vmatpush.msra.mxu0 %v902
    %3393 = vmatpush.msra.mxu0 %v901
    %3394 = vmatpush.msra.mxu0 %v900
    %3395 = vmatpush.msra.mxu0 %v899
    %3396 = vmatpush.msra.mxu0 %v898
    %3397 = vmatpush.msra.mxu0 %v897
    %3398 = vmatpush.msra.mxu0 %v896
    %3399 = vmatpush.msra.mxu0 %v895
    %3400 = vmatpush.msra.mxu0 %v894
    %3401 = vmatpush.msra.mxu0 %v893
    %3402 = vmatpush.msra.mxu0 %v892
    %3403 = vmatpush.msra.mxu0 %v891
    %3404 = vmatpush.msra.mxu0 %v890
    %3405 = vmatpush.msra.mxu0 %v889
    %3406 = vmatmul.f32.gmra.mxu0 %v3068
    %v3407 = vpop.f32.mrf.mxu0
    %v3408 = vadd.f32 %v2085, %v3407
    %3409 = vdwg.mxu0
    %3410 = vmatpush.msra.mxu0 %v920
    %3411 = vmatpush.msra.mxu0 %v919
    %3412 = vmatpush.msra.mxu0 %v918
    %3413 = vmatpush.msra.mxu0 %v917
    %3414 = vmatpush.msra.mxu0 %v916
    %3415 = vmatpush.msra.mxu0 %v915
    %3416 = vmatpush.msra.mxu0 %v914
    %3417 = vmatpush.msra.mxu0 %v913
    %3418 = vmatpush.msra.mxu0 %v912
    %3419 = vmatpush.msra.mxu0 %v911
    %3420 = vmatpush.msra.mxu0 %v910
    %3421 = vmatpush.msra.mxu0 %v909
    %3422 = vmatpush.msra.mxu0 %v908
    %3423 = vmatpush.msra.mxu0 %v907
    %3424 = vmatpush.msra.mxu0 %v906
    %3425 = vmatpush.msra.mxu0 %v905
    %3426 = vmatmul.f32.gmra.mxu0 %v3388
    %v3427 = vpop.f32.mrf.mxu0
    %v3428 = vadd.f32 %v3408, %v3427
    %3429 = vdwg.mxu0
    %v3430 = vmax.f32 %v3428, 0.0
    %v3431 = vld [vmem:[#allocation7 + $0x1] sm:$0x1]
    %v3432 = vld [vmem:[#allocation7 + $0x3] sm:$0x1]
    %v3433 = vld [vmem:[#allocation7 + $0x5] sm:$0x1]
    %v3434 = vld [vmem:[#allocation7 + $0x7] sm:$0x1]
    %v3435 = vld [vmem:[#allocation7 + $0x9] sm:$0x1]
    %v3436 = vld [vmem:[#allocation7 + $0xb] sm:$0x1]
    %v3437 = vld [vmem:[#allocation7 + $0xd] sm:$0x1]
    %v3438 = vld [vmem:[#allocation7 + $0xf] sm:$0x1]
    %v3447 = vrot.slane %v3432, 7
    %v3448 = vsel %vm1000, %v3447, %v3431
    %v3449 = vrot.slane %v3433, 6
    %v3450 = vsel %vm1003, %v3449, %v3448
    %v3451 = vrot.slane %v3434, 5
    %v3452 = vsel %vm1006, %v3451, %v3450
    %v3453 = vrot.slane %v3435, 4
    %v3454 = vsel %vm1009, %v3453, %v3452
    %v3455 = vrot.slane %v3436, 3
    %v3456 = vsel %vm1012, %v3455, %v3454
    %v3457 = vrot.slane %v3437, 2
    %v3458 = vsel %vm1015, %v3457, %v3456
    %v3459 = vrot.slane %v3438, 1
    %v3460 = vsel %vm1018, %v3459, %v3458
    %3462 = vmatpush.msra.mxu0 %v937
    %3463 = vmatpush.msra.mxu0 %v936
    %3464 = vmatpush.msra.mxu0 %v935
    %3465 = vmatpush.msra.mxu0 %v934
    %3466 = vmatpush.msra.mxu0 %v933
    %3467 = vmatpush.msra.mxu0 %v932
    %3468 = vmatpush.msra.mxu0 %v931
    %3469 = vmatpush.msra.mxu0 %v930
    %3470 = vmatpush.msra.mxu0 %v929
    %3471 = vmatpush.msra.mxu0 %v928
    %3472 = vmatpush.msra.mxu0 %v927
    %3473 = vmatpush.msra.mxu0 %v926
    %3474 = vmatpush.msra.mxu0 %v925
    %3475 = vmatpush.msra.mxu0 %v924
    %3476 = vmatpush.msra.mxu0 %v923
    %3477 = vmatpush.msra.mxu0 %v922
    %3478 = vmatmul.f32.gmra.mxu0 %v3430
    %v3479 = vpop.f32.mrf.mxu0
    %v3480 = vadd.f32 %v3460, %v3479
    %3481 = vdwg.mxu0
    %v3482 = vsel %vm2179, %v3480, -inf
    %3483 = vmax.xlane.f32.xlu0 %v3482
    %v3484 = vpop.xlane.xlu0 %3483
    %v3485 = vsub.f32 %v3480, %v3484
    %v3486 = vmul.f32 %v3485, 1.442695
    %v3487 = vpow.pop %v3486
    %v3488 = vsel %vm2179, %v3487, 0.0
    %3489 = vadd.xlane.f32.xlu0 %v3488
    %v3490 = vpop.xlane.xlu0 %3489
    %v3491 = vrcp.pop %v3490
    %v3492 = vmul.f32 %v3490, %v3491
    %v3493 = vsub.f32 1.0, %v3492
    %v3494 = vmul.f32 %v3491, %v3493
    %v3495 = vadd.f32 %v3491, %v3494
    %vm3496 = vweird.f32 %v3490
    %vm3497 = vweird.f32 %v3491
    %vm3498 = vmor %vm3496, %vm3497
    %v3499 = vsel %vm3498, %v3491, %v3495
    %v3500 = vand.u32 2147483647, %v3490
    %vm3501 = vcmp.eq.f32.partialorder %v3500, 8.507059e+37
    %v3502 = vand.u32 %v3490, 2147483648
    %v3503 = vor.u32 1.1754944e-38, %v3502
    %v3504 = vsel %vm3501, %v3503, %v3499
    %v3505 = vmul.f32 %v3487, %v3504
    %v3507 = vsel %vm2179, %v3505, 0
    %3509 = vmatpush.msra.mxu0 0.0
    %3510 = vmatpush.msra.mxu0 0.0
    %3511 = vmatpush.msra.mxu0 0.0
    %3512 = vmatpush.msra.mxu0 0.0
    %3513 = vmatpush.msra.mxu0 0.0
    %3514 = vmatpush.msra.mxu0 0.0
    %3515 = vmatpush.msra.mxu0 0.0
    %3516 = vmatpush.msra.mxu0 0.0
    %3517 = vmatpush.msra.mxu0 0.0
    %3518 = vmatpush.msra.mxu0 0.0
    %3519 = vmatpush.msra.mxu0 0.0
    %3520 = vmatpush.msra.mxu0 0.0
    %3521 = vmatpush.msra.mxu0 0.0
    %3522 = vmatpush.msra.mxu0 0.0
    %3523 = vmatpush.msra.mxu0 0.0
    %3524 = vmatpush.msra.mxu0 %v938
    %3525 = vmatmul.f32.gmra.mxu0 %v3507
    %v3526 = vpop.f32.mrf.mxu0
    %v3527 = vadd.f32 0.0, %v3526
    %3528 = vdwg.mxu0
    %3529 = vmatpush.msra.mxu0 0.0
    %3530 = vmatpush.msra.mxu0 0.0
    %3531 = vmatpush.msra.mxu0 0.0
    %3532 = vmatpush.msra.mxu0 0.0
    %3533 = vmatpush.msra.mxu0 0.0
    %3534 = vmatpush.msra.mxu0 0.0
    %3535 = vmatpush.msra.mxu0 0.0
    %3536 = vmatpush.msra.mxu0 0.0
    %3537 = vmatpush.msra.mxu0 0.0
    %3538 = vmatpush.msra.mxu0 0.0
    %3539 = vmatpush.msra.mxu0 0.0
    %3540 = vmatpush.msra.mxu0 0.0
    %3541 = vmatpush.msra.mxu0 0.0
    %3542 = vmatpush.msra.mxu0 0.0
    %3543 = vmatpush.msra.mxu0 0.0
    %3544 = vmatpush.msra.mxu0 %v939
    %3545 = vmatmul.f32.gmra.mxu0 %v3507
    %v3546 = vpop.f32.mrf.mxu0
    %v3547 = vadd.f32 0.0, %v3546
    %3548 = vdwg.mxu0
    %v3549 = vmul.f32 %v3068, %v3527
    %v3550 = vmul.f32 %v3388, %v3547
    %vm3551 = vcmp.ge.f32.partialorder %v3549, 0.0
    %vm3552 = vcmp.ge.f32.partialorder %v3550, 0.0
    %v3553 = vmul.f32 %v3549, 0.01
    %v3554 = vmul.f32 %v3550, 0.01
    %v3555 = vsel %vm3551, %v3549, %v3553
    %v3556 = vsel %vm3552, %v3550, %v3554
    %v3557 = vadd.f32 %v3555, %v190
    %v3558 = vadd.f32 %v3556, %v191
    %3559 = vst [vmem:[#allocation19] sm:$0xff] %v3557
    %3560 = vst [vmem:[#allocation19 + $0x8] sm:$0xff] %v3558
    // Predicated region
    $region90: #{tpu_custom_call.1} parent=1 // pred_check
      _
    $region91: #{tpu_custom_call.1} parent=1 // pred_check_branch
      %3562 = sbr.rel (0) target = $region93
    $region92: #{tpu_custom_call.1} parent=1 // pred_region
      %3564 = vsyncadd [#allocation4], 0
      %s3566 = sshll.u32 [#allocation19], 4
      %s3567 = int_to_ptr.vmem [resolvable:$true] %s3566
      %s3568 = sshll.u32 %s12, 4
      %s3569 = int_to_ptr.hbm [resolvable:$true] %s3568
      %3571 = dma.vmem_to_hbm [thread:$0]  %s3567, 256, %s3569, [#allocation4]
    $region93: #{tpu_custom_call.1} parent=1 // pred_fallthru
      _
    // Predicated region
    $region94: #{tpu_custom_call.1} parent=1 // pred_check
      _
    $region95: #{tpu_custom_call.1} parent=1 // pred_check_branch
      %3573 = sbr.rel (0) target = $region97
    $region96: #{tpu_custom_call.1} parent=1 // pred_region
      %3575 = dma.done [#allocation4], 256
    $region97: #{tpu_custom_call.1} parent=1 // pred_fallthru
      _
    %3576 = vsyncpa [#allocation3], 1
    %3577 = vsyncpa [#allocation6], 1
    %3578 = vsyncpa [#allocation9], 1
    %3579 = vsyncpa [#allocation12], 1
    %3580 = vsyncpa [#allocation15], 1
    %3581 = vsyncpa [#allocation18], 1
    %3582 = vsyncpa [#allocation4], 1

</llo_original>
